<compile_context>
chip_gen: v5e
topology: v5e:2x2
jax: 0.10.0
libtpu: 0.0.40
codegen_flags: <defaults>
</compile_context>

<pallas_src>
import functools

import jax
import jax.numpy as jnp
from jax.experimental import pallas as pl
from jax.experimental.pallas import tpu as pltpu


def _round_up(x, m):
    return (x + m - 1) // m * m


# ----------------------------------------------------------------------------
# Fused kernel body.  Grid = (batch, layer); one program = one sequence's
# activation for one transformer layer (plus embed at layer 0 and the UpNet
# projection at the last layer).
# ----------------------------------------------------------------------------
def _fused_kernel(im2col_ref, wconv_ref, bconv_ref, wlin_ref, blin_ref,
                  wq_ref, bq_ref, wk_ref, bk_ref, wv_ref, bv_ref,
                  wo_ref, bo_ref, g1_ref, be1_ref,
                  wf1_ref, bf1_ref, wf2_ref, bf2_ref, g2_ref, be2_ref,
                  wup_ref, bup_ref, out_ref, x_scr,
                  *, hidden_dim, head_dim):
    L, Dp = x_scr.shape                       # seq tile rows, padded hidden
    HW = im2col_ref.shape[2]                  # lane-dense pixel count
    n_heads = wq_ref.shape[1]
    C = wlin_ref.shape[0]

    li = pl.program_id(1)
    last = pl.num_programs(1) - 1

    # ---- Embedder (3x3 conv + ReLU + global-avg-pool + linear), layer 0 only.
    # Channel-outer / tap-inner: one lane-dense (L, HW) tap live at a time,
    # pooled scalars folded into the embedding linear as broadcast FMAs.
    @pl.when(li == 0)
    def _embed():
        inv_hw = 1.0 / float(HW)
        x0 = jnp.zeros((L, Dp), jnp.float32)
        for c in range(C):
            acc = im2col_ref[0] * wconv_ref[0, c]
            for t in range(1, 9):
                acc = acc + im2col_ref[t] * wconv_ref[t, c]
            acc = jnp.maximum(acc + bconv_ref[c], 0.0)              # ReLU
            pooled = jnp.sum(acc, axis=-1, keepdims=True) * inv_hw  # (L, 1)
            x0 = x0 + pooled * wlin_ref[c:c + 1, :]                 # (L, Dp)
        x_scr[...] = x0 + blin_ref[...]

    # ---- Transformer layer (runs every (batch, layer) step). ----
    inv_d = 1.0 / float(hidden_dim)

    def layer_norm(v, g, b):
        # Padding-safe LayerNorm: padded columns of v are zero, gamma/beta are
        # zero-padded, divisor is the true hidden_dim; E[x^2]-mu^2 form keeps
        # the stats exact over the padded lane width.
        mu = jnp.sum(v, axis=-1, keepdims=True) * inv_d
        ms = jnp.sum(v * v, axis=-1, keepdims=True) * inv_d
        var = ms - mu * mu
        return (v - mu) * jax.lax.rsqrt(var + 1e-5) * g + b

    # In-kernel causal mask (triu(1): key index > query index is masked).
    row = jax.lax.broadcasted_iota(jnp.int32, (L, L), 0)
    col = jax.lax.broadcasted_iota(jnp.int32, (L, L), 1)
    causal = (col > row)[None, :, :]                                # (1, L, L)

    x = x_scr[...]                                                  # (L, Dp) f32
    xb = x.astype(jnp.bfloat16)
    xh = jnp.broadcast_to(xb[None], (n_heads, L, Dp))               # tiny copy

    # All heads at once: per-head weights (n_heads, Dp, Hdp), batched matmuls.
    q = jnp.einsum('hld,hdk->hlk', xh, wq_ref[0],
                   preferred_element_type=jnp.float32) + bq_ref[0]  # (H, L, Hdp)
    k = jnp.einsum('hld,hdk->hlk', xh, wk_ref[0],
                   preferred_element_type=jnp.float32) + bk_ref[0]
    v = jnp.einsum('hld,hdk->hlk', xh, wv_ref[0],
                   preferred_element_type=jnp.float32) + bv_ref[0]

    scale = 1.0 / float(head_dim) ** 0.5
    s = jnp.einsum('hqd,hkd->hqk', q.astype(jnp.bfloat16), k.astype(jnp.bfloat16),
                   preferred_element_type=jnp.float32) * scale      # (H, L, L)
    s = jnp.where(causal, -1e30, s)                                 # f32-safe mask
    s = s - jnp.max(s, axis=-1, keepdims=True)
    p = jnp.exp(s)
    p = p * pl.reciprocal(jnp.sum(p, axis=-1, keepdims=True), approx=True)
    a = jnp.einsum('hqk,hkd->hqd', p.astype(jnp.bfloat16), v.astype(jnp.bfloat16),
                   preferred_element_type=jnp.float32)              # (H, L, Hdp)

    # Out-projection as a sum over heads (no lane concat of heads).
    o = jnp.einsum('hqd,hdm->hqm', a.astype(jnp.bfloat16), wo_ref[0],
                   preferred_element_type=jnp.float32)              # (H, L, Dp)
    o = jnp.sum(o, axis=0) + bo_ref[0]                              # (L, Dp)

    h1 = layer_norm(x + o, g1_ref[0], be1_ref[0])                   # post-lnorm

    ff = jnp.maximum(jnp.dot(h1.astype(jnp.bfloat16), wf1_ref[0],
                             preferred_element_type=jnp.float32) + bf1_ref[0], 0.0)
    ff = jnp.dot(ff.astype(jnp.bfloat16), wf2_ref[0],
                 preferred_element_type=jnp.float32) + bf2_ref[0]
    x_out = layer_norm(h1 + ff, g2_ref[0], be2_ref[0])              # post-lnorm
    x_scr[...] = x_out

    # ---- UpNet epilogue at the last layer: lane-dense (L, H*W) single store.
    @pl.when(li == last)
    def _decode():
        out_ref[...] = (jnp.dot(x_out.astype(jnp.bfloat16), wup_ref[...],
                                preferred_element_type=jnp.float32)
                        + bup_ref[...])


# ----------------------------------------------------------------------------
# Wrapper
# ----------------------------------------------------------------------------
def cnn_transformer_net(x, params, *, hidden_dim, head_dim):
    """x: (B, L, H, W) -> (B, L, H, W), mirroring CNNTransformerNet.forward."""
    B, L, H, W = x.shape
    N, HW = B * L, H * W
    n_layers = params["wq"].shape[0]
    Dp = params["wlin"].shape[1]

    # Wrapper-side im2col: 9 shifted, lane-dense (N, H*W) pixel slabs.
    frames = x.reshape(N, H, W)
    padded = jnp.pad(frames, ((0, 0), (1, 1), (1, 1)))               # 'same' 3x3
    im2col = jnp.stack([padded[:, di:di + H, dj:dj + W].reshape(N, HW)
                        for di in range(3) for dj in range(3)], axis=0)  # (9,N,HW)

    kernel = functools.partial(_fused_kernel,
                               hidden_dim=hidden_dim, head_dim=head_dim)

    smem = pl.BlockSpec(memory_space=pltpu.MemorySpace.SMEM)

    def full_spec(shape):                       # layer-invariant weight, whole array
        nd = len(shape)
        return pl.BlockSpec(tuple(shape), lambda b, li: (0,) * nd)

    def per_layer(shape):                       # streamed per-layer weight block
        nd = len(shape)
        return pl.BlockSpec((1,) + tuple(shape[1:]),
                            lambda b, li: (li,) + (0,) * (nd - 1))

    in_specs = [
        pl.BlockSpec((9, L, HW), lambda b, li: (0, b, 0)),           # im2col
        smem, smem,                                                  # conv scalars
        full_spec(params["wlin"].shape), full_spec(params["blin"].shape),
        per_layer(params["wq"].shape), per_layer(params["bq"].shape),
        per_layer(params["wk"].shape), per_layer(params["bk"].shape),
        per_layer(params["wv"].shape), per_layer(params["bv"].shape),
        per_layer(params["wo"].shape), per_layer(params["bo"].shape),
        per_layer(params["g1"].shape), per_layer(params["be1"].shape),
        per_layer(params["wf1"].shape), per_layer(params["bf1"].shape),
        per_layer(params["wf2"].shape), per_layer(params["bf2"].shape),
        per_layer(params["g2"].shape), per_layer(params["be2"].shape),
        full_spec(params["wup"].shape), full_spec(params["bup"].shape),
    ]

    out = pl.pallas_call(
        kernel,
        out_shape=jax.ShapeDtypeStruct((N, HW), jnp.float32),
        grid_spec=pltpu.PrefetchScalarGridSpec(
            num_scalar_prefetch=0,
            grid=(B, n_layers),                                      # batch, layer
            in_specs=in_specs,
            out_specs=pl.BlockSpec((L, HW), lambda b, li: (b, 0)),
            scratch_shapes=[pltpu.VMEM((L, Dp), jnp.float32)]),      # resident act.
        compiler_params=pltpu.CompilerParams(
            dimension_semantics=("parallel", "arbitrary"),
            vmem_limit_bytes=32 * 1024 * 1024),
    )(im2col, params["wconv"], params["bconv"], params["wlin"], params["blin"],
      params["wq"], params["bq"], params["wk"], params["bk"],
      params["wv"], params["bv"], params["wo"], params["bo"],
      params["g1"], params["be1"], params["wf1"], params["bf1"],
      params["wf2"], params["bf2"], params["g2"], params["be2"],
      params["wup"], params["bup"])
    return out.reshape(B, L, H, W)


# ----------------------------------------------------------------------------
# Deterministic parameter initialization.  Minor dims are zero-padded to 128
# so every in-kernel matmul result is lane-dense; gamma/beta are zero-padded so
# padded hidden columns stay exactly zero through the whole network.
# ----------------------------------------------------------------------------
def init_params(key, *, hidden_dim, projection_dim, n_heads, head_dim,
                n_layers, conv_channels, image_size):
    D, P, Hd, C = hidden_dim, projection_dim, head_dim, conv_channels
    Dp, Pp, Hdp = _round_up(D, 128), _round_up(P, 128), _round_up(Hd, 128)
    HW = image_size * image_size

    ks = jax.random.split(key, 9)

    def nrm(k, shape):
        return 0.02 * jax.random.normal(k, shape, jnp.float32)

    def pad(a, shape, dtype):
        pads = [(0, t - s) for s, t in zip(a.shape, shape)]
        return jnp.pad(a, pads).astype(dtype)

    return {
        # embedder (MobileNetV2 stand-in): 3x3 conv taps + pool + linear
        "wconv": nrm(ks[0], (9, C)),
        "bconv": jnp.zeros((C,), jnp.float32),
        "wlin": pad(nrm(ks[1], (C, D)), (C, Dp), jnp.float32),
        "blin": jnp.zeros((1, Dp), jnp.float32),
        # transformer blocks, stacked over layers, per-head Q/K/V/out-proj
        "wq": pad(nrm(ks[2], (n_layers, n_heads, D, Hd)),
                  (n_layers, n_heads, Dp, Hdp), jnp.bfloat16),
        "bq": jnp.zeros((n_layers, n_heads, 1, Hdp), jnp.float32),
        "wk": pad(nrm(ks[3], (n_layers, n_heads, D, Hd)),
                  (n_layers, n_heads, Dp, Hdp), jnp.bfloat16),
        "bk": jnp.zeros((n_layers, n_heads, 1, Hdp), jnp.float32),
        "wv": pad(nrm(ks[4], (n_layers, n_heads, D, Hd)),
                  (n_layers, n_heads, Dp, Hdp), jnp.bfloat16),
        "bv": jnp.zeros((n_layers, n_heads, 1, Hdp), jnp.float32),
        "wo": pad(nrm(ks[5], (n_layers, n_heads, Hd, D)),
                  (n_layers, n_heads, Hdp, Dp), jnp.bfloat16),
        "bo": jnp.zeros((n_layers, 1, Dp), jnp.float32),
        "g1": pad(jnp.ones((n_layers, 1, D), jnp.float32), (n_layers, 1, Dp), jnp.float32),
        "be1": jnp.zeros((n_layers, 1, Dp), jnp.float32),
        "wf1": pad(nrm(ks[6], (n_layers, D, P)), (n_layers, Dp, Pp), jnp.bfloat16),
        "bf1": jnp.zeros((n_layers, 1, Pp), jnp.float32),
        "wf2": pad(nrm(ks[7], (n_layers, P, D)), (n_layers, Pp, Dp), jnp.bfloat16),
        "bf2": jnp.zeros((n_layers, 1, Dp), jnp.float32),
        "g2": pad(jnp.ones((n_layers, 1, D), jnp.float32), (n_layers, 1, Dp), jnp.float32),
        "be2": jnp.zeros((n_layers, 1, Dp), jnp.float32),
        # UpNet stand-in
        "wup": pad(nrm(ks[8], (D, HW)), (Dp, HW), jnp.bfloat16),
        "bup": jnp.zeros((1, HW), jnp.float32),
    }


if __name__ == "__main__":
    # Small shapes consistent with the module's forward: (batch, seq, height, width).
    B, L, H, W = 2, 8, 16, 16
    hidden_dim, projection_dim = 32, 64
    n_heads, head_dim, n_layers = 2, 16, 2
    conv_channels = 8

    key = jax.random.PRNGKey(0)
    k_inp, k_par = jax.random.split(key)
    x = jax.random.normal(k_inp, (B, L, H, W), jnp.float32)
    params = init_params(k_par, hidden_dim=hidden_dim, projection_dim=projection_dim,
                         n_heads=n_heads, head_dim=head_dim, n_layers=n_layers,
                         conv_channels=conv_channels, image_size=H)

    fwd = jax.jit(functools.partial(cnn_transformer_net,
                                    hidden_dim=hidden_dim, head_dim=head_dim))
    out = jax.block_until_ready(fwd(x, params))
    assert out.shape == (B, L, H, W), out.shape
    assert bool(jnp.all(jnp.isfinite(out)))
    print("KERNEL_OK")
</pallas_src>

<mosaic_0001>
module attributes {stable_mosaic.version = 11 : i64} {
  func.func @_fused_kernel(%arg0: i32, %arg1: i32, %arg2: memref<9x8x256xf32, #tpu.memory_space<vmem>>, %arg3: memref<9x8xf32, #tpu.memory_space<smem>>, %arg4: memref<8xf32, #tpu.memory_space<smem>>, %arg5: memref<8x128xf32, #tpu.memory_space<vmem>>, %arg6: memref<1x128xf32, #tpu.memory_space<vmem>>, %arg7: memref<1x2x128x128xbf16, #tpu.memory_space<vmem>>, %arg8: memref<1x2x1x128xf32, #tpu.memory_space<vmem>>, %arg9: memref<1x2x128x128xbf16, #tpu.memory_space<vmem>>, %arg10: memref<1x2x1x128xf32, #tpu.memory_space<vmem>>, %arg11: memref<1x2x128x128xbf16, #tpu.memory_space<vmem>>, %arg12: memref<1x2x1x128xf32, #tpu.memory_space<vmem>>, %arg13: memref<1x2x128x128xbf16, #tpu.memory_space<vmem>>, %arg14: memref<1x1x128xf32, #tpu.memory_space<vmem>>, %arg15: memref<1x1x128xf32, #tpu.memory_space<vmem>>, %arg16: memref<1x1x128xf32, #tpu.memory_space<vmem>>, %arg17: memref<1x128x128xbf16, #tpu.memory_space<vmem>>, %arg18: memref<1x1x128xf32, #tpu.memory_space<vmem>>, %arg19: memref<1x128x128xbf16, #tpu.memory_space<vmem>>, %arg20: memref<1x1x128xf32, #tpu.memory_space<vmem>>, %arg21: memref<1x1x128xf32, #tpu.memory_space<vmem>>, %arg22: memref<1x1x128xf32, #tpu.memory_space<vmem>>, %arg23: memref<128x256xbf16, #tpu.memory_space<vmem>>, %arg24: memref<1x256xf32, #tpu.memory_space<vmem>>, %arg25: memref<8x256xf32, #tpu.memory_space<vmem>>, %arg26: memref<8x128xf32, #tpu.memory_space<vmem>>) attributes {dimension_semantics = [#tpu.dimension_semantics<parallel>, #tpu.dimension_semantics<arbitrary>], iteration_bounds = array<i64: 2, 2>, scalar_prefetch = 0 : i64, scratch_operands = 1 : i64, tpu.core_type = #tpu.core_type<tc>, window_params = [{transform_indices = @transform_0, window_bounds = array<i64: 9, 8, 256>}, {transform_indices = @transform_1, window_bounds = array<i64: 9, 8>}, {transform_indices = @transform_2, window_bounds = array<i64: 8>}, {pipeline_mode = #tpu.pipeline_mode<synchronous>, transform_indices = @transform_3, window_bounds = array<i64: 8, 128>}, {pipeline_mode = #tpu.pipeline_mode<synchronous>, transform_indices = @transform_4, window_bounds = array<i64: 1, 128>}, {transform_indices = @transform_5, window_bounds = array<i64: 1, 2, 128, 128>}, {transform_indices = @transform_6, window_bounds = array<i64: 1, 2, 1, 128>}, {transform_indices = @transform_7, window_bounds = array<i64: 1, 2, 128, 128>}, {transform_indices = @transform_8, window_bounds = array<i64: 1, 2, 1, 128>}, {transform_indices = @transform_9, window_bounds = array<i64: 1, 2, 128, 128>}, {transform_indices = @transform_10, window_bounds = array<i64: 1, 2, 1, 128>}, {transform_indices = @transform_11, window_bounds = array<i64: 1, 2, 128, 128>}, {transform_indices = @transform_12, window_bounds = array<i64: 1, 1, 128>}, {transform_indices = @transform_13, window_bounds = array<i64: 1, 1, 128>}, {transform_indices = @transform_14, window_bounds = array<i64: 1, 1, 128>}, {transform_indices = @transform_15, window_bounds = array<i64: 1, 128, 128>}, {transform_indices = @transform_16, window_bounds = array<i64: 1, 1, 128>}, {transform_indices = @transform_17, window_bounds = array<i64: 1, 128, 128>}, {transform_indices = @transform_18, window_bounds = array<i64: 1, 1, 128>}, {transform_indices = @transform_19, window_bounds = array<i64: 1, 1, 128>}, {transform_indices = @transform_20, window_bounds = array<i64: 1, 1, 128>}, {pipeline_mode = #tpu.pipeline_mode<synchronous>, transform_indices = @transform_21, window_bounds = array<i64: 128, 256>}, {pipeline_mode = #tpu.pipeline_mode<synchronous>, transform_indices = @transform_22, window_bounds = array<i64: 1, 256>}, {transform_indices = @transform_23, window_bounds = array<i64: 8, 256>}]} {
    %c0_i32 = arith.constant 0 : i32
    %0 = arith.cmpi eq, %arg1, %c0_i32 : i32
    %1 = arith.extui %0 : i1 to i32
    %c0_i32_0 = arith.constant 0 : i32
    %2 = arith.cmpi ne, %1, %c0_i32_0 : i32
    scf.if %2 {
      %cst_83 = arith.constant 0.000000e+00 : f32
      %140 = vector.broadcast %cst_83 : f32 to vector<8x128xf32>
      %c0_84 = arith.constant 0 : index
      %c0_85 = arith.constant 0 : index
      %c0_86 = arith.constant 0 : index
      %141 = vector.load %arg2[%c0_84, %c0_85, %c0_86] : memref<9x8x256xf32, #tpu.memory_space<vmem>>, vector<1x8x256xf32>
      %142 = vector.shape_cast %141 : vector<1x8x256xf32> to vector<8x256xf32>
      %c0_87 = arith.constant 0 : index
      %c0_88 = arith.constant 0 : index
      %143 = memref.load %arg3[%c0_87, %c0_88] : memref<9x8xf32, #tpu.memory_space<smem>>
      %144 = vector.broadcast %143 : f32 to vector<8x256xf32>
      %145 = arith.mulf %142, %144 : vector<8x256xf32>
      %c1 = arith.constant 1 : index
      %c0_89 = arith.constant 0 : index
      %c0_90 = arith.constant 0 : index
      %146 = vector.load %arg2[%c1, %c0_89, %c0_90] : memref<9x8x256xf32, #tpu.memory_space<vmem>>, vector<1x8x256xf32>
      %147 = vector.shape_cast %146 : vector<1x8x256xf32> to vector<8x256xf32>
      %c1_91 = arith.constant 1 : index
      %c0_92 = arith.constant 0 : index
      %148 = memref.load %arg3[%c1_91, %c0_92] : memref<9x8xf32, #tpu.memory_space<smem>>
      %149 = vector.broadcast %148 : f32 to vector<8x256xf32>
      %150 = arith.mulf %147, %149 : vector<8x256xf32>
      %151 = arith.addf %145, %150 : vector<8x256xf32>
      %c2 = arith.constant 2 : index
      %c0_93 = arith.constant 0 : index
      %c0_94 = arith.constant 0 : index
      %152 = vector.load %arg2[%c2, %c0_93, %c0_94] : memref<9x8x256xf32, #tpu.memory_space<vmem>>, vector<1x8x256xf32>
      %153 = vector.shape_cast %152 : vector<1x8x256xf32> to vector<8x256xf32>
      %c2_95 = arith.constant 2 : index
      %c0_96 = arith.constant 0 : index
      %154 = memref.load %arg3[%c2_95, %c0_96] : memref<9x8xf32, #tpu.memory_space<smem>>
      %155 = vector.broadcast %154 : f32 to vector<8x256xf32>
      %156 = arith.mulf %153, %155 : vector<8x256xf32>
      %157 = arith.addf %151, %156 : vector<8x256xf32>
      %c3 = arith.constant 3 : index
      %c0_97 = arith.constant 0 : index
      %c0_98 = arith.constant 0 : index
      %158 = vector.load %arg2[%c3, %c0_97, %c0_98] : memref<9x8x256xf32, #tpu.memory_space<vmem>>, vector<1x8x256xf32>
      %159 = vector.shape_cast %158 : vector<1x8x256xf32> to vector<8x256xf32>
      %c3_99 = arith.constant 3 : index
      %c0_100 = arith.constant 0 : index
      %160 = memref.load %arg3[%c3_99, %c0_100] : memref<9x8xf32, #tpu.memory_space<smem>>
      %161 = vector.broadcast %160 : f32 to vector<8x256xf32>
      %162 = arith.mulf %159, %161 : vector<8x256xf32>
      %163 = arith.addf %157, %162 : vector<8x256xf32>
      %c4 = arith.constant 4 : index
      %c0_101 = arith.constant 0 : index
      %c0_102 = arith.constant 0 : index
      %164 = vector.load %arg2[%c4, %c0_101, %c0_102] : memref<9x8x256xf32, #tpu.memory_space<vmem>>, vector<1x8x256xf32>
      %165 = vector.shape_cast %164 : vector<1x8x256xf32> to vector<8x256xf32>
      %c4_103 = arith.constant 4 : index
      %c0_104 = arith.constant 0 : index
      %166 = memref.load %arg3[%c4_103, %c0_104] : memref<9x8xf32, #tpu.memory_space<smem>>
      %167 = vector.broadcast %166 : f32 to vector<8x256xf32>
      %168 = arith.mulf %165, %167 : vector<8x256xf32>
      %169 = arith.addf %163, %168 : vector<8x256xf32>
      %c5 = arith.constant 5 : index
      %c0_105 = arith.constant 0 : index
      %c0_106 = arith.constant 0 : index
      %170 = vector.load %arg2[%c5, %c0_105, %c0_106] : memref<9x8x256xf32, #tpu.memory_space<vmem>>, vector<1x8x256xf32>
      %171 = vector.shape_cast %170 : vector<1x8x256xf32> to vector<8x256xf32>
      %c5_107 = arith.constant 5 : index
      %c0_108 = arith.constant 0 : index
      %172 = memref.load %arg3[%c5_107, %c0_108] : memref<9x8xf32, #tpu.memory_space<smem>>
      %173 = vector.broadcast %172 : f32 to vector<8x256xf32>
      %174 = arith.mulf %171, %173 : vector<8x256xf32>
      %175 = arith.addf %169, %174 : vector<8x256xf32>
      %c6 = arith.constant 6 : index
      %c0_109 = arith.constant 0 : index
      %c0_110 = arith.constant 0 : index
      %176 = vector.load %arg2[%c6, %c0_109, %c0_110] : memref<9x8x256xf32, #tpu.memory_space<vmem>>, vector<1x8x256xf32>
      %177 = vector.shape_cast %176 : vector<1x8x256xf32> to vector<8x256xf32>
      %c6_111 = arith.constant 6 : index
      %c0_112 = arith.constant 0 : index
      %178 = memref.load %arg3[%c6_111, %c0_112] : memref<9x8xf32, #tpu.memory_space<smem>>
      %179 = vector.broadcast %178 : f32 to vector<8x256xf32>
      %180 = arith.mulf %177, %179 : vector<8x256xf32>
      %181 = arith.addf %175, %180 : vector<8x256xf32>
      %c7 = arith.constant 7 : index
      %c0_113 = arith.constant 0 : index
      %c0_114 = arith.constant 0 : index
      %182 = vector.load %arg2[%c7, %c0_113, %c0_114] : memref<9x8x256xf32, #tpu.memory_space<vmem>>, vector<1x8x256xf32>
      %183 = vector.shape_cast %182 : vector<1x8x256xf32> to vector<8x256xf32>
      %c7_115 = arith.constant 7 : index
      %c0_116 = arith.constant 0 : index
      %184 = memref.load %arg3[%c7_115, %c0_116] : memref<9x8xf32, #tpu.memory_space<smem>>
      %185 = vector.broadcast %184 : f32 to vector<8x256xf32>
      %186 = arith.mulf %183, %185 : vector<8x256xf32>
      %187 = arith.addf %181, %186 : vector<8x256xf32>
      %c8 = arith.constant 8 : index
      %c0_117 = arith.constant 0 : index
      %c0_118 = arith.constant 0 : index
      %188 = vector.load %arg2[%c8, %c0_117, %c0_118] : memref<9x8x256xf32, #tpu.memory_space<vmem>>, vector<1x8x256xf32>
      %189 = vector.shape_cast %188 : vector<1x8x256xf32> to vector<8x256xf32>
      %c8_119 = arith.constant 8 : index
      %c0_120 = arith.constant 0 : index
      %190 = memref.load %arg3[%c8_119, %c0_120] : memref<9x8xf32, #tpu.memory_space<smem>>
      %191 = vector.broadcast %190 : f32 to vector<8x256xf32>
      %192 = arith.mulf %189, %191 : vector<8x256xf32>
      %193 = arith.addf %187, %192 : vector<8x256xf32>
      %c0_121 = arith.constant 0 : index
      %194 = memref.load %arg4[%c0_121] : memref<8xf32, #tpu.memory_space<smem>>
      %195 = vector.broadcast %194 : f32 to vector<8x256xf32>
      %196 = arith.addf %193, %195 : vector<8x256xf32>
      %cst_122 = arith.constant 0.000000e+00 : f32
      %197 = vector.broadcast %cst_122 : f32 to vector<8x256xf32>
      %198 = arith.maximumf %196, %197 : vector<8x256xf32>
      %cst_123 = arith.constant dense<0.000000e+00> : vector<8xf32>
      %199 = vector.multi_reduction <add>, %198, %cst_123 [1] : vector<8x256xf32> to vector<8xf32>
      %200 = vector.shape_cast %199 : vector<8xf32> to vector<8x1xf32>
      %cst_124 = arith.constant 3.906250e-03 : f32
      %201 = vector.broadcast %cst_124 : f32 to vector<8x1xf32>
      %202 = arith.mulf %200, %201 : vector<8x1xf32>
      %c0_125 = arith.constant 0 : index
      %c0_126 = arith.constant 0 : index
      %203 = vector.load %arg5[%c0_125, %c0_126] : memref<8x128xf32, #tpu.memory_space<vmem>>, vector<1x128xf32>
      %204 = vector.broadcast %202 : vector<8x1xf32> to vector<8x128xf32>
      %205 = vector.broadcast %203 : vector<1x128xf32> to vector<8x128xf32>
      %206 = arith.mulf %204, %205 : vector<8x128xf32>
      %207 = arith.addf %140, %206 : vector<8x128xf32>
      %c0_127 = arith.constant 0 : index
      %c0_128 = arith.constant 0 : index
      %c0_129 = arith.constant 0 : index
      %208 = vector.load %arg2[%c0_127, %c0_128, %c0_129] : memref<9x8x256xf32, #tpu.memory_space<vmem>>, vector<1x8x256xf32>
      %209 = vector.shape_cast %208 : vector<1x8x256xf32> to vector<8x256xf32>
      %c0_130 = arith.constant 0 : index
      %c1_131 = arith.constant 1 : index
      %210 = memref.load %arg3[%c0_130, %c1_131] : memref<9x8xf32, #tpu.memory_space<smem>>
      %211 = vector.broadcast %210 : f32 to vector<8x256xf32>
      %212 = arith.mulf %209, %211 : vector<8x256xf32>
      %c1_132 = arith.constant 1 : index
      %c0_133 = arith.constant 0 : index
      %c0_134 = arith.constant 0 : index
      %213 = vector.load %arg2[%c1_132, %c0_133, %c0_134] : memref<9x8x256xf32, #tpu.memory_space<vmem>>, vector<1x8x256xf32>
      %214 = vector.shape_cast %213 : vector<1x8x256xf32> to vector<8x256xf32>
      %c1_135 = arith.constant 1 : index
      %c1_136 = arith.constant 1 : index
      %215 = memref.load %arg3[%c1_135, %c1_136] : memref<9x8xf32, #tpu.memory_space<smem>>
      %216 = vector.broadcast %215 : f32 to vector<8x256xf32>
      %217 = arith.mulf %214, %216 : vector<8x256xf32>
      %218 = arith.addf %212, %217 : vector<8x256xf32>
      %c2_137 = arith.constant 2 : index
      %c0_138 = arith.constant 0 : index
      %c0_139 = arith.constant 0 : index
      %219 = vector.load %arg2[%c2_137, %c0_138, %c0_139] : memref<9x8x256xf32, #tpu.memory_space<vmem>>, vector<1x8x256xf32>
      %220 = vector.shape_cast %219 : vector<1x8x256xf32> to vector<8x256xf32>
      %c2_140 = arith.constant 2 : index
      %c1_141 = arith.constant 1 : index
      %221 = memref.load %arg3[%c2_140, %c1_141] : memref<9x8xf32, #tpu.memory_space<smem>>
      %222 = vector.broadcast %221 : f32 to vector<8x256xf32>
      %223 = arith.mulf %220, %222 : vector<8x256xf32>
      %224 = arith.addf %218, %223 : vector<8x256xf32>
      %c3_142 = arith.constant 3 : index
      %c0_143 = arith.constant 0 : index
      %c0_144 = arith.constant 0 : index
      %225 = vector.load %arg2[%c3_142, %c0_143, %c0_144] : memref<9x8x256xf32, #tpu.memory_space<vmem>>, vector<1x8x256xf32>
      %226 = vector.shape_cast %225 : vector<1x8x256xf32> to vector<8x256xf32>
      %c3_145 = arith.constant 3 : index
      %c1_146 = arith.constant 1 : index
      %227 = memref.load %arg3[%c3_145, %c1_146] : memref<9x8xf32, #tpu.memory_space<smem>>
      %228 = vector.broadcast %227 : f32 to vector<8x256xf32>
      %229 = arith.mulf %226, %228 : vector<8x256xf32>
      %230 = arith.addf %224, %229 : vector<8x256xf32>
      %c4_147 = arith.constant 4 : index
      %c0_148 = arith.constant 0 : index
      %c0_149 = arith.constant 0 : index
      %231 = vector.load %arg2[%c4_147, %c0_148, %c0_149] : memref<9x8x256xf32, #tpu.memory_space<vmem>>, vector<1x8x256xf32>
      %232 = vector.shape_cast %231 : vector<1x8x256xf32> to vector<8x256xf32>
      %c4_150 = arith.constant 4 : index
      %c1_151 = arith.constant 1 : index
      %233 = memref.load %arg3[%c4_150, %c1_151] : memref<9x8xf32, #tpu.memory_space<smem>>
      %234 = vector.broadcast %233 : f32 to vector<8x256xf32>
      %235 = arith.mulf %232, %234 : vector<8x256xf32>
      %236 = arith.addf %230, %235 : vector<8x256xf32>
      %c5_152 = arith.constant 5 : index
      %c0_153 = arith.constant 0 : index
      %c0_154 = arith.constant 0 : index
      %237 = vector.load %arg2[%c5_152, %c0_153, %c0_154] : memref<9x8x256xf32, #tpu.memory_space<vmem>>, vector<1x8x256xf32>
      %238 = vector.shape_cast %237 : vector<1x8x256xf32> to vector<8x256xf32>
      %c5_155 = arith.constant 5 : index
      %c1_156 = arith.constant 1 : index
      %239 = memref.load %arg3[%c5_155, %c1_156] : memref<9x8xf32, #tpu.memory_space<smem>>
      %240 = vector.broadcast %239 : f32 to vector<8x256xf32>
      %241 = arith.mulf %238, %240 : vector<8x256xf32>
      %242 = arith.addf %236, %241 : vector<8x256xf32>
      %c6_157 = arith.constant 6 : index
      %c0_158 = arith.constant 0 : index
      %c0_159 = arith.constant 0 : index
      %243 = vector.load %arg2[%c6_157, %c0_158, %c0_159] : memref<9x8x256xf32, #tpu.memory_space<vmem>>, vector<1x8x256xf32>
      %244 = vector.shape_cast %243 : vector<1x8x256xf32> to vector<8x256xf32>
      %c6_160 = arith.constant 6 : index
      %c1_161 = arith.constant 1 : index
      %245 = memref.load %arg3[%c6_160, %c1_161] : memref<9x8xf32, #tpu.memory_space<smem>>
      %246 = vector.broadcast %245 : f32 to vector<8x256xf32>
      %247 = arith.mulf %244, %246 : vector<8x256xf32>
      %248 = arith.addf %242, %247 : vector<8x256xf32>
      %c7_162 = arith.constant 7 : index
      %c0_163 = arith.constant 0 : index
      %c0_164 = arith.constant 0 : index
      %249 = vector.load %arg2[%c7_162, %c0_163, %c0_164] : memref<9x8x256xf32, #tpu.memory_space<vmem>>, vector<1x8x256xf32>
      %250 = vector.shape_cast %249 : vector<1x8x256xf32> to vector<8x256xf32>
      %c7_165 = arith.constant 7 : index
      %c1_166 = arith.constant 1 : index
      %251 = memref.load %arg3[%c7_165, %c1_166] : memref<9x8xf32, #tpu.memory_space<smem>>
      %252 = vector.broadcast %251 : f32 to vector<8x256xf32>
      %253 = arith.mulf %250, %252 : vector<8x256xf32>
      %254 = arith.addf %248, %253 : vector<8x256xf32>
      %c8_167 = arith.constant 8 : index
      %c0_168 = arith.constant 0 : index
      %c0_169 = arith.constant 0 : index
      %255 = vector.load %arg2[%c8_167, %c0_168, %c0_169] : memref<9x8x256xf32, #tpu.memory_space<vmem>>, vector<1x8x256xf32>
      %256 = vector.shape_cast %255 : vector<1x8x256xf32> to vector<8x256xf32>
      %c8_170 = arith.constant 8 : index
      %c1_171 = arith.constant 1 : index
      %257 = memref.load %arg3[%c8_170, %c1_171] : memref<9x8xf32, #tpu.memory_space<smem>>
      %258 = vector.broadcast %257 : f32 to vector<8x256xf32>
      %259 = arith.mulf %256, %258 : vector<8x256xf32>
      %260 = arith.addf %254, %259 : vector<8x256xf32>
      %c1_172 = arith.constant 1 : index
      %261 = memref.load %arg4[%c1_172] : memref<8xf32, #tpu.memory_space<smem>>
      %262 = vector.broadcast %261 : f32 to vector<8x256xf32>
      %263 = arith.addf %260, %262 : vector<8x256xf32>
      %cst_173 = arith.constant 0.000000e+00 : f32
      %264 = vector.broadcast %cst_173 : f32 to vector<8x256xf32>
      %265 = arith.maximumf %263, %264 : vector<8x256xf32>
      %cst_174 = arith.constant dense<0.000000e+00> : vector<8xf32>
      %266 = vector.multi_reduction <add>, %265, %cst_174 [1] : vector<8x256xf32> to vector<8xf32>
      %267 = vector.shape_cast %266 : vector<8xf32> to vector<8x1xf32>
      %cst_175 = arith.constant 3.906250e-03 : f32
      %268 = vector.broadcast %cst_175 : f32 to vector<8x1xf32>
      %269 = arith.mulf %267, %268 : vector<8x1xf32>
      %c1_176 = arith.constant 1 : index
      %c0_177 = arith.constant 0 : index
      %270 = vector.load %arg5[%c1_176, %c0_177] : memref<8x128xf32, #tpu.memory_space<vmem>>, vector<1x128xf32>
      %271 = vector.broadcast %269 : vector<8x1xf32> to vector<8x128xf32>
      %272 = vector.broadcast %270 : vector<1x128xf32> to vector<8x128xf32>
      %273 = arith.mulf %271, %272 : vector<8x128xf32>
      %274 = arith.addf %207, %273 : vector<8x128xf32>
      %c0_178 = arith.constant 0 : index
      %c0_179 = arith.constant 0 : index
      %c0_180 = arith.constant 0 : index
      %275 = vector.load %arg2[%c0_178, %c0_179, %c0_180] : memref<9x8x256xf32, #tpu.memory_space<vmem>>, vector<1x8x256xf32>
      %276 = vector.shape_cast %275 : vector<1x8x256xf32> to vector<8x256xf32>
      %c0_181 = arith.constant 0 : index
      %c2_182 = arith.constant 2 : index
      %277 = memref.load %arg3[%c0_181, %c2_182] : memref<9x8xf32, #tpu.memory_space<smem>>
      %278 = vector.broadcast %277 : f32 to vector<8x256xf32>
      %279 = arith.mulf %276, %278 : vector<8x256xf32>
      %c1_183 = arith.constant 1 : index
      %c0_184 = arith.constant 0 : index
      %c0_185 = arith.constant 0 : index
      %280 = vector.load %arg2[%c1_183, %c0_184, %c0_185] : memref<9x8x256xf32, #tpu.memory_space<vmem>>, vector<1x8x256xf32>
      %281 = vector.shape_cast %280 : vector<1x8x256xf32> to vector<8x256xf32>
      %c1_186 = arith.constant 1 : index
      %c2_187 = arith.constant 2 : index
      %282 = memref.load %arg3[%c1_186, %c2_187] : memref<9x8xf32, #tpu.memory_space<smem>>
      %283 = vector.broadcast %282 : f32 to vector<8x256xf32>
      %284 = arith.mulf %281, %283 : vector<8x256xf32>
      %285 = arith.addf %279, %284 : vector<8x256xf32>
      %c2_188 = arith.constant 2 : index
      %c0_189 = arith.constant 0 : index
      %c0_190 = arith.constant 0 : index
      %286 = vector.load %arg2[%c2_188, %c0_189, %c0_190] : memref<9x8x256xf32, #tpu.memory_space<vmem>>, vector<1x8x256xf32>
      %287 = vector.shape_cast %286 : vector<1x8x256xf32> to vector<8x256xf32>
      %c2_191 = arith.constant 2 : index
      %c2_192 = arith.constant 2 : index
      %288 = memref.load %arg3[%c2_191, %c2_192] : memref<9x8xf32, #tpu.memory_space<smem>>
      %289 = vector.broadcast %288 : f32 to vector<8x256xf32>
      %290 = arith.mulf %287, %289 : vector<8x256xf32>
      %291 = arith.addf %285, %290 : vector<8x256xf32>
      %c3_193 = arith.constant 3 : index
      %c0_194 = arith.constant 0 : index
      %c0_195 = arith.constant 0 : index
      %292 = vector.load %arg2[%c3_193, %c0_194, %c0_195] : memref<9x8x256xf32, #tpu.memory_space<vmem>>, vector<1x8x256xf32>
      %293 = vector.shape_cast %292 : vector<1x8x256xf32> to vector<8x256xf32>
      %c3_196 = arith.constant 3 : index
      %c2_197 = arith.constant 2 : index
      %294 = memref.load %arg3[%c3_196, %c2_197] : memref<9x8xf32, #tpu.memory_space<smem>>
      %295 = vector.broadcast %294 : f32 to vector<8x256xf32>
      %296 = arith.mulf %293, %295 : vector<8x256xf32>
      %297 = arith.addf %291, %296 : vector<8x256xf32>
      %c4_198 = arith.constant 4 : index
      %c0_199 = arith.constant 0 : index
      %c0_200 = arith.constant 0 : index
      %298 = vector.load %arg2[%c4_198, %c0_199, %c0_200] : memref<9x8x256xf32, #tpu.memory_space<vmem>>, vector<1x8x256xf32>
      %299 = vector.shape_cast %298 : vector<1x8x256xf32> to vector<8x256xf32>
      %c4_201 = arith.constant 4 : index
      %c2_202 = arith.constant 2 : index
      %300 = memref.load %arg3[%c4_201, %c2_202] : memref<9x8xf32, #tpu.memory_space<smem>>
      %301 = vector.broadcast %300 : f32 to vector<8x256xf32>
      %302 = arith.mulf %299, %301 : vector<8x256xf32>
      %303 = arith.addf %297, %302 : vector<8x256xf32>
      %c5_203 = arith.constant 5 : index
      %c0_204 = arith.constant 0 : index
      %c0_205 = arith.constant 0 : index
      %304 = vector.load %arg2[%c5_203, %c0_204, %c0_205] : memref<9x8x256xf32, #tpu.memory_space<vmem>>, vector<1x8x256xf32>
      %305 = vector.shape_cast %304 : vector<1x8x256xf32> to vector<8x256xf32>
      %c5_206 = arith.constant 5 : index
      %c2_207 = arith.constant 2 : index
      %306 = memref.load %arg3[%c5_206, %c2_207] : memref<9x8xf32, #tpu.memory_space<smem>>
      %307 = vector.broadcast %306 : f32 to vector<8x256xf32>
      %308 = arith.mulf %305, %307 : vector<8x256xf32>
      %309 = arith.addf %303, %308 : vector<8x256xf32>
      %c6_208 = arith.constant 6 : index
      %c0_209 = arith.constant 0 : index
      %c0_210 = arith.constant 0 : index
      %310 = vector.load %arg2[%c6_208, %c0_209, %c0_210] : memref<9x8x256xf32, #tpu.memory_space<vmem>>, vector<1x8x256xf32>
      %311 = vector.shape_cast %310 : vector<1x8x256xf32> to vector<8x256xf32>
      %c6_211 = arith.constant 6 : index
      %c2_212 = arith.constant 2 : index
      %312 = memref.load %arg3[%c6_211, %c2_212] : memref<9x8xf32, #tpu.memory_space<smem>>
      %313 = vector.broadcast %312 : f32 to vector<8x256xf32>
      %314 = arith.mulf %311, %313 : vector<8x256xf32>
      %315 = arith.addf %309, %314 : vector<8x256xf32>
      %c7_213 = arith.constant 7 : index
      %c0_214 = arith.constant 0 : index
      %c0_215 = arith.constant 0 : index
      %316 = vector.load %arg2[%c7_213, %c0_214, %c0_215] : memref<9x8x256xf32, #tpu.memory_space<vmem>>, vector<1x8x256xf32>
      %317 = vector.shape_cast %316 : vector<1x8x256xf32> to vector<8x256xf32>
      %c7_216 = arith.constant 7 : index
      %c2_217 = arith.constant 2 : index
      %318 = memref.load %arg3[%c7_216, %c2_217] : memref<9x8xf32, #tpu.memory_space<smem>>
      %319 = vector.broadcast %318 : f32 to vector<8x256xf32>
      %320 = arith.mulf %317, %319 : vector<8x256xf32>
      %321 = arith.addf %315, %320 : vector<8x256xf32>
      %c8_218 = arith.constant 8 : index
      %c0_219 = arith.constant 0 : index
      %c0_220 = arith.constant 0 : index
      %322 = vector.load %arg2[%c8_218, %c0_219, %c0_220] : memref<9x8x256xf32, #tpu.memory_space<vmem>>, vector<1x8x256xf32>
      %323 = vector.shape_cast %322 : vector<1x8x256xf32> to vector<8x256xf32>
      %c8_221 = arith.constant 8 : index
      %c2_222 = arith.constant 2 : index
      %324 = memref.load %arg3[%c8_221, %c2_222] : memref<9x8xf32, #tpu.memory_space<smem>>
      %325 = vector.broadcast %324 : f32 to vector<8x256xf32>
      %326 = arith.mulf %323, %325 : vector<8x256xf32>
      %327 = arith.addf %321, %326 : vector<8x256xf32>
      %c2_223 = arith.constant 2 : index
      %328 = memref.load %arg4[%c2_223] : memref<8xf32, #tpu.memory_space<smem>>
      %329 = vector.broadcast %328 : f32 to vector<8x256xf32>
      %330 = arith.addf %327, %329 : vector<8x256xf32>
      %cst_224 = arith.constant 0.000000e+00 : f32
      %331 = vector.broadcast %cst_224 : f32 to vector<8x256xf32>
      %332 = arith.maximumf %330, %331 : vector<8x256xf32>
      %cst_225 = arith.constant dense<0.000000e+00> : vector<8xf32>
      %333 = vector.multi_reduction <add>, %332, %cst_225 [1] : vector<8x256xf32> to vector<8xf32>
      %334 = vector.shape_cast %333 : vector<8xf32> to vector<8x1xf32>
      %cst_226 = arith.constant 3.906250e-03 : f32
      %335 = vector.broadcast %cst_226 : f32 to vector<8x1xf32>
      %336 = arith.mulf %334, %335 : vector<8x1xf32>
      %c2_227 = arith.constant 2 : index
      %c0_228 = arith.constant 0 : index
      %337 = vector.load %arg5[%c2_227, %c0_228] : memref<8x128xf32, #tpu.memory_space<vmem>>, vector<1x128xf32>
      %338 = vector.broadcast %336 : vector<8x1xf32> to vector<8x128xf32>
      %339 = vector.broadcast %337 : vector<1x128xf32> to vector<8x128xf32>
      %340 = arith.mulf %338, %339 : vector<8x128xf32>
      %341 = arith.addf %274, %340 : vector<8x128xf32>
      %c0_229 = arith.constant 0 : index
      %c0_230 = arith.constant 0 : index
      %c0_231 = arith.constant 0 : index
      %342 = vector.load %arg2[%c0_229, %c0_230, %c0_231] : memref<9x8x256xf32, #tpu.memory_space<vmem>>, vector<1x8x256xf32>
      %343 = vector.shape_cast %342 : vector<1x8x256xf32> to vector<8x256xf32>
      %c0_232 = arith.constant 0 : index
      %c3_233 = arith.constant 3 : index
      %344 = memref.load %arg3[%c0_232, %c3_233] : memref<9x8xf32, #tpu.memory_space<smem>>
      %345 = vector.broadcast %344 : f32 to vector<8x256xf32>
      %346 = arith.mulf %343, %345 : vector<8x256xf32>
      %c1_234 = arith.constant 1 : index
      %c0_235 = arith.constant 0 : index
      %c0_236 = arith.constant 0 : index
      %347 = vector.load %arg2[%c1_234, %c0_235, %c0_236] : memref<9x8x256xf32, #tpu.memory_space<vmem>>, vector<1x8x256xf32>
      %348 = vector.shape_cast %347 : vector<1x8x256xf32> to vector<8x256xf32>
      %c1_237 = arith.constant 1 : index
      %c3_238 = arith.constant 3 : index
      %349 = memref.load %arg3[%c1_237, %c3_238] : memref<9x8xf32, #tpu.memory_space<smem>>
      %350 = vector.broadcast %349 : f32 to vector<8x256xf32>
      %351 = arith.mulf %348, %350 : vector<8x256xf32>
      %352 = arith.addf %346, %351 : vector<8x256xf32>
      %c2_239 = arith.constant 2 : index
      %c0_240 = arith.constant 0 : index
      %c0_241 = arith.constant 0 : index
      %353 = vector.load %arg2[%c2_239, %c0_240, %c0_241] : memref<9x8x256xf32, #tpu.memory_space<vmem>>, vector<1x8x256xf32>
      %354 = vector.shape_cast %353 : vector<1x8x256xf32> to vector<8x256xf32>
      %c2_242 = arith.constant 2 : index
      %c3_243 = arith.constant 3 : index
      %355 = memref.load %arg3[%c2_242, %c3_243] : memref<9x8xf32, #tpu.memory_space<smem>>
      %356 = vector.broadcast %355 : f32 to vector<8x256xf32>
      %357 = arith.mulf %354, %356 : vector<8x256xf32>
      %358 = arith.addf %352, %357 : vector<8x256xf32>
      %c3_244 = arith.constant 3 : index
      %c0_245 = arith.constant 0 : index
      %c0_246 = arith.constant 0 : index
      %359 = vector.load %arg2[%c3_244, %c0_245, %c0_246] : memref<9x8x256xf32, #tpu.memory_space<vmem>>, vector<1x8x256xf32>
      %360 = vector.shape_cast %359 : vector<1x8x256xf32> to vector<8x256xf32>
      %c3_247 = arith.constant 3 : index
      %c3_248 = arith.constant 3 : index
      %361 = memref.load %arg3[%c3_247, %c3_248] : memref<9x8xf32, #tpu.memory_space<smem>>
      %362 = vector.broadcast %361 : f32 to vector<8x256xf32>
      %363 = arith.mulf %360, %362 : vector<8x256xf32>
      %364 = arith.addf %358, %363 : vector<8x256xf32>
      %c4_249 = arith.constant 4 : index
      %c0_250 = arith.constant 0 : index
      %c0_251 = arith.constant 0 : index
      %365 = vector.load %arg2[%c4_249, %c0_250, %c0_251] : memref<9x8x256xf32, #tpu.memory_space<vmem>>, vector<1x8x256xf32>
      %366 = vector.shape_cast %365 : vector<1x8x256xf32> to vector<8x256xf32>
      %c4_252 = arith.constant 4 : index
      %c3_253 = arith.constant 3 : index
      %367 = memref.load %arg3[%c4_252, %c3_253] : memref<9x8xf32, #tpu.memory_space<smem>>
      %368 = vector.broadcast %367 : f32 to vector<8x256xf32>
      %369 = arith.mulf %366, %368 : vector<8x256xf32>
      %370 = arith.addf %364, %369 : vector<8x256xf32>
      %c5_254 = arith.constant 5 : index
      %c0_255 = arith.constant 0 : index
      %c0_256 = arith.constant 0 : index
      %371 = vector.load %arg2[%c5_254, %c0_255, %c0_256] : memref<9x8x256xf32, #tpu.memory_space<vmem>>, vector<1x8x256xf32>
      %372 = vector.shape_cast %371 : vector<1x8x256xf32> to vector<8x256xf32>
      %c5_257 = arith.constant 5 : index
      %c3_258 = arith.constant 3 : index
      %373 = memref.load %arg3[%c5_257, %c3_258] : memref<9x8xf32, #tpu.memory_space<smem>>
      %374 = vector.broadcast %373 : f32 to vector<8x256xf32>
      %375 = arith.mulf %372, %374 : vector<8x256xf32>
      %376 = arith.addf %370, %375 : vector<8x256xf32>
      %c6_259 = arith.constant 6 : index
      %c0_260 = arith.constant 0 : index
      %c0_261 = arith.constant 0 : index
      %377 = vector.load %arg2[%c6_259, %c0_260, %c0_261] : memref<9x8x256xf32, #tpu.memory_space<vmem>>, vector<1x8x256xf32>
      %378 = vector.shape_cast %377 : vector<1x8x256xf32> to vector<8x256xf32>
      %c6_262 = arith.constant 6 : index
      %c3_263 = arith.constant 3 : index
      %379 = memref.load %arg3[%c6_262, %c3_263] : memref<9x8xf32, #tpu.memory_space<smem>>
      %380 = vector.broadcast %379 : f32 to vector<8x256xf32>
      %381 = arith.mulf %378, %380 : vector<8x256xf32>
      %382 = arith.addf %376, %381 : vector<8x256xf32>
      %c7_264 = arith.constant 7 : index
      %c0_265 = arith.constant 0 : index
      %c0_266 = arith.constant 0 : index
      %383 = vector.load %arg2[%c7_264, %c0_265, %c0_266] : memref<9x8x256xf32, #tpu.memory_space<vmem>>, vector<1x8x256xf32>
      %384 = vector.shape_cast %383 : vector<1x8x256xf32> to vector<8x256xf32>
      %c7_267 = arith.constant 7 : index
      %c3_268 = arith.constant 3 : index
      %385 = memref.load %arg3[%c7_267, %c3_268] : memref<9x8xf32, #tpu.memory_space<smem>>
      %386 = vector.broadcast %385 : f32 to vector<8x256xf32>
      %387 = arith.mulf %384, %386 : vector<8x256xf32>
      %388 = arith.addf %382, %387 : vector<8x256xf32>
      %c8_269 = arith.constant 8 : index
      %c0_270 = arith.constant 0 : index
      %c0_271 = arith.constant 0 : index
      %389 = vector.load %arg2[%c8_269, %c0_270, %c0_271] : memref<9x8x256xf32, #tpu.memory_space<vmem>>, vector<1x8x256xf32>
      %390 = vector.shape_cast %389 : vector<1x8x256xf32> to vector<8x256xf32>
      %c8_272 = arith.constant 8 : index
      %c3_273 = arith.constant 3 : index
      %391 = memref.load %arg3[%c8_272, %c3_273] : memref<9x8xf32, #tpu.memory_space<smem>>
      %392 = vector.broadcast %391 : f32 to vector<8x256xf32>
      %393 = arith.mulf %390, %392 : vector<8x256xf32>
      %394 = arith.addf %388, %393 : vector<8x256xf32>
      %c3_274 = arith.constant 3 : index
      %395 = memref.load %arg4[%c3_274] : memref<8xf32, #tpu.memory_space<smem>>
      %396 = vector.broadcast %395 : f32 to vector<8x256xf32>
      %397 = arith.addf %394, %396 : vector<8x256xf32>
      %cst_275 = arith.constant 0.000000e+00 : f32
      %398 = vector.broadcast %cst_275 : f32 to vector<8x256xf32>
      %399 = arith.maximumf %397, %398 : vector<8x256xf32>
      %cst_276 = arith.constant dense<0.000000e+00> : vector<8xf32>
      %400 = vector.multi_reduction <add>, %399, %cst_276 [1] : vector<8x256xf32> to vector<8xf32>
      %401 = vector.shape_cast %400 : vector<8xf32> to vector<8x1xf32>
      %cst_277 = arith.constant 3.906250e-03 : f32
      %402 = vector.broadcast %cst_277 : f32 to vector<8x1xf32>
      %403 = arith.mulf %401, %402 : vector<8x1xf32>
      %c3_278 = arith.constant 3 : index
      %c0_279 = arith.constant 0 : index
      %404 = vector.load %arg5[%c3_278, %c0_279] : memref<8x128xf32, #tpu.memory_space<vmem>>, vector<1x128xf32>
      %405 = vector.broadcast %403 : vector<8x1xf32> to vector<8x128xf32>
      %406 = vector.broadcast %404 : vector<1x128xf32> to vector<8x128xf32>
      %407 = arith.mulf %405, %406 : vector<8x128xf32>
      %408 = arith.addf %341, %407 : vector<8x128xf32>
      %c0_280 = arith.constant 0 : index
      %c0_281 = arith.constant 0 : index
      %c0_282 = arith.constant 0 : index
      %409 = vector.load %arg2[%c0_280, %c0_281, %c0_282] : memref<9x8x256xf32, #tpu.memory_space<vmem>>, vector<1x8x256xf32>
      %410 = vector.shape_cast %409 : vector<1x8x256xf32> to vector<8x256xf32>
      %c0_283 = arith.constant 0 : index
      %c4_284 = arith.constant 4 : index
      %411 = memref.load %arg3[%c0_283, %c4_284] : memref<9x8xf32, #tpu.memory_space<smem>>
      %412 = vector.broadcast %411 : f32 to vector<8x256xf32>
      %413 = arith.mulf %410, %412 : vector<8x256xf32>
      %c1_285 = arith.constant 1 : index
      %c0_286 = arith.constant 0 : index
      %c0_287 = arith.constant 0 : index
      %414 = vector.load %arg2[%c1_285, %c0_286, %c0_287] : memref<9x8x256xf32, #tpu.memory_space<vmem>>, vector<1x8x256xf32>
      %415 = vector.shape_cast %414 : vector<1x8x256xf32> to vector<8x256xf32>
      %c1_288 = arith.constant 1 : index
      %c4_289 = arith.constant 4 : index
      %416 = memref.load %arg3[%c1_288, %c4_289] : memref<9x8xf32, #tpu.memory_space<smem>>
      %417 = vector.broadcast %416 : f32 to vector<8x256xf32>
      %418 = arith.mulf %415, %417 : vector<8x256xf32>
      %419 = arith.addf %413, %418 : vector<8x256xf32>
      %c2_290 = arith.constant 2 : index
      %c0_291 = arith.constant 0 : index
      %c0_292 = arith.constant 0 : index
      %420 = vector.load %arg2[%c2_290, %c0_291, %c0_292] : memref<9x8x256xf32, #tpu.memory_space<vmem>>, vector<1x8x256xf32>
      %421 = vector.shape_cast %420 : vector<1x8x256xf32> to vector<8x256xf32>
      %c2_293 = arith.constant 2 : index
      %c4_294 = arith.constant 4 : index
      %422 = memref.load %arg3[%c2_293, %c4_294] : memref<9x8xf32, #tpu.memory_space<smem>>
      %423 = vector.broadcast %422 : f32 to vector<8x256xf32>
      %424 = arith.mulf %421, %423 : vector<8x256xf32>
      %425 = arith.addf %419, %424 : vector<8x256xf32>
      %c3_295 = arith.constant 3 : index
      %c0_296 = arith.constant 0 : index
      %c0_297 = arith.constant 0 : index
      %426 = vector.load %arg2[%c3_295, %c0_296, %c0_297] : memref<9x8x256xf32, #tpu.memory_space<vmem>>, vector<1x8x256xf32>
      %427 = vector.shape_cast %426 : vector<1x8x256xf32> to vector<8x256xf32>
      %c3_298 = arith.constant 3 : index
      %c4_299 = arith.constant 4 : index
      %428 = memref.load %arg3[%c3_298, %c4_299] : memref<9x8xf32, #tpu.memory_space<smem>>
      %429 = vector.broadcast %428 : f32 to vector<8x256xf32>
      %430 = arith.mulf %427, %429 : vector<8x256xf32>
      %431 = arith.addf %425, %430 : vector<8x256xf32>
      %c4_300 = arith.constant 4 : index
      %c0_301 = arith.constant 0 : index
      %c0_302 = arith.constant 0 : index
      %432 = vector.load %arg2[%c4_300, %c0_301, %c0_302] : memref<9x8x256xf32, #tpu.memory_space<vmem>>, vector<1x8x256xf32>
      %433 = vector.shape_cast %432 : vector<1x8x256xf32> to vector<8x256xf32>
      %c4_303 = arith.constant 4 : index
      %c4_304 = arith.constant 4 : index
      %434 = memref.load %arg3[%c4_303, %c4_304] : memref<9x8xf32, #tpu.memory_space<smem>>
      %435 = vector.broadcast %434 : f32 to vector<8x256xf32>
      %436 = arith.mulf %433, %435 : vector<8x256xf32>
      %437 = arith.addf %431, %436 : vector<8x256xf32>
      %c5_305 = arith.constant 5 : index
      %c0_306 = arith.constant 0 : index
      %c0_307 = arith.constant 0 : index
      %438 = vector.load %arg2[%c5_305, %c0_306, %c0_307] : memref<9x8x256xf32, #tpu.memory_space<vmem>>, vector<1x8x256xf32>
      %439 = vector.shape_cast %438 : vector<1x8x256xf32> to vector<8x256xf32>
      %c5_308 = arith.constant 5 : index
      %c4_309 = arith.constant 4 : index
      %440 = memref.load %arg3[%c5_308, %c4_309] : memref<9x8xf32, #tpu.memory_space<smem>>
      %441 = vector.broadcast %440 : f32 to vector<8x256xf32>
      %442 = arith.mulf %439, %441 : vector<8x256xf32>
      %443 = arith.addf %437, %442 : vector<8x256xf32>
      %c6_310 = arith.constant 6 : index
      %c0_311 = arith.constant 0 : index
      %c0_312 = arith.constant 0 : index
      %444 = vector.load %arg2[%c6_310, %c0_311, %c0_312] : memref<9x8x256xf32, #tpu.memory_space<vmem>>, vector<1x8x256xf32>
      %445 = vector.shape_cast %444 : vector<1x8x256xf32> to vector<8x256xf32>
      %c6_313 = arith.constant 6 : index
      %c4_314 = arith.constant 4 : index
      %446 = memref.load %arg3[%c6_313, %c4_314] : memref<9x8xf32, #tpu.memory_space<smem>>
      %447 = vector.broadcast %446 : f32 to vector<8x256xf32>
      %448 = arith.mulf %445, %447 : vector<8x256xf32>
      %449 = arith.addf %443, %448 : vector<8x256xf32>
      %c7_315 = arith.constant 7 : index
      %c0_316 = arith.constant 0 : index
      %c0_317 = arith.constant 0 : index
      %450 = vector.load %arg2[%c7_315, %c0_316, %c0_317] : memref<9x8x256xf32, #tpu.memory_space<vmem>>, vector<1x8x256xf32>
      %451 = vector.shape_cast %450 : vector<1x8x256xf32> to vector<8x256xf32>
      %c7_318 = arith.constant 7 : index
      %c4_319 = arith.constant 4 : index
      %452 = memref.load %arg3[%c7_318, %c4_319] : memref<9x8xf32, #tpu.memory_space<smem>>
      %453 = vector.broadcast %452 : f32 to vector<8x256xf32>
      %454 = arith.mulf %451, %453 : vector<8x256xf32>
      %455 = arith.addf %449, %454 : vector<8x256xf32>
      %c8_320 = arith.constant 8 : index
      %c0_321 = arith.constant 0 : index
      %c0_322 = arith.constant 0 : index
      %456 = vector.load %arg2[%c8_320, %c0_321, %c0_322] : memref<9x8x256xf32, #tpu.memory_space<vmem>>, vector<1x8x256xf32>
      %457 = vector.shape_cast %456 : vector<1x8x256xf32> to vector<8x256xf32>
      %c8_323 = arith.constant 8 : index
      %c4_324 = arith.constant 4 : index
      %458 = memref.load %arg3[%c8_323, %c4_324] : memref<9x8xf32, #tpu.memory_space<smem>>
      %459 = vector.broadcast %458 : f32 to vector<8x256xf32>
      %460 = arith.mulf %457, %459 : vector<8x256xf32>
      %461 = arith.addf %455, %460 : vector<8x256xf32>
      %c4_325 = arith.constant 4 : index
      %462 = memref.load %arg4[%c4_325] : memref<8xf32, #tpu.memory_space<smem>>
      %463 = vector.broadcast %462 : f32 to vector<8x256xf32>
      %464 = arith.addf %461, %463 : vector<8x256xf32>
      %cst_326 = arith.constant 0.000000e+00 : f32
      %465 = vector.broadcast %cst_326 : f32 to vector<8x256xf32>
      %466 = arith.maximumf %464, %465 : vector<8x256xf32>
      %cst_327 = arith.constant dense<0.000000e+00> : vector<8xf32>
      %467 = vector.multi_reduction <add>, %466, %cst_327 [1] : vector<8x256xf32> to vector<8xf32>
      %468 = vector.shape_cast %467 : vector<8xf32> to vector<8x1xf32>
      %cst_328 = arith.constant 3.906250e-03 : f32
      %469 = vector.broadcast %cst_328 : f32 to vector<8x1xf32>
      %470 = arith.mulf %468, %469 : vector<8x1xf32>
      %c4_329 = arith.constant 4 : index
      %c0_330 = arith.constant 0 : index
      %471 = vector.load %arg5[%c4_329, %c0_330] : memref<8x128xf32, #tpu.memory_space<vmem>>, vector<1x128xf32>
      %472 = vector.broadcast %470 : vector<8x1xf32> to vector<8x128xf32>
      %473 = vector.broadcast %471 : vector<1x128xf32> to vector<8x128xf32>
      %474 = arith.mulf %472, %473 : vector<8x128xf32>
      %475 = arith.addf %408, %474 : vector<8x128xf32>
      %c0_331 = arith.constant 0 : index
      %c0_332 = arith.constant 0 : index
      %c0_333 = arith.constant 0 : index
      %476 = vector.load %arg2[%c0_331, %c0_332, %c0_333] : memref<9x8x256xf32, #tpu.memory_space<vmem>>, vector<1x8x256xf32>
      %477 = vector.shape_cast %476 : vector<1x8x256xf32> to vector<8x256xf32>
      %c0_334 = arith.constant 0 : index
      %c5_335 = arith.constant 5 : index
      %478 = memref.load %arg3[%c0_334, %c5_335] : memref<9x8xf32, #tpu.memory_space<smem>>
      %479 = vector.broadcast %478 : f32 to vector<8x256xf32>
      %480 = arith.mulf %477, %479 : vector<8x256xf32>
      %c1_336 = arith.constant 1 : index
      %c0_337 = arith.constant 0 : index
      %c0_338 = arith.constant 0 : index
      %481 = vector.load %arg2[%c1_336, %c0_337, %c0_338] : memref<9x8x256xf32, #tpu.memory_space<vmem>>, vector<1x8x256xf32>
      %482 = vector.shape_cast %481 : vector<1x8x256xf32> to vector<8x256xf32>
      %c1_339 = arith.constant 1 : index
      %c5_340 = arith.constant 5 : index
      %483 = memref.load %arg3[%c1_339, %c5_340] : memref<9x8xf32, #tpu.memory_space<smem>>
      %484 = vector.broadcast %483 : f32 to vector<8x256xf32>
      %485 = arith.mulf %482, %484 : vector<8x256xf32>
      %486 = arith.addf %480, %485 : vector<8x256xf32>
      %c2_341 = arith.constant 2 : index
      %c0_342 = arith.constant 0 : index
      %c0_343 = arith.constant 0 : index
      %487 = vector.load %arg2[%c2_341, %c0_342, %c0_343] : memref<9x8x256xf32, #tpu.memory_space<vmem>>, vector<1x8x256xf32>
      %488 = vector.shape_cast %487 : vector<1x8x256xf32> to vector<8x256xf32>
      %c2_344 = arith.constant 2 : index
      %c5_345 = arith.constant 5 : index
      %489 = memref.load %arg3[%c2_344, %c5_345] : memref<9x8xf32, #tpu.memory_space<smem>>
      %490 = vector.broadcast %489 : f32 to vector<8x256xf32>
      %491 = arith.mulf %488, %490 : vector<8x256xf32>
      %492 = arith.addf %486, %491 : vector<8x256xf32>
      %c3_346 = arith.constant 3 : index
      %c0_347 = arith.constant 0 : index
      %c0_348 = arith.constant 0 : index
      %493 = vector.load %arg2[%c3_346, %c0_347, %c0_348] : memref<9x8x256xf32, #tpu.memory_space<vmem>>, vector<1x8x256xf32>
      %494 = vector.shape_cast %493 : vector<1x8x256xf32> to vector<8x256xf32>
      %c3_349 = arith.constant 3 : index
      %c5_350 = arith.constant 5 : index
      %495 = memref.load %arg3[%c3_349, %c5_350] : memref<9x8xf32, #tpu.memory_space<smem>>
      %496 = vector.broadcast %495 : f32 to vector<8x256xf32>
      %497 = arith.mulf %494, %496 : vector<8x256xf32>
      %498 = arith.addf %492, %497 : vector<8x256xf32>
      %c4_351 = arith.constant 4 : index
      %c0_352 = arith.constant 0 : index
      %c0_353 = arith.constant 0 : index
      %499 = vector.load %arg2[%c4_351, %c0_352, %c0_353] : memref<9x8x256xf32, #tpu.memory_space<vmem>>, vector<1x8x256xf32>
      %500 = vector.shape_cast %499 : vector<1x8x256xf32> to vector<8x256xf32>
      %c4_354 = arith.constant 4 : index
      %c5_355 = arith.constant 5 : index
      %501 = memref.load %arg3[%c4_354, %c5_355] : memref<9x8xf32, #tpu.memory_space<smem>>
      %502 = vector.broadcast %501 : f32 to vector<8x256xf32>
      %503 = arith.mulf %500, %502 : vector<8x256xf32>
      %504 = arith.addf %498, %503 : vector<8x256xf32>
      %c5_356 = arith.constant 5 : index
      %c0_357 = arith.constant 0 : index
      %c0_358 = arith.constant 0 : index
      %505 = vector.load %arg2[%c5_356, %c0_357, %c0_358] : memref<9x8x256xf32, #tpu.memory_space<vmem>>, vector<1x8x256xf32>
      %506 = vector.shape_cast %505 : vector<1x8x256xf32> to vector<8x256xf32>
      %c5_359 = arith.constant 5 : index
      %c5_360 = arith.constant 5 : index
      %507 = memref.load %arg3[%c5_359, %c5_360] : memref<9x8xf32, #tpu.memory_space<smem>>
      %508 = vector.broadcast %507 : f32 to vector<8x256xf32>
      %509 = arith.mulf %506, %508 : vector<8x256xf32>
      %510 = arith.addf %504, %509 : vector<8x256xf32>
      %c6_361 = arith.constant 6 : index
      %c0_362 = arith.constant 0 : index
      %c0_363 = arith.constant 0 : index
      %511 = vector.load %arg2[%c6_361, %c0_362, %c0_363] : memref<9x8x256xf32, #tpu.memory_space<vmem>>, vector<1x8x256xf32>
      %512 = vector.shape_cast %511 : vector<1x8x256xf32> to vector<8x256xf32>
      %c6_364 = arith.constant 6 : index
      %c5_365 = arith.constant 5 : index
      %513 = memref.load %arg3[%c6_364, %c5_365] : memref<9x8xf32, #tpu.memory_space<smem>>
      %514 = vector.broadcast %513 : f32 to vector<8x256xf32>
      %515 = arith.mulf %512, %514 : vector<8x256xf32>
      %516 = arith.addf %510, %515 : vector<8x256xf32>
      %c7_366 = arith.constant 7 : index
      %c0_367 = arith.constant 0 : index
      %c0_368 = arith.constant 0 : index
      %517 = vector.load %arg2[%c7_366, %c0_367, %c0_368] : memref<9x8x256xf32, #tpu.memory_space<vmem>>, vector<1x8x256xf32>
      %518 = vector.shape_cast %517 : vector<1x8x256xf32> to vector<8x256xf32>
      %c7_369 = arith.constant 7 : index
      %c5_370 = arith.constant 5 : index
      %519 = memref.load %arg3[%c7_369, %c5_370] : memref<9x8xf32, #tpu.memory_space<smem>>
      %520 = vector.broadcast %519 : f32 to vector<8x256xf32>
      %521 = arith.mulf %518, %520 : vector<8x256xf32>
      %522 = arith.addf %516, %521 : vector<8x256xf32>
      %c8_371 = arith.constant 8 : index
      %c0_372 = arith.constant 0 : index
      %c0_373 = arith.constant 0 : index
      %523 = vector.load %arg2[%c8_371, %c0_372, %c0_373] : memref<9x8x256xf32, #tpu.memory_space<vmem>>, vector<1x8x256xf32>
      %524 = vector.shape_cast %523 : vector<1x8x256xf32> to vector<8x256xf32>
      %c8_374 = arith.constant 8 : index
      %c5_375 = arith.constant 5 : index
      %525 = memref.load %arg3[%c8_374, %c5_375] : memref<9x8xf32, #tpu.memory_space<smem>>
      %526 = vector.broadcast %525 : f32 to vector<8x256xf32>
      %527 = arith.mulf %524, %526 : vector<8x256xf32>
      %528 = arith.addf %522, %527 : vector<8x256xf32>
      %c5_376 = arith.constant 5 : index
      %529 = memref.load %arg4[%c5_376] : memref<8xf32, #tpu.memory_space<smem>>
      %530 = vector.broadcast %529 : f32 to vector<8x256xf32>
      %531 = arith.addf %528, %530 : vector<8x256xf32>
      %cst_377 = arith.constant 0.000000e+00 : f32
      %532 = vector.broadcast %cst_377 : f32 to vector<8x256xf32>
      %533 = arith.maximumf %531, %532 : vector<8x256xf32>
      %cst_378 = arith.constant dense<0.000000e+00> : vector<8xf32>
      %534 = vector.multi_reduction <add>, %533, %cst_378 [1] : vector<8x256xf32> to vector<8xf32>
      %535 = vector.shape_cast %534 : vector<8xf32> to vector<8x1xf32>
      %cst_379 = arith.constant 3.906250e-03 : f32
      %536 = vector.broadcast %cst_379 : f32 to vector<8x1xf32>
      %537 = arith.mulf %535, %536 : vector<8x1xf32>
      %c5_380 = arith.constant 5 : index
      %c0_381 = arith.constant 0 : index
      %538 = vector.load %arg5[%c5_380, %c0_381] : memref<8x128xf32, #tpu.memory_space<vmem>>, vector<1x128xf32>
      %539 = vector.broadcast %537 : vector<8x1xf32> to vector<8x128xf32>
      %540 = vector.broadcast %538 : vector<1x128xf32> to vector<8x128xf32>
      %541 = arith.mulf %539, %540 : vector<8x128xf32>
      %542 = arith.addf %475, %541 : vector<8x128xf32>
      %c0_382 = arith.constant 0 : index
      %c0_383 = arith.constant 0 : index
      %c0_384 = arith.constant 0 : index
      %543 = vector.load %arg2[%c0_382, %c0_383, %c0_384] : memref<9x8x256xf32, #tpu.memory_space<vmem>>, vector<1x8x256xf32>
      %544 = vector.shape_cast %543 : vector<1x8x256xf32> to vector<8x256xf32>
      %c0_385 = arith.constant 0 : index
      %c6_386 = arith.constant 6 : index
      %545 = memref.load %arg3[%c0_385, %c6_386] : memref<9x8xf32, #tpu.memory_space<smem>>
      %546 = vector.broadcast %545 : f32 to vector<8x256xf32>
      %547 = arith.mulf %544, %546 : vector<8x256xf32>
      %c1_387 = arith.constant 1 : index
      %c0_388 = arith.constant 0 : index
      %c0_389 = arith.constant 0 : index
      %548 = vector.load %arg2[%c1_387, %c0_388, %c0_389] : memref<9x8x256xf32, #tpu.memory_space<vmem>>, vector<1x8x256xf32>
      %549 = vector.shape_cast %548 : vector<1x8x256xf32> to vector<8x256xf32>
      %c1_390 = arith.constant 1 : index
      %c6_391 = arith.constant 6 : index
      %550 = memref.load %arg3[%c1_390, %c6_391] : memref<9x8xf32, #tpu.memory_space<smem>>
      %551 = vector.broadcast %550 : f32 to vector<8x256xf32>
      %552 = arith.mulf %549, %551 : vector<8x256xf32>
      %553 = arith.addf %547, %552 : vector<8x256xf32>
      %c2_392 = arith.constant 2 : index
      %c0_393 = arith.constant 0 : index
      %c0_394 = arith.constant 0 : index
      %554 = vector.load %arg2[%c2_392, %c0_393, %c0_394] : memref<9x8x256xf32, #tpu.memory_space<vmem>>, vector<1x8x256xf32>
      %555 = vector.shape_cast %554 : vector<1x8x256xf32> to vector<8x256xf32>
      %c2_395 = arith.constant 2 : index
      %c6_396 = arith.constant 6 : index
      %556 = memref.load %arg3[%c2_395, %c6_396] : memref<9x8xf32, #tpu.memory_space<smem>>
      %557 = vector.broadcast %556 : f32 to vector<8x256xf32>
      %558 = arith.mulf %555, %557 : vector<8x256xf32>
      %559 = arith.addf %553, %558 : vector<8x256xf32>
      %c3_397 = arith.constant 3 : index
      %c0_398 = arith.constant 0 : index
      %c0_399 = arith.constant 0 : index
      %560 = vector.load %arg2[%c3_397, %c0_398, %c0_399] : memref<9x8x256xf32, #tpu.memory_space<vmem>>, vector<1x8x256xf32>
      %561 = vector.shape_cast %560 : vector<1x8x256xf32> to vector<8x256xf32>
      %c3_400 = arith.constant 3 : index
      %c6_401 = arith.constant 6 : index
      %562 = memref.load %arg3[%c3_400, %c6_401] : memref<9x8xf32, #tpu.memory_space<smem>>
      %563 = vector.broadcast %562 : f32 to vector<8x256xf32>
      %564 = arith.mulf %561, %563 : vector<8x256xf32>
      %565 = arith.addf %559, %564 : vector<8x256xf32>
      %c4_402 = arith.constant 4 : index
      %c0_403 = arith.constant 0 : index
      %c0_404 = arith.constant 0 : index
      %566 = vector.load %arg2[%c4_402, %c0_403, %c0_404] : memref<9x8x256xf32, #tpu.memory_space<vmem>>, vector<1x8x256xf32>
      %567 = vector.shape_cast %566 : vector<1x8x256xf32> to vector<8x256xf32>
      %c4_405 = arith.constant 4 : index
      %c6_406 = arith.constant 6 : index
      %568 = memref.load %arg3[%c4_405, %c6_406] : memref<9x8xf32, #tpu.memory_space<smem>>
      %569 = vector.broadcast %568 : f32 to vector<8x256xf32>
      %570 = arith.mulf %567, %569 : vector<8x256xf32>
      %571 = arith.addf %565, %570 : vector<8x256xf32>
      %c5_407 = arith.constant 5 : index
      %c0_408 = arith.constant 0 : index
      %c0_409 = arith.constant 0 : index
      %572 = vector.load %arg2[%c5_407, %c0_408, %c0_409] : memref<9x8x256xf32, #tpu.memory_space<vmem>>, vector<1x8x256xf32>
      %573 = vector.shape_cast %572 : vector<1x8x256xf32> to vector<8x256xf32>
      %c5_410 = arith.constant 5 : index
      %c6_411 = arith.constant 6 : index
      %574 = memref.load %arg3[%c5_410, %c6_411] : memref<9x8xf32, #tpu.memory_space<smem>>
      %575 = vector.broadcast %574 : f32 to vector<8x256xf32>
      %576 = arith.mulf %573, %575 : vector<8x256xf32>
      %577 = arith.addf %571, %576 : vector<8x256xf32>
      %c6_412 = arith.constant 6 : index
      %c0_413 = arith.constant 0 : index
      %c0_414 = arith.constant 0 : index
      %578 = vector.load %arg2[%c6_412, %c0_413, %c0_414] : memref<9x8x256xf32, #tpu.memory_space<vmem>>, vector<1x8x256xf32>
      %579 = vector.shape_cast %578 : vector<1x8x256xf32> to vector<8x256xf32>
      %c6_415 = arith.constant 6 : index
      %c6_416 = arith.constant 6 : index
      %580 = memref.load %arg3[%c6_415, %c6_416] : memref<9x8xf32, #tpu.memory_space<smem>>
      %581 = vector.broadcast %580 : f32 to vector<8x256xf32>
      %582 = arith.mulf %579, %581 : vector<8x256xf32>
      %583 = arith.addf %577, %582 : vector<8x256xf32>
      %c7_417 = arith.constant 7 : index
      %c0_418 = arith.constant 0 : index
      %c0_419 = arith.constant 0 : index
      %584 = vector.load %arg2[%c7_417, %c0_418, %c0_419] : memref<9x8x256xf32, #tpu.memory_space<vmem>>, vector<1x8x256xf32>
      %585 = vector.shape_cast %584 : vector<1x8x256xf32> to vector<8x256xf32>
      %c7_420 = arith.constant 7 : index
      %c6_421 = arith.constant 6 : index
      %586 = memref.load %arg3[%c7_420, %c6_421] : memref<9x8xf32, #tpu.memory_space<smem>>
      %587 = vector.broadcast %586 : f32 to vector<8x256xf32>
      %588 = arith.mulf %585, %587 : vector<8x256xf32>
      %589 = arith.addf %583, %588 : vector<8x256xf32>
      %c8_422 = arith.constant 8 : index
      %c0_423 = arith.constant 0 : index
      %c0_424 = arith.constant 0 : index
      %590 = vector.load %arg2[%c8_422, %c0_423, %c0_424] : memref<9x8x256xf32, #tpu.memory_space<vmem>>, vector<1x8x256xf32>
      %591 = vector.shape_cast %590 : vector<1x8x256xf32> to vector<8x256xf32>
      %c8_425 = arith.constant 8 : index
      %c6_426 = arith.constant 6 : index
      %592 = memref.load %arg3[%c8_425, %c6_426] : memref<9x8xf32, #tpu.memory_space<smem>>
      %593 = vector.broadcast %592 : f32 to vector<8x256xf32>
      %594 = arith.mulf %591, %593 : vector<8x256xf32>
      %595 = arith.addf %589, %594 : vector<8x256xf32>
      %c6_427 = arith.constant 6 : index
      %596 = memref.load %arg4[%c6_427] : memref<8xf32, #tpu.memory_space<smem>>
      %597 = vector.broadcast %596 : f32 to vector<8x256xf32>
      %598 = arith.addf %595, %597 : vector<8x256xf32>
      %cst_428 = arith.constant 0.000000e+00 : f32
      %599 = vector.broadcast %cst_428 : f32 to vector<8x256xf32>
      %600 = arith.maximumf %598, %599 : vector<8x256xf32>
      %cst_429 = arith.constant dense<0.000000e+00> : vector<8xf32>
      %601 = vector.multi_reduction <add>, %600, %cst_429 [1] : vector<8x256xf32> to vector<8xf32>
      %602 = vector.shape_cast %601 : vector<8xf32> to vector<8x1xf32>
      %cst_430 = arith.constant 3.906250e-03 : f32
      %603 = vector.broadcast %cst_430 : f32 to vector<8x1xf32>
      %604 = arith.mulf %602, %603 : vector<8x1xf32>
      %c6_431 = arith.constant 6 : index
      %c0_432 = arith.constant 0 : index
      %605 = vector.load %arg5[%c6_431, %c0_432] : memref<8x128xf32, #tpu.memory_space<vmem>>, vector<1x128xf32>
      %606 = vector.broadcast %604 : vector<8x1xf32> to vector<8x128xf32>
      %607 = vector.broadcast %605 : vector<1x128xf32> to vector<8x128xf32>
      %608 = arith.mulf %606, %607 : vector<8x128xf32>
      %609 = arith.addf %542, %608 : vector<8x128xf32>
      %c0_433 = arith.constant 0 : index
      %c0_434 = arith.constant 0 : index
      %c0_435 = arith.constant 0 : index
      %610 = vector.load %arg2[%c0_433, %c0_434, %c0_435] : memref<9x8x256xf32, #tpu.memory_space<vmem>>, vector<1x8x256xf32>
      %611 = vector.shape_cast %610 : vector<1x8x256xf32> to vector<8x256xf32>
      %c0_436 = arith.constant 0 : index
      %c7_437 = arith.constant 7 : index
      %612 = memref.load %arg3[%c0_436, %c7_437] : memref<9x8xf32, #tpu.memory_space<smem>>
      %613 = vector.broadcast %612 : f32 to vector<8x256xf32>
      %614 = arith.mulf %611, %613 : vector<8x256xf32>
      %c1_438 = arith.constant 1 : index
      %c0_439 = arith.constant 0 : index
      %c0_440 = arith.constant 0 : index
      %615 = vector.load %arg2[%c1_438, %c0_439, %c0_440] : memref<9x8x256xf32, #tpu.memory_space<vmem>>, vector<1x8x256xf32>
      %616 = vector.shape_cast %615 : vector<1x8x256xf32> to vector<8x256xf32>
      %c1_441 = arith.constant 1 : index
      %c7_442 = arith.constant 7 : index
      %617 = memref.load %arg3[%c1_441, %c7_442] : memref<9x8xf32, #tpu.memory_space<smem>>
      %618 = vector.broadcast %617 : f32 to vector<8x256xf32>
      %619 = arith.mulf %616, %618 : vector<8x256xf32>
      %620 = arith.addf %614, %619 : vector<8x256xf32>
      %c2_443 = arith.constant 2 : index
      %c0_444 = arith.constant 0 : index
      %c0_445 = arith.constant 0 : index
      %621 = vector.load %arg2[%c2_443, %c0_444, %c0_445] : memref<9x8x256xf32, #tpu.memory_space<vmem>>, vector<1x8x256xf32>
      %622 = vector.shape_cast %621 : vector<1x8x256xf32> to vector<8x256xf32>
      %c2_446 = arith.constant 2 : index
      %c7_447 = arith.constant 7 : index
      %623 = memref.load %arg3[%c2_446, %c7_447] : memref<9x8xf32, #tpu.memory_space<smem>>
      %624 = vector.broadcast %623 : f32 to vector<8x256xf32>
      %625 = arith.mulf %622, %624 : vector<8x256xf32>
      %626 = arith.addf %620, %625 : vector<8x256xf32>
      %c3_448 = arith.constant 3 : index
      %c0_449 = arith.constant 0 : index
      %c0_450 = arith.constant 0 : index
      %627 = vector.load %arg2[%c3_448, %c0_449, %c0_450] : memref<9x8x256xf32, #tpu.memory_space<vmem>>, vector<1x8x256xf32>
      %628 = vector.shape_cast %627 : vector<1x8x256xf32> to vector<8x256xf32>
      %c3_451 = arith.constant 3 : index
      %c7_452 = arith.constant 7 : index
      %629 = memref.load %arg3[%c3_451, %c7_452] : memref<9x8xf32, #tpu.memory_space<smem>>
      %630 = vector.broadcast %629 : f32 to vector<8x256xf32>
      %631 = arith.mulf %628, %630 : vector<8x256xf32>
      %632 = arith.addf %626, %631 : vector<8x256xf32>
      %c4_453 = arith.constant 4 : index
      %c0_454 = arith.constant 0 : index
      %c0_455 = arith.constant 0 : index
      %633 = vector.load %arg2[%c4_453, %c0_454, %c0_455] : memref<9x8x256xf32, #tpu.memory_space<vmem>>, vector<1x8x256xf32>
      %634 = vector.shape_cast %633 : vector<1x8x256xf32> to vector<8x256xf32>
      %c4_456 = arith.constant 4 : index
      %c7_457 = arith.constant 7 : index
      %635 = memref.load %arg3[%c4_456, %c7_457] : memref<9x8xf32, #tpu.memory_space<smem>>
      %636 = vector.broadcast %635 : f32 to vector<8x256xf32>
      %637 = arith.mulf %634, %636 : vector<8x256xf32>
      %638 = arith.addf %632, %637 : vector<8x256xf32>
      %c5_458 = arith.constant 5 : index
      %c0_459 = arith.constant 0 : index
      %c0_460 = arith.constant 0 : index
      %639 = vector.load %arg2[%c5_458, %c0_459, %c0_460] : memref<9x8x256xf32, #tpu.memory_space<vmem>>, vector<1x8x256xf32>
      %640 = vector.shape_cast %639 : vector<1x8x256xf32> to vector<8x256xf32>
      %c5_461 = arith.constant 5 : index
      %c7_462 = arith.constant 7 : index
      %641 = memref.load %arg3[%c5_461, %c7_462] : memref<9x8xf32, #tpu.memory_space<smem>>
      %642 = vector.broadcast %641 : f32 to vector<8x256xf32>
      %643 = arith.mulf %640, %642 : vector<8x256xf32>
      %644 = arith.addf %638, %643 : vector<8x256xf32>
      %c6_463 = arith.constant 6 : index
      %c0_464 = arith.constant 0 : index
      %c0_465 = arith.constant 0 : index
      %645 = vector.load %arg2[%c6_463, %c0_464, %c0_465] : memref<9x8x256xf32, #tpu.memory_space<vmem>>, vector<1x8x256xf32>
      %646 = vector.shape_cast %645 : vector<1x8x256xf32> to vector<8x256xf32>
      %c6_466 = arith.constant 6 : index
      %c7_467 = arith.constant 7 : index
      %647 = memref.load %arg3[%c6_466, %c7_467] : memref<9x8xf32, #tpu.memory_space<smem>>
      %648 = vector.broadcast %647 : f32 to vector<8x256xf32>
      %649 = arith.mulf %646, %648 : vector<8x256xf32>
      %650 = arith.addf %644, %649 : vector<8x256xf32>
      %c7_468 = arith.constant 7 : index
      %c0_469 = arith.constant 0 : index
      %c0_470 = arith.constant 0 : index
      %651 = vector.load %arg2[%c7_468, %c0_469, %c0_470] : memref<9x8x256xf32, #tpu.memory_space<vmem>>, vector<1x8x256xf32>
      %652 = vector.shape_cast %651 : vector<1x8x256xf32> to vector<8x256xf32>
      %c7_471 = arith.constant 7 : index
      %c7_472 = arith.constant 7 : index
      %653 = memref.load %arg3[%c7_471, %c7_472] : memref<9x8xf32, #tpu.memory_space<smem>>
      %654 = vector.broadcast %653 : f32 to vector<8x256xf32>
      %655 = arith.mulf %652, %654 : vector<8x256xf32>
      %656 = arith.addf %650, %655 : vector<8x256xf32>
      %c8_473 = arith.constant 8 : index
      %c0_474 = arith.constant 0 : index
      %c0_475 = arith.constant 0 : index
      %657 = vector.load %arg2[%c8_473, %c0_474, %c0_475] : memref<9x8x256xf32, #tpu.memory_space<vmem>>, vector<1x8x256xf32>
      %658 = vector.shape_cast %657 : vector<1x8x256xf32> to vector<8x256xf32>
      %c8_476 = arith.constant 8 : index
      %c7_477 = arith.constant 7 : index
      %659 = memref.load %arg3[%c8_476, %c7_477] : memref<9x8xf32, #tpu.memory_space<smem>>
      %660 = vector.broadcast %659 : f32 to vector<8x256xf32>
      %661 = arith.mulf %658, %660 : vector<8x256xf32>
      %662 = arith.addf %656, %661 : vector<8x256xf32>
      %c7_478 = arith.constant 7 : index
      %663 = memref.load %arg4[%c7_478] : memref<8xf32, #tpu.memory_space<smem>>
      %664 = vector.broadcast %663 : f32 to vector<8x256xf32>
      %665 = arith.addf %662, %664 : vector<8x256xf32>
      %cst_479 = arith.constant 0.000000e+00 : f32
      %666 = vector.broadcast %cst_479 : f32 to vector<8x256xf32>
      %667 = arith.maximumf %665, %666 : vector<8x256xf32>
      %cst_480 = arith.constant dense<0.000000e+00> : vector<8xf32>
      %668 = vector.multi_reduction <add>, %667, %cst_480 [1] : vector<8x256xf32> to vector<8xf32>
      %669 = vector.shape_cast %668 : vector<8xf32> to vector<8x1xf32>
      %cst_481 = arith.constant 3.906250e-03 : f32
      %670 = vector.broadcast %cst_481 : f32 to vector<8x1xf32>
      %671 = arith.mulf %669, %670 : vector<8x1xf32>
      %c7_482 = arith.constant 7 : index
      %c0_483 = arith.constant 0 : index
      %672 = vector.load %arg5[%c7_482, %c0_483] : memref<8x128xf32, #tpu.memory_space<vmem>>, vector<1x128xf32>
      %673 = vector.broadcast %671 : vector<8x1xf32> to vector<8x128xf32>
      %674 = vector.broadcast %672 : vector<1x128xf32> to vector<8x128xf32>
      %675 = arith.mulf %673, %674 : vector<8x128xf32>
      %676 = arith.addf %609, %675 : vector<8x128xf32>
      %c0_484 = arith.constant 0 : index
      %c0_485 = arith.constant 0 : index
      %677 = vector.load %arg6[%c0_484, %c0_485] : memref<1x128xf32, #tpu.memory_space<vmem>>, vector<1x128xf32>
      %678 = vector.broadcast %677 : vector<1x128xf32> to vector<8x128xf32>
      %679 = arith.addf %676, %678 : vector<8x128xf32>
      %c0_486 = arith.constant 0 : index
      %c0_487 = arith.constant 0 : index
      %680 = vector.load %arg26[%c0_486, %c0_487] : memref<8x128xf32, #tpu.memory_space<vmem>>, vector<8x128xf32>
      tpu.vector_store %arg26[%c0_486, %c0_487], %679 {strides = array<i32>} : memref<8x128xf32, #tpu.memory_space<vmem>>, vector<8x128xf32>,
    } else {
    }
    %3 = tpu.iota {dimensions = array<i32: 0>} : vector<8x8xi32>
    %4 = tpu.iota {dimensions = array<i32: 1>} : vector<8x8xi32>
    %5 = arith.cmpi sgt, %4, %3 : vector<8x8xi32>
    %6 = vector.shape_cast %5 : vector<8x8xi1> to vector<1x8x8xi1>
    %c0 = arith.constant 0 : index
    %c0_1 = arith.constant 0 : index
    %7 = vector.load %arg26[%c0, %c0_1] : memref<8x128xf32, #tpu.memory_space<vmem>>, vector<8x128xf32>
    %8 = arith.truncf %7 : vector<8x128xf32> to vector<8x128xbf16>
    %9 = vector.shape_cast %8 : vector<8x128xbf16> to vector<1x8x128xbf16>
    %10 = vector.shape_cast %9 : vector<1x8x128xbf16> to vector<1x8x128xbf16>
    %11 = vector.broadcast %10 : vector<1x8x128xbf16> to vector<2x8x128xbf16>
    %c0_2 = arith.constant 0 : index
    %c0_3 = arith.constant 0 : index
    %c0_4 = arith.constant 0 : index
    %c0_5 = arith.constant 0 : index
    %12 = vector.load %arg7[%c0_2, %c0_3, %c0_4, %c0_5] : memref<1x2x128x128xbf16, #tpu.memory_space<vmem>>, vector<1x2x128x128xbf16>
    %13 = vector.shape_cast %12 : vector<1x2x128x128xbf16> to vector<2x128x128xbf16>
    "tpu.trace_start"() <{level = 10 : i32, message = "hld,hdk->hlk"}> : () -> ()
    %cst = arith.constant dense<0.000000e+00> : vector<2x8x128xf32>
    %14 = tpu.matmul %11, %13, %cst {dimension_numbers = #tpu.dot_dimension_numbers<[2], [1], [1], [2], [0, 0, 0, 1, 1, 2], [0], [0]>} : vector<2x8x128xbf16>, vector<2x128x128xbf16>, vector<2x8x128xf32> -> vector<2x8x128xf32>
    "tpu.trace_stop"() : () -> ()
    %c0_6 = arith.constant 0 : index
    %c0_7 = arith.constant 0 : index
    %c0_8 = arith.constant 0 : index
    %c0_9 = arith.constant 0 : index
    %15 = vector.load %arg8[%c0_6, %c0_7, %c0_8, %c0_9] : memref<1x2x1x128xf32, #tpu.memory_space<vmem>>, vector<1x2x1x128xf32>
    %16 = vector.shape_cast %15 : vector<1x2x1x128xf32> to vector<2x1x128xf32>
    %17 = vector.broadcast %16 : vector<2x1x128xf32> to vector<2x8x128xf32>
    %18 = arith.addf %14, %17 : vector<2x8x128xf32>
    %c0_10 = arith.constant 0 : index
    %c0_11 = arith.constant 0 : index
    %c0_12 = arith.constant 0 : index
    %c0_13 = arith.constant 0 : index
    %19 = vector.load %arg9[%c0_10, %c0_11, %c0_12, %c0_13] : memref<1x2x128x128xbf16, #tpu.memory_space<vmem>>, vector<1x2x128x128xbf16>
    %20 = vector.shape_cast %19 : vector<1x2x128x128xbf16> to vector<2x128x128xbf16>
    "tpu.trace_start"() <{level = 10 : i32, message = "hld,hdk->hlk"}> : () -> ()
    %cst_14 = arith.constant dense<0.000000e+00> : vector<2x8x128xf32>
    %21 = tpu.matmul %11, %20, %cst_14 {dimension_numbers = #tpu.dot_dimension_numbers<[2], [1], [1], [2], [0, 0, 0, 1, 1, 2], [0], [0]>} : vector<2x8x128xbf16>, vector<2x128x128xbf16>, vector<2x8x128xf32> -> vector<2x8x128xf32>
    "tpu.trace_stop"() : () -> ()
    %c0_15 = arith.constant 0 : index
    %c0_16 = arith.constant 0 : index
    %c0_17 = arith.constant 0 : index
    %c0_18 = arith.constant 0 : index
    %22 = vector.load %arg10[%c0_15, %c0_16, %c0_17, %c0_18] : memref<1x2x1x128xf32, #tpu.memory_space<vmem>>, vector<1x2x1x128xf32>
    %23 = vector.shape_cast %22 : vector<1x2x1x128xf32> to vector<2x1x128xf32>
    %24 = vector.broadcast %23 : vector<2x1x128xf32> to vector<2x8x128xf32>
    %25 = arith.addf %21, %24 : vector<2x8x128xf32>
    %c0_19 = arith.constant 0 : index
    %c0_20 = arith.constant 0 : index
    %c0_21 = arith.constant 0 : index
    %c0_22 = arith.constant 0 : index
    %26 = vector.load %arg11[%c0_19, %c0_20, %c0_21, %c0_22] : memref<1x2x128x128xbf16, #tpu.memory_space<vmem>>, vector<1x2x128x128xbf16>
    %27 = vector.shape_cast %26 : vector<1x2x128x128xbf16> to vector<2x128x128xbf16>
    "tpu.trace_start"() <{level = 10 : i32, message = "hld,hdk->hlk"}> : () -> ()
    %cst_23 = arith.constant dense<0.000000e+00> : vector<2x8x128xf32>
    %28 = tpu.matmul %11, %27, %cst_23 {dimension_numbers = #tpu.dot_dimension_numbers<[2], [1], [1], [2], [0, 0, 0, 1, 1, 2], [0], [0]>} : vector<2x8x128xbf16>, vector<2x128x128xbf16>, vector<2x8x128xf32> -> vector<2x8x128xf32>
    "tpu.trace_stop"() : () -> ()
    %c0_24 = arith.constant 0 : index
    %c0_25 = arith.constant 0 : index
    %c0_26 = arith.constant 0 : index
    %c0_27 = arith.constant 0 : index
    %29 = vector.load %arg12[%c0_24, %c0_25, %c0_26, %c0_27] : memref<1x2x1x128xf32, #tpu.memory_space<vmem>>, vector<1x2x1x128xf32>
    %30 = vector.shape_cast %29 : vector<1x2x1x128xf32> to vector<2x1x128xf32>
    %31 = vector.broadcast %30 : vector<2x1x128xf32> to vector<2x8x128xf32>
    %32 = arith.addf %28, %31 : vector<2x8x128xf32>
    %33 = arith.truncf %18 : vector<2x8x128xf32> to vector<2x8x128xbf16>
    %34 = arith.truncf %25 : vector<2x8x128xf32> to vector<2x8x128xbf16>
    "tpu.trace_start"() <{level = 10 : i32, message = "hqd,hkd->hqk"}> : () -> ()
    %cst_28 = arith.constant dense<0.000000e+00> : vector<2x8x8xf32>
    %35 = tpu.matmul %33, %34, %cst_28 {dimension_numbers = #tpu.dot_dimension_numbers<[2], [2], [1], [1], [0, 0, 0, 1, 1, 1], [0], [0]>} : vector<2x8x128xbf16>, vector<2x8x128xbf16>, vector<2x8x8xf32> -> vector<2x8x8xf32>
    "tpu.trace_stop"() : () -> ()
    %cst_29 = arith.constant 2.500000e-01 : f32
    %36 = vector.broadcast %cst_29 : f32 to vector<2x8x8xf32>
    %37 = arith.mulf %35, %36 : vector<2x8x8xf32>
    %cst_30 = arith.constant -1.000000e+30 : f32
    %38 = vector.shape_cast %6 : vector<1x8x8xi1> to vector<1x8x8xi1>
    %39 = vector.broadcast %38 : vector<1x8x8xi1> to vector<2x8x8xi1>
    %40 = vector.broadcast %cst_30 : f32 to vector<2x8x8xf32>
    %41 = arith.select %39, %40, %37 : vector<2x8x8xi1>, vector<2x8x8xf32>
    %cst_31 = arith.constant dense<0xFF800000> : vector<2x8xf32>
    %42 = vector.multi_reduction <maximumf>, %41, %cst_31 [2] : vector<2x8x8xf32> to vector<2x8xf32>
    %43 = vector.shape_cast %42 : vector<2x8xf32> to vector<2x8x1xf32>
    %44 = vector.broadcast %43 : vector<2x8x1xf32> to vector<2x8x8xf32>
    %45 = arith.subf %41, %44 : vector<2x8x8xf32>
    %46 = math.exp %45 : vector<2x8x8xf32>
    %cst_32 = arith.constant dense<0.000000e+00> : vector<2x8xf32>
    %47 = vector.multi_reduction <add>, %46, %cst_32 [2] : vector<2x8x8xf32> to vector<2x8xf32>
    %48 = vector.shape_cast %47 : vector<2x8xf32> to vector<2x8x1xf32>
    %49 = tpu.reciprocal %48 {approx = true} : vector<2x8x1xf32> -> vector<2x8x1xf32>
    %50 = vector.broadcast %49 : vector<2x8x1xf32> to vector<2x8x8xf32>
    %51 = arith.mulf %46, %50 : vector<2x8x8xf32>
    %52 = arith.truncf %51 : vector<2x8x8xf32> to vector<2x8x8xbf16>
    %53 = arith.truncf %32 : vector<2x8x128xf32> to vector<2x8x128xbf16>
    "tpu.trace_start"() <{level = 10 : i32, message = "hqk,hkd->hqd"}> : () -> ()
    %cst_33 = arith.constant dense<0.000000e+00> : vector<2x8x128xf32>
    %54 = tpu.matmul %52, %53, %cst_33 {dimension_numbers = #tpu.dot_dimension_numbers<[2], [1], [1], [2], [0, 0, 0, 1, 1, 2], [0], [0]>} : vector<2x8x8xbf16>, vector<2x8x128xbf16>, vector<2x8x128xf32> -> vector<2x8x128xf32>
    "tpu.trace_stop"() : () -> ()
    %55 = arith.truncf %54 : vector<2x8x128xf32> to vector<2x8x128xbf16>
    %c0_34 = arith.constant 0 : index
    %c0_35 = arith.constant 0 : index
    %c0_36 = arith.constant 0 : index
    %c0_37 = arith.constant 0 : index
    %56 = vector.load %arg13[%c0_34, %c0_35, %c0_36, %c0_37] : memref<1x2x128x128xbf16, #tpu.memory_space<vmem>>, vector<1x2x128x128xbf16>
    %57 = vector.shape_cast %56 : vector<1x2x128x128xbf16> to vector<2x128x128xbf16>
    "tpu.trace_start"() <{level = 10 : i32, message = "hqd,hdm->hqm"}> : () -> ()
    %cst_38 = arith.constant dense<0.000000e+00> : vector<2x8x128xf32>
    %58 = tpu.matmul %55, %57, %cst_38 {dimension_numbers = #tpu.dot_dimension_numbers<[2], [1], [1], [2], [0, 0, 0, 1, 1, 2], [0], [0]>} : vector<2x8x128xbf16>, vector<2x128x128xbf16>, vector<2x8x128xf32> -> vector<2x8x128xf32>
    "tpu.trace_stop"() : () -> ()
    %cst_39 = arith.constant dense<0.000000e+00> : vector<8x128xf32>
    %59 = vector.multi_reduction <add>, %58, %cst_39 [0] : vector<2x8x128xf32> to vector<8x128xf32>
    %c0_40 = arith.constant 0 : index
    %c0_41 = arith.constant 0 : index
    %c0_42 = arith.constant 0 : index
    %60 = vector.load %arg14[%c0_40, %c0_41, %c0_42] : memref<1x1x128xf32, #tpu.memory_space<vmem>>, vector<1x1x128xf32>
    %61 = vector.shape_cast %60 : vector<1x1x128xf32> to vector<1x128xf32>
    %62 = vector.broadcast %61 : vector<1x128xf32> to vector<8x128xf32>
    %63 = arith.addf %59, %62 : vector<8x128xf32>
    %64 = arith.addf %7, %63 : vector<8x128xf32>
    %c0_43 = arith.constant 0 : index
    %c0_44 = arith.constant 0 : index
    %c0_45 = arith.constant 0 : index
    %65 = vector.load %arg15[%c0_43, %c0_44, %c0_45] : memref<1x1x128xf32, #tpu.memory_space<vmem>>, vector<1x1x128xf32>
    %66 = vector.shape_cast %65 : vector<1x1x128xf32> to vector<1x128xf32>
    %c0_46 = arith.constant 0 : index
    %c0_47 = arith.constant 0 : index
    %c0_48 = arith.constant 0 : index
    %67 = vector.load %arg16[%c0_46, %c0_47, %c0_48] : memref<1x1x128xf32, #tpu.memory_space<vmem>>, vector<1x1x128xf32>
    %68 = vector.shape_cast %67 : vector<1x1x128xf32> to vector<1x128xf32>
    %cst_49 = arith.constant dense<0.000000e+00> : vector<8xf32>
    %69 = vector.multi_reduction <add>, %64, %cst_49 [1] : vector<8x128xf32> to vector<8xf32>
    %70 = vector.shape_cast %69 : vector<8xf32> to vector<8x1xf32>
    %cst_50 = arith.constant 3.125000e-02 : f32
    %71 = vector.broadcast %cst_50 : f32 to vector<8x1xf32>
    %72 = arith.mulf %70, %71 : vector<8x1xf32>
    %73 = arith.mulf %64, %64 : vector<8x128xf32>
    %cst_51 = arith.constant dense<0.000000e+00> : vector<8xf32>
    %74 = vector.multi_reduction <add>, %73, %cst_51 [1] : vector<8x128xf32> to vector<8xf32>
    %75 = vector.shape_cast %74 : vector<8xf32> to vector<8x1xf32>
    %cst_52 = arith.constant 3.125000e-02 : f32
    %76 = vector.broadcast %cst_52 : f32 to vector<8x1xf32>
    %77 = arith.mulf %75, %76 : vector<8x1xf32>
    %78 = arith.mulf %72, %72 : vector<8x1xf32>
    %79 = arith.subf %77, %78 : vector<8x1xf32>
    %80 = vector.broadcast %72 : vector<8x1xf32> to vector<8x128xf32>
    %81 = arith.subf %64, %80 : vector<8x128xf32>
    %cst_53 = arith.constant 9.99999974E-6 : f32
    %82 = vector.broadcast %cst_53 : f32 to vector<8x1xf32>
    %83 = arith.addf %79, %82 : vector<8x1xf32>
    %84 = math.rsqrt %83 : vector<8x1xf32>
    %85 = vector.broadcast %84 : vector<8x1xf32> to vector<8x128xf32>
    %86 = arith.mulf %81, %85 : vector<8x128xf32>
    %87 = vector.broadcast %66 : vector<1x128xf32> to vector<8x128xf32>
    %88 = arith.mulf %86, %87 : vector<8x128xf32>
    %89 = vector.broadcast %68 : vector<1x128xf32> to vector<8x128xf32>
    %90 = arith.addf %88, %89 : vector<8x128xf32>
    %91 = arith.truncf %90 : vector<8x128xf32> to vector<8x128xbf16>
    %c0_54 = arith.constant 0 : index
    %c0_55 = arith.constant 0 : index
    %c0_56 = arith.constant 0 : index
    %92 = vector.load %arg17[%c0_54, %c0_55, %c0_56] : memref<1x128x128xbf16, #tpu.memory_space<vmem>>, vector<1x128x128xbf16>
    %93 = vector.shape_cast %92 : vector<1x128x128xbf16> to vector<128x128xbf16>
    %cst_57 = arith.constant dense<0.000000e+00> : vector<8x128xf32>
    %94 = tpu.matmul %91, %93, %cst_57 {dimension_numbers = #tpu.dot_dimension_numbers<[1], [0], [0], [1], [0, 0, 1, 1], [], []>} : vector<8x128xbf16>, vector<128x128xbf16>, vector<8x128xf32> -> vector<8x128xf32>
    %c0_58 = arith.constant 0 : index
    %c0_59 = arith.constant 0 : index
    %c0_60 = arith.constant 0 : index
    %95 = vector.load %arg18[%c0_58, %c0_59, %c0_60] : memref<1x1x128xf32, #tpu.memory_space<vmem>>, vector<1x1x128xf32>
    %96 = vector.shape_cast %95 : vector<1x1x128xf32> to vector<1x128xf32>
    %97 = vector.broadcast %96 : vector<1x128xf32> to vector<8x128xf32>
    %98 = arith.addf %94, %97 : vector<8x128xf32>
    %cst_61 = arith.constant 0.000000e+00 : f32
    %99 = vector.broadcast %cst_61 : f32 to vector<8x128xf32>
    %100 = arith.maximumf %98, %99 : vector<8x128xf32>
    %101 = arith.truncf %100 : vector<8x128xf32> to vector<8x128xbf16>
    %c0_62 = arith.constant 0 : index
    %c0_63 = arith.constant 0 : index
    %c0_64 = arith.constant 0 : index
    %102 = vector.load %arg19[%c0_62, %c0_63, %c0_64] : memref<1x128x128xbf16, #tpu.memory_space<vmem>>, vector<1x128x128xbf16>
    %103 = vector.shape_cast %102 : vector<1x128x128xbf16> to vector<128x128xbf16>
    %cst_65 = arith.constant dense<0.000000e+00> : vector<8x128xf32>
    %104 = tpu.matmul %101, %103, %cst_65 {dimension_numbers = #tpu.dot_dimension_numbers<[1], [0], [0], [1], [0, 0, 1, 1], [], []>} : vector<8x128xbf16>, vector<128x128xbf16>, vector<8x128xf32> -> vector<8x128xf32>
    %c0_66 = arith.constant 0 : index
    %c0_67 = arith.constant 0 : index
    %c0_68 = arith.constant 0 : index
    %105 = vector.load %arg20[%c0_66, %c0_67, %c0_68] : memref<1x1x128xf32, #tpu.memory_space<vmem>>, vector<1x1x128xf32>
    %106 = vector.shape_cast %105 : vector<1x1x128xf32> to vector<1x128xf32>
    %107 = vector.broadcast %106 : vector<1x128xf32> to vector<8x128xf32>
    %108 = arith.addf %104, %107 : vector<8x128xf32>
    %109 = arith.addf %90, %108 : vector<8x128xf32>
    %c0_69 = arith.constant 0 : index
    %c0_70 = arith.constant 0 : index
    %c0_71 = arith.constant 0 : index
    %110 = vector.load %arg21[%c0_69, %c0_70, %c0_71] : memref<1x1x128xf32, #tpu.memory_space<vmem>>, vector<1x1x128xf32>
    %111 = vector.shape_cast %110 : vector<1x1x128xf32> to vector<1x128xf32>
    %c0_72 = arith.constant 0 : index
    %c0_73 = arith.constant 0 : index
    %c0_74 = arith.constant 0 : index
    %112 = vector.load %arg22[%c0_72, %c0_73, %c0_74] : memref<1x1x128xf32, #tpu.memory_space<vmem>>, vector<1x1x128xf32>
    %113 = vector.shape_cast %112 : vector<1x1x128xf32> to vector<1x128xf32>
    %cst_75 = arith.constant dense<0.000000e+00> : vector<8xf32>
    %114 = vector.multi_reduction <add>, %109, %cst_75 [1] : vector<8x128xf32> to vector<8xf32>
    %115 = vector.shape_cast %114 : vector<8xf32> to vector<8x1xf32>
    %cst_76 = arith.constant 3.125000e-02 : f32
    %116 = vector.broadcast %cst_76 : f32 to vector<8x1xf32>
    %117 = arith.mulf %115, %116 : vector<8x1xf32>
    %118 = arith.mulf %109, %109 : vector<8x128xf32>
    %cst_77 = arith.constant dense<0.000000e+00> : vector<8xf32>
    %119 = vector.multi_reduction <add>, %118, %cst_77 [1] : vector<8x128xf32> to vector<8xf32>
    %120 = vector.shape_cast %119 : vector<8xf32> to vector<8x1xf32>
    %cst_78 = arith.constant 3.125000e-02 : f32
    %121 = vector.broadcast %cst_78 : f32 to vector<8x1xf32>
    %122 = arith.mulf %120, %121 : vector<8x1xf32>
    %123 = arith.mulf %117, %117 : vector<8x1xf32>
    %124 = arith.subf %122, %123 : vector<8x1xf32>
    %125 = vector.broadcast %117 : vector<8x1xf32> to vector<8x128xf32>
    %126 = arith.subf %109, %125 : vector<8x128xf32>
    %cst_79 = arith.constant 9.99999974E-6 : f32
    %127 = vector.broadcast %cst_79 : f32 to vector<8x1xf32>
    %128 = arith.addf %124, %127 : vector<8x1xf32>
    %129 = math.rsqrt %128 : vector<8x1xf32>
    %130 = vector.broadcast %129 : vector<8x1xf32> to vector<8x128xf32>
    %131 = arith.mulf %126, %130 : vector<8x128xf32>
    %132 = vector.broadcast %111 : vector<1x128xf32> to vector<8x128xf32>
    %133 = arith.mulf %131, %132 : vector<8x128xf32>
    %134 = vector.broadcast %113 : vector<1x128xf32> to vector<8x128xf32>
    %135 = arith.addf %133, %134 : vector<8x128xf32>
    %c0_80 = arith.constant 0 : index
    %c0_81 = arith.constant 0 : index
    %136 = vector.load %arg26[%c0_80, %c0_81] : memref<8x128xf32, #tpu.memory_space<vmem>>, vector<8x128xf32>
    tpu.vector_store %arg26[%c0_80, %c0_81], %135 {strides = array<i32>} : memref<8x128xf32, #tpu.memory_space<vmem>>, vector<8x128xf32>,
    %c1_i32 = arith.constant 1 : i32
    %137 = arith.cmpi eq, %arg1, %c1_i32 : i32
    %138 = arith.extui %137 : i1 to i32
    %c0_i32_82 = arith.constant 0 : i32
    %139 = arith.cmpi ne, %138, %c0_i32_82 : i32
    scf.if %139 {
      %140 = arith.truncf %135 : vector<8x128xf32> to vector<8x128xbf16>
      %c0_83 = arith.constant 0 : index
      %c0_84 = arith.constant 0 : index
      %141 = vector.load %arg23[%c0_83, %c0_84] : memref<128x256xbf16, #tpu.memory_space<vmem>>, vector<128x256xbf16>
      %cst_85 = arith.constant dense<0.000000e+00> : vector<8x256xf32>
      %142 = tpu.matmul %140, %141, %cst_85 {dimension_numbers = #tpu.dot_dimension_numbers<[1], [0], [0], [1], [0, 0, 1, 1], [], []>} : vector<8x128xbf16>, vector<128x256xbf16>, vector<8x256xf32> -> vector<8x256xf32>
      %c0_86 = arith.constant 0 : index
      %c0_87 = arith.constant 0 : index
      %143 = vector.load %arg24[%c0_86, %c0_87] : memref<1x256xf32, #tpu.memory_space<vmem>>, vector<1x256xf32>
      %144 = vector.broadcast %143 : vector<1x256xf32> to vector<8x256xf32>
      %145 = arith.addf %142, %144 : vector<8x256xf32>
      %c0_88 = arith.constant 0 : index
      %c0_89 = arith.constant 0 : index
      %146 = vector.load %arg25[%c0_88, %c0_89] : memref<8x256xf32, #tpu.memory_space<vmem>>, vector<8x256xf32>
      tpu.vector_store %arg25[%c0_88, %c0_89], %145 {strides = array<i32>} : memref<8x256xf32, #tpu.memory_space<vmem>>, vector<8x256xf32>,
    } else {
    }
    return
  }
  func.func @transform_0(%arg0: i32, %arg1: i32) -> (i32, i32, i32) {
    %c0_i32 = arith.constant 0 : i32
    %c0_i32_0 = arith.constant 0 : i32
    %c0_i32_1 = arith.constant 0 : i32
    return %c0_i32, %arg0, %c0_i32_0 : i32, i32, i32
  }
  func.func @transform_1(%arg0: i32, %arg1: i32) -> (i32, i32) {
    %c0_i32 = arith.constant 0 : i32
    %c0_i32_0 = arith.constant 0 : i32
    %c0_i32_1 = arith.constant 0 : i32
    return %c0_i32, %c0_i32_0 : i32, i32
  }
  func.func @transform_2(%arg0: i32, %arg1: i32) -> i32 {
    %c0_i32 = arith.constant 0 : i32
    %c0_i32_0 = arith.constant 0 : i32
    return %c0_i32 : i32
  }
  func.func @transform_3(%arg0: i32, %arg1: i32) -> (i32, i32) {
    %c0_i32 = arith.constant 0 : i32
    %c0_i32_0 = arith.constant 0 : i32
    %c0_i32_1 = arith.constant 0 : i32
    return %c0_i32, %c0_i32_0 : i32, i32
  }
  func.func @transform_4(%arg0: i32, %arg1: i32) -> (i32, i32) {
    %c0_i32 = arith.constant 0 : i32
    %c0_i32_0 = arith.constant 0 : i32
    %c0_i32_1 = arith.constant 0 : i32
    return %c0_i32, %c0_i32_0 : i32, i32
  }
  func.func @transform_5(%arg0: i32, %arg1: i32) -> (i32, i32, i32, i32) {
    %c0_i32 = arith.constant 0 : i32
    %c0_i32_0 = arith.constant 0 : i32
    %c0_i32_1 = arith.constant 0 : i32
    %c0_i32_2 = arith.constant 0 : i32
    return %arg1, %c0_i32, %c0_i32_0, %c0_i32_1 : i32, i32, i32, i32
  }
  func.func @transform_6(%arg0: i32, %arg1: i32) -> (i32, i32, i32, i32) {
    %c0_i32 = arith.constant 0 : i32
    %c0_i32_0 = arith.constant 0 : i32
    %c0_i32_1 = arith.constant 0 : i32
    %c0_i32_2 = arith.constant 0 : i32
    return %arg1, %c0_i32, %c0_i32_0, %c0_i32_1 : i32, i32, i32, i32
  }
  func.func @transform_7(%arg0: i32, %arg1: i32) -> (i32, i32, i32, i32) {
    %c0_i32 = arith.constant 0 : i32
    %c0_i32_0 = arith.constant 0 : i32
    %c0_i32_1 = arith.constant 0 : i32
    %c0_i32_2 = arith.constant 0 : i32
    return %arg1, %c0_i32, %c0_i32_0, %c0_i32_1 : i32, i32, i32, i32
  }
  func.func @transform_8(%arg0: i32, %arg1: i32) -> (i32, i32, i32, i32) {
    %c0_i32 = arith.constant 0 : i32
    %c0_i32_0 = arith.constant 0 : i32
    %c0_i32_1 = arith.constant 0 : i32
    %c0_i32_2 = arith.constant 0 : i32
    return %arg1, %c0_i32, %c0_i32_0, %c0_i32_1 : i32, i32, i32, i32
  }
  func.func @transform_9(%arg0: i32, %arg1: i32) -> (i32, i32, i32, i32) {
    %c0_i32 = arith.constant 0 : i32
    %c0_i32_0 = arith.constant 0 : i32
    %c0_i32_1 = arith.constant 0 : i32
    %c0_i32_2 = arith.constant 0 : i32
    return %arg1, %c0_i32, %c0_i32_0, %c0_i32_1 : i32, i32, i32, i32
  }
  func.func @transform_10(%arg0: i32, %arg1: i32) -> (i32, i32, i32, i32) {
    %c0_i32 = arith.constant 0 : i32
    %c0_i32_0 = arith.constant 0 : i32
    %c0_i32_1 = arith.constant 0 : i32
    %c0_i32_2 = arith.constant 0 : i32
    return %arg1, %c0_i32, %c0_i32_0, %c0_i32_1 : i32, i32, i32, i32
  }
  func.func @transform_11(%arg0: i32, %arg1: i32) -> (i32, i32, i32, i32) {
    %c0_i32 = arith.constant 0 : i32
    %c0_i32_0 = arith.constant 0 : i32
    %c0_i32_1 = arith.constant 0 : i32
    %c0_i32_2 = arith.constant 0 : i32
    return %arg1, %c0_i32, %c0_i32_0, %c0_i32_1 : i32, i32, i32, i32
  }
  func.func @transform_12(%arg0: i32, %arg1: i32) -> (i32, i32, i32) {
    %c0_i32 = arith.constant 0 : i32
    %c0_i32_0 = arith.constant 0 : i32
    %c0_i32_1 = arith.constant 0 : i32
    return %arg1, %c0_i32, %c0_i32_0 : i32, i32, i32
  }
  func.func @transform_13(%arg0: i32, %arg1: i32) -> (i32, i32, i32) {
    %c0_i32 = arith.constant 0 : i32
    %c0_i32_0 = arith.constant 0 : i32
    %c0_i32_1 = arith.constant 0 : i32
    return %arg1, %c0_i32, %c0_i32_0 : i32, i32, i32
  }
  func.func @transform_14(%arg0: i32, %arg1: i32) -> (i32, i32, i32) {
    %c0_i32 = arith.constant 0 : i32
    %c0_i32_0 = arith.constant 0 : i32
    %c0_i32_1 = arith.constant 0 : i32
    return %arg1, %c0_i32, %c0_i32_0 : i32, i32, i32
  }
  func.func @transform_15(%arg0: i32, %arg1: i32) -> (i32, i32, i32) {
    %c0_i32 = arith.constant 0 : i32
    %c0_i32_0 = arith.constant 0 : i32
    %c0_i32_1 = arith.constant 0 : i32
    return %arg1, %c0_i32, %c0_i32_0 : i32, i32, i32
  }
  func.func @transform_16(%arg0: i32, %arg1: i32) -> (i32, i32, i32) {
    %c0_i32 = arith.constant 0 : i32
    %c0_i32_0 = arith.constant 0 : i32
    %c0_i32_1 = arith.constant 0 : i32
    return %arg1, %c0_i32, %c0_i32_0 : i32, i32, i32
  }
  func.func @transform_17(%arg0: i32, %arg1: i32) -> (i32, i32, i32) {
    %c0_i32 = arith.constant 0 : i32
    %c0_i32_0 = arith.constant 0 : i32
    %c0_i32_1 = arith.constant 0 : i32
    return %arg1, %c0_i32, %c0_i32_0 : i32, i32, i32
  }
  func.func @transform_18(%arg0: i32, %arg1: i32) -> (i32, i32, i32) {
    %c0_i32 = arith.constant 0 : i32
    %c0_i32_0 = arith.constant 0 : i32
    %c0_i32_1 = arith.constant 0 : i32
    return %arg1, %c0_i32, %c0_i32_0 : i32, i32, i32
  }
  func.func @transform_19(%arg0: i32, %arg1: i32) -> (i32, i32, i32) {
    %c0_i32 = arith.constant 0 : i32
    %c0_i32_0 = arith.constant 0 : i32
    %c0_i32_1 = arith.constant 0 : i32
    return %arg1, %c0_i32, %c0_i32_0 : i32, i32, i32
  }
  func.func @transform_20(%arg0: i32, %arg1: i32) -> (i32, i32, i32) {
    %c0_i32 = arith.constant 0 : i32
    %c0_i32_0 = arith.constant 0 : i32
    %c0_i32_1 = arith.constant 0 : i32
    return %arg1, %c0_i32, %c0_i32_0 : i32, i32, i32
  }
  func.func @transform_21(%arg0: i32, %arg1: i32) -> (i32, i32) {
    %c0_i32 = arith.constant 0 : i32
    %c0_i32_0 = arith.constant 0 : i32
    %c0_i32_1 = arith.constant 0 : i32
    return %c0_i32, %c0_i32_0 : i32, i32
  }
  func.func @transform_22(%arg0: i32, %arg1: i32) -> (i32, i32) {
    %c0_i32 = arith.constant 0 : i32
    %c0_i32_0 = arith.constant 0 : i32
    %c0_i32_1 = arith.constant 0 : i32
    return %c0_i32, %c0_i32_0 : i32, i32
  }
  func.func @transform_23(%arg0: i32, %arg1: i32) -> (i32, i32) {
    %c0_i32 = arith.constant 0 : i32
    %c0_i32_0 = arith.constant 0 : i32
    return %arg0, %c0_i32 : i32, i32
  }
}

</mosaic_0001>

<llo_original>
// kernel: cnn_transformer_net.1
$region0: #{cnn_transformer_net.1}
  #allocation0 [shape = 'u32[]', space=smem, size = 0x4, offset = 0x4, fixed_abs, tag = 'smem constant byte address 0x4 - core index']
  #allocation1 [shape = 'u32[72,128]{1,0:T(1,128)}', space=vmem, size = 0x9000, scoped, tag = 'internal scratch']
  #allocation2 [shape = 'f32[8,128]{1,0:T(8,128)}', space=vmem, size = 0x1000, scoped, tag = 'scratch operand']
  %s0 = inlined_call_operand.vmem [shape: f32[9,16,256], index: 0, kind: input, shape index: {}]
  %s1 = inlined_call_operand.vmem [shape: f32[9,8], index: 1, kind: input, shape index: {}]
  %s2 = inlined_call_operand.vmem [shape: f32[8], index: 2, kind: input, shape index: {}]
  %s3 = inlined_call_operand.vmem [shape: f32[8,128], index: 3, kind: input, shape index: {}]
  %s4 = inlined_call_operand.vmem [shape: f32[1,128], index: 4, kind: input, shape index: {}]
  %s5 = inlined_call_operand.vmem [shape: bf16[2,2,128,128], index: 5, kind: input, shape index: {}]
  %s6 = inlined_call_operand.vmem [shape: f32[2,2,1,128], index: 6, kind: input, shape index: {}]
  %s7 = inlined_call_operand.vmem [shape: bf16[2,2,128,128], index: 7, kind: input, shape index: {}]
  %s8 = inlined_call_operand.vmem [shape: f32[2,2,1,128], index: 8, kind: input, shape index: {}]
  %s9 = inlined_call_operand.vmem [shape: bf16[2,2,128,128], index: 9, kind: input, shape index: {}]
  %s10 = inlined_call_operand.vmem [shape: f32[2,2,1,128], index: 10, kind: input, shape index: {}]
  %s11 = inlined_call_operand.vmem [shape: bf16[2,2,128,128], index: 11, kind: input, shape index: {}]
  %s12 = inlined_call_operand.vmem [shape: f32[2,1,128], index: 12, kind: input, shape index: {}]
  %s13 = inlined_call_operand.vmem [shape: f32[2,1,128], index: 13, kind: input, shape index: {}]
  %s14 = inlined_call_operand.vmem [shape: f32[2,1,128], index: 14, kind: input, shape index: {}]
  %s15 = inlined_call_operand.vmem [shape: bf16[2,128,128], index: 15, kind: input, shape index: {}]
  %s16 = inlined_call_operand.vmem [shape: f32[2,1,128], index: 16, kind: input, shape index: {}]
  %s17 = inlined_call_operand.vmem [shape: bf16[2,128,128], index: 17, kind: input, shape index: {}]
  %s18 = inlined_call_operand.vmem [shape: f32[2,1,128], index: 18, kind: input, shape index: {}]
  %s19 = inlined_call_operand.vmem [shape: f32[2,1,128], index: 19, kind: input, shape index: {}]
  %s20 = inlined_call_operand.vmem [shape: f32[2,1,128], index: 20, kind: input, shape index: {}]
  %s21 = inlined_call_operand.vmem [shape: bf16[128,256], index: 21, kind: input, shape index: {}]
  %s22 = inlined_call_operand.vmem [shape: f32[1,256], index: 22, kind: input, shape index: {}]
  %s23 = inlined_call_operand.vmem [shape: f32[16,256], index: 23, kind: output, shape index: {}]
  %s24 = sld [smem:[#allocation0]]
  $region164: #{cnn_transformer_net.1} parent=0
    _
  %s26 = ssub.s32 1, %s24
  %s27 = scalar_select 0, %s26, %s24
  $region1: #{cnn_transformer_net.1} parent=0
    #allocation3 [shape = 'u8[147456]{0}', space=vmem, size = 0x24000, scoped, tag = 'input window, operand 0']
    #allocation4 [shape = 'u8[8192]{0}', space=smem, size = 0x2000, scoped, tag = 'input window, operand 1, single buffered']
    #allocation5 [shape = 's32[2]{0}', space=sflag, size = 0x8, scoped, tag = 'scoped memory for cnn_transformer_net.1']
    #allocation6 [shape = 'u8[512]{0}', space=smem, size = 0x200, scoped, tag = 'input window, operand 2, single buffered']
    #allocation7 [shape = 's32[1]{0}', space=sflag, size = 0x4, scoped, tag = 'scoped memory for cnn_transformer_net.1']
    %28 = vsyncpa [#allocation5], 0
    %29 = vsyncpa [#allocation7], 0
    loop: start=0, step=1, limit=6
    $region2: #{cnn_transformer_net.1} parent=1 // loop_pre_header
      _
    $region3: #{cnn_transformer_net.1} parent=1 // loop_header
      %s31 = sphi 0, %s35
      %p32 = scmp.ge.s32.totalorder %s31, 6
      %s38 = sphi 0, %s50
      %s39 = sphi 0, %s46
      %s40 = sphi 0, %s38
      %s41 = sphi 0, %s39
      %s42 = sphi 0, %s40
      %s43 = sphi 0, %s41
      %s53 = sphi 0, %s55
      %s56 = sphi 0, %s53
      %s57 = sphi 0, %s56
      %s73 = sphi 0, %s57
      %s77 = sphi 0, %s77
      %s79 = sphi 0, %s77
      %s80 = sphi 0, %s79
      %s94 = sphi 0, %s80
      %s98 = sphi 0, %s98
      %s100 = sphi 0, %s98
      %s101 = sphi 0, %s100
      %s115 = sphi 0, %s101
      %s119 = sphi 0, %s119
      %s121 = sphi 0, %s119
      %s122 = sphi 0, %s121
      %s136 = sphi 0, %s122
      %s140 = sphi 0, %s140
      %s142 = sphi 0, %s140
      %s143 = sphi 0, %s142
      %s157 = sphi 0, %s143
      %s163 = sphi 0, %s165
      %s166 = sphi 0, %s163
      %s167 = sphi 0, %s166
      %s183 = sphi 0, %s167
      %s189 = sphi 0, %s191
      %s192 = sphi 0, %s189
      %s193 = sphi 0, %s192
      %s209 = sphi 0, %s193
      %s215 = sphi 0, %s217
      %s218 = sphi 0, %s215
      %s219 = sphi 0, %s218
      %s235 = sphi 0, %s219
      %s241 = sphi 0, %s243
      %s244 = sphi 0, %s241
      %s245 = sphi 0, %s244
      %s261 = sphi 0, %s245
      %s267 = sphi 0, %s269
      %s270 = sphi 0, %s267
      %s271 = sphi 0, %s270
      %s287 = sphi 0, %s271
      %s293 = sphi 0, %s295
      %s296 = sphi 0, %s293
      %s297 = sphi 0, %s296
      %s313 = sphi 0, %s297
      %s319 = sphi 0, %s321
      %s322 = sphi 0, %s319
      %s323 = sphi 0, %s322
      %s339 = sphi 0, %s323
      %s345 = sphi 0, %s347
      %s348 = sphi 0, %s345
      %s349 = sphi 0, %s348
      %s365 = sphi 0, %s349
      %s371 = sphi 0, %s373
      %s374 = sphi 0, %s371
      %s375 = sphi 0, %s374
      %s391 = sphi 0, %s375
      %s397 = sphi 0, %s399
      %s400 = sphi 0, %s397
      %s401 = sphi 0, %s400
      %s417 = sphi 0, %s401
      %s423 = sphi 0, %s425
      %s426 = sphi 0, %s423
      %s427 = sphi 0, %s426
      %s443 = sphi 0, %s427
      %s449 = sphi 0, %s451
      %s452 = sphi 0, %s449
      %s453 = sphi 0, %s452
      %s469 = sphi 0, %s453
      %s475 = sphi 0, %s477
      %s478 = sphi 0, %s475
      %s479 = sphi 0, %s478
      %s495 = sphi 0, %s479
      %s501 = sphi 0, %s503
      %s504 = sphi 0, %s501
      %s505 = sphi 0, %s504
      %s521 = sphi 0, %s505
      %s527 = sphi 0, %s529
      %s530 = sphi 0, %s527
      %s531 = sphi 0, %s530
      %s547 = sphi 0, %s531
      %s553 = sphi 0, %s555
      %s556 = sphi 0, %s553
      %s557 = sphi 0, %s556
      %s573 = sphi 0, %s557
      %s577 = sphi 0, %s577
      %s579 = sphi 0, %s577
      %s580 = sphi 0, %s579
      %s594 = sphi 0, %s580
      %s598 = sphi 0, %s598
      %s600 = sphi 0, %s598
      %s601 = sphi 0, %s600
      %s615 = sphi 0, %s601
      %s621 = sphi 0, %s623
      %s624 = sphi 0, %s621
      %s625 = sphi 0, %s624
      %s641 = sphi 0, %s625
    $region4: #{cnn_transformer_net.1} parent=1 // loop_header_branch
      %34 = sbr.rel (%p32) target = $region8
    $region5: #{cnn_transformer_net.1} parent=1 // loop_body
      %s36 = ssub.s32 %s31, 1
      %s37 = ssub.s32 %s31, 2
      %s44 = sadd.s32 1, %s39
      %p45 = scmp.ge.s32.totalorder %s44, 2
      %s46 = scalar_select %p45, 0, %s44
      %s47 = sadd.s32 1, %s38
      %s48 = scalar_select %p45, %s47, %s38
      %p49 = scmp.ge.s32.totalorder %s48, 2
      %s50 = scalar_select %p49, 0, %s48
      %s51 = ssub.s32 %s38, %s50
      %p52 = scmp.eq.s32.totalorder %s51, 0
      %s54 = sadd.s32 %s53, 1
      %s55 = scalar_select %p52, %s53, %s54
      %p58 = pneg %p52
      %p59 = scmp.eq.s32.totalorder %s31, 3
      %p60 = por %p58, %p59
      %p61 = scmp.ne.s32.totalorder %s53, %s56
      %p62 = scmp.eq.s32.totalorder %s31, 0
      %p63 = por %p61, %p62
      %p64 = scmp.ne.s32.totalorder %s53, %s56
      %p65 = scmp.eq.s32.totalorder %s36, 3
      %p66 = por %p64, %p65
      %p67 = scmp.ne.s32.totalorder %s56, %s57
      %p68 = scmp.eq.s32.totalorder %s36, 0
      %p69 = por %p67, %p68
      %p70 = scmp.ne.s32.totalorder %s56, %s57
      %p71 = scmp.eq.s32.totalorder %s37, 3
      %p72 = por %p70, %p71
      %p74 = scmp.ne.s32.totalorder %s57, %s73
      %p75 = scmp.eq.s32.totalorder %s37, 0
      %p76 = por %p74, %p75
      %s78 = sadd.s32 %s77, 1
      %p81 = scmp.eq.s32.totalorder %s31, 3
      %p82 = scmp.ne.s32.totalorder %s77, %s79
      %p83 = scmp.eq.s32.totalorder %s31, 0
      %p84 = por %p82, %p83
      %p85 = scmp.ne.s32.totalorder %s77, %s79
      %p86 = scmp.eq.s32.totalorder %s36, 3
      %p87 = por %p85, %p86
      %p88 = scmp.ne.s32.totalorder %s79, %s80
      %p89 = scmp.eq.s32.totalorder %s36, 0
      %p90 = por %p88, %p89
      %p91 = scmp.ne.s32.totalorder %s79, %s80
      %p92 = scmp.eq.s32.totalorder %s37, 3
      %p93 = por %p91, %p92
      %p95 = scmp.ne.s32.totalorder %s80, %s94
      %p96 = scmp.eq.s32.totalorder %s37, 0
      %p97 = por %p95, %p96
      %s99 = sadd.s32 %s98, 1
      %p102 = scmp.eq.s32.totalorder %s31, 3
      %p103 = scmp.ne.s32.totalorder %s98, %s100
      %p104 = scmp.eq.s32.totalorder %s31, 0
      %p105 = por %p103, %p104
      %p106 = scmp.ne.s32.totalorder %s98, %s100
      %p107 = scmp.eq.s32.totalorder %s36, 3
      %p108 = por %p106, %p107
      %p109 = scmp.ne.s32.totalorder %s100, %s101
      %p110 = scmp.eq.s32.totalorder %s36, 0
      %p111 = por %p109, %p110
      %p112 = scmp.ne.s32.totalorder %s100, %s101
      %p113 = scmp.eq.s32.totalorder %s37, 3
      %p114 = por %p112, %p113
      %p116 = scmp.ne.s32.totalorder %s101, %s115
      %p117 = scmp.eq.s32.totalorder %s37, 0
      %p118 = por %p116, %p117
      %s120 = sadd.s32 %s119, 1
      %p123 = scmp.eq.s32.totalorder %s31, 3
      %p124 = scmp.ne.s32.totalorder %s119, %s121
      %p125 = scmp.eq.s32.totalorder %s31, 0
      %p126 = por %p124, %p125
      %p127 = scmp.ne.s32.totalorder %s119, %s121
      %p128 = scmp.eq.s32.totalorder %s36, 3
      %p129 = por %p127, %p128
      %p130 = scmp.ne.s32.totalorder %s121, %s122
      %p131 = scmp.eq.s32.totalorder %s36, 0
      %p132 = por %p130, %p131
      %p133 = scmp.ne.s32.totalorder %s121, %s122
      %p134 = scmp.eq.s32.totalorder %s37, 3
      %p135 = por %p133, %p134
      %p137 = scmp.ne.s32.totalorder %s122, %s136
      %p138 = scmp.eq.s32.totalorder %s37, 0
      %p139 = por %p137, %p138
      %s141 = sadd.s32 %s140, 1
      %p144 = scmp.eq.s32.totalorder %s31, 3
      %p145 = scmp.ne.s32.totalorder %s140, %s142
      %p146 = scmp.eq.s32.totalorder %s31, 0
      %p147 = por %p145, %p146
      %p148 = scmp.ne.s32.totalorder %s140, %s142
      %p149 = scmp.eq.s32.totalorder %s36, 3
      %p150 = por %p148, %p149
      %p151 = scmp.ne.s32.totalorder %s142, %s143
      %p152 = scmp.eq.s32.totalorder %s36, 0
      %p153 = por %p151, %p152
      %p154 = scmp.ne.s32.totalorder %s142, %s143
      %p155 = scmp.eq.s32.totalorder %s37, 3
      %p156 = por %p154, %p155
      %p158 = scmp.ne.s32.totalorder %s143, %s157
      %p159 = scmp.eq.s32.totalorder %s37, 0
      %p160 = por %p158, %p159
      %s161 = ssub.s32 %s39, %s46
      %p162 = scmp.eq.s32.totalorder %s161, 0
      %s164 = sadd.s32 %s163, 1
      %s165 = scalar_select %p162, %s163, %s164
      %p168 = pneg %p162
      %p169 = scmp.eq.s32.totalorder %s31, 3
      %p170 = por %p168, %p169
      %p171 = scmp.ne.s32.totalorder %s163, %s166
      %p172 = scmp.eq.s32.totalorder %s31, 0
      %p173 = por %p171, %p172
      %p174 = scmp.ne.s32.totalorder %s163, %s166
      %p175 = scmp.eq.s32.totalorder %s36, 3
      %p176 = por %p174, %p175
      %p177 = scmp.ne.s32.totalorder %s166, %s167
      %p178 = scmp.eq.s32.totalorder %s36, 0
      %p179 = por %p177, %p178
      %p180 = scmp.ne.s32.totalorder %s166, %s167
      %p181 = scmp.eq.s32.totalorder %s37, 3
      %p182 = por %p180, %p181
      %p184 = scmp.ne.s32.totalorder %s167, %s183
      %p185 = scmp.eq.s32.totalorder %s37, 0
      %p186 = por %p184, %p185
      %s187 = ssub.s32 %s39, %s46
      %p188 = scmp.eq.s32.totalorder %s187, 0
      %s190 = sadd.s32 %s189, 1
      %s191 = scalar_select %p188, %s189, %s190
      %p194 = pneg %p188
      %p195 = scmp.eq.s32.totalorder %s31, 3
      %p196 = por %p194, %p195
      %p197 = scmp.ne.s32.totalorder %s189, %s192
      %p198 = scmp.eq.s32.totalorder %s31, 0
      %p199 = por %p197, %p198
      %p200 = scmp.ne.s32.totalorder %s189, %s192
      %p201 = scmp.eq.s32.totalorder %s36, 3
      %p202 = por %p200, %p201
      %p203 = scmp.ne.s32.totalorder %s192, %s193
      %p204 = scmp.eq.s32.totalorder %s36, 0
      %p205 = por %p203, %p204
      %p206 = scmp.ne.s32.totalorder %s192, %s193
      %p207 = scmp.eq.s32.totalorder %s37, 3
      %p208 = por %p206, %p207
      %p210 = scmp.ne.s32.totalorder %s193, %s209
      %p211 = scmp.eq.s32.totalorder %s37, 0
      %p212 = por %p210, %p211
      %s213 = ssub.s32 %s39, %s46
      %p214 = scmp.eq.s32.totalorder %s213, 0
      %s216 = sadd.s32 %s215, 1
      %s217 = scalar_select %p214, %s215, %s216
      %p220 = pneg %p214
      %p221 = scmp.eq.s32.totalorder %s31, 3
      %p222 = por %p220, %p221
      %p223 = scmp.ne.s32.totalorder %s215, %s218
      %p224 = scmp.eq.s32.totalorder %s31, 0
      %p225 = por %p223, %p224
      %p226 = scmp.ne.s32.totalorder %s215, %s218
      %p227 = scmp.eq.s32.totalorder %s36, 3
      %p228 = por %p226, %p227
      %p229 = scmp.ne.s32.totalorder %s218, %s219
      %p230 = scmp.eq.s32.totalorder %s36, 0
      %p231 = por %p229, %p230
      %p232 = scmp.ne.s32.totalorder %s218, %s219
      %p233 = scmp.eq.s32.totalorder %s37, 3
      %p234 = por %p232, %p233
      %p236 = scmp.ne.s32.totalorder %s219, %s235
      %p237 = scmp.eq.s32.totalorder %s37, 0
      %p238 = por %p236, %p237
      %s239 = ssub.s32 %s39, %s46
      %p240 = scmp.eq.s32.totalorder %s239, 0
      %s242 = sadd.s32 %s241, 1
      %s243 = scalar_select %p240, %s241, %s242
      %p246 = pneg %p240
      %p247 = scmp.eq.s32.totalorder %s31, 3
      %p248 = por %p246, %p247
      %p249 = scmp.ne.s32.totalorder %s241, %s244
      %p250 = scmp.eq.s32.totalorder %s31, 0
      %p251 = por %p249, %p250
      %p252 = scmp.ne.s32.totalorder %s241, %s244
      %p253 = scmp.eq.s32.totalorder %s36, 3
      %p254 = por %p252, %p253
      %p255 = scmp.ne.s32.totalorder %s244, %s245
      %p256 = scmp.eq.s32.totalorder %s36, 0
      %p257 = por %p255, %p256
      %p258 = scmp.ne.s32.totalorder %s244, %s245
      %p259 = scmp.eq.s32.totalorder %s37, 3
      %p260 = por %p258, %p259
      %p262 = scmp.ne.s32.totalorder %s245, %s261
      %p263 = scmp.eq.s32.totalorder %s37, 0
      %p264 = por %p262, %p263
      %s265 = ssub.s32 %s39, %s46
      %p266 = scmp.eq.s32.totalorder %s265, 0
      %s268 = sadd.s32 %s267, 1
      %s269 = scalar_select %p266, %s267, %s268
      %p272 = pneg %p266
      %p273 = scmp.eq.s32.totalorder %s31, 3
      %p274 = por %p272, %p273
      %p275 = scmp.ne.s32.totalorder %s267, %s270
      %p276 = scmp.eq.s32.totalorder %s31, 0
      %p277 = por %p275, %p276
      %p278 = scmp.ne.s32.totalorder %s267, %s270
      %p279 = scmp.eq.s32.totalorder %s36, 3
      %p280 = por %p278, %p279
      %p281 = scmp.ne.s32.totalorder %s270, %s271
      %p282 = scmp.eq.s32.totalorder %s36, 0
      %p283 = por %p281, %p282
      %p284 = scmp.ne.s32.totalorder %s270, %s271
      %p285 = scmp.eq.s32.totalorder %s37, 3
      %p286 = por %p284, %p285
      %p288 = scmp.ne.s32.totalorder %s271, %s287
      %p289 = scmp.eq.s32.totalorder %s37, 0
      %p290 = por %p288, %p289
      %s291 = ssub.s32 %s39, %s46
      %p292 = scmp.eq.s32.totalorder %s291, 0
      %s294 = sadd.s32 %s293, 1
      %s295 = scalar_select %p292, %s293, %s294
      %p298 = pneg %p292
      %p299 = scmp.eq.s32.totalorder %s31, 3
      %p300 = por %p298, %p299
      %p301 = scmp.ne.s32.totalorder %s293, %s296
      %p302 = scmp.eq.s32.totalorder %s31, 0
      %p303 = por %p301, %p302
      %p304 = scmp.ne.s32.totalorder %s293, %s296
      %p305 = scmp.eq.s32.totalorder %s36, 3
      %p306 = por %p304, %p305
      %p307 = scmp.ne.s32.totalorder %s296, %s297
      %p308 = scmp.eq.s32.totalorder %s36, 0
      %p309 = por %p307, %p308
      %p310 = scmp.ne.s32.totalorder %s296, %s297
      %p311 = scmp.eq.s32.totalorder %s37, 3
      %p312 = por %p310, %p311
      %p314 = scmp.ne.s32.totalorder %s297, %s313
      %p315 = scmp.eq.s32.totalorder %s37, 0
      %p316 = por %p314, %p315
      %s317 = ssub.s32 %s39, %s46
      %p318 = scmp.eq.s32.totalorder %s317, 0
      %s320 = sadd.s32 %s319, 1
      %s321 = scalar_select %p318, %s319, %s320
      %p324 = pneg %p318
      %p325 = scmp.eq.s32.totalorder %s31, 3
      %p326 = por %p324, %p325
      %p327 = scmp.ne.s32.totalorder %s319, %s322
      %p328 = scmp.eq.s32.totalorder %s31, 0
      %p329 = por %p327, %p328
      %p330 = scmp.ne.s32.totalorder %s319, %s322
      %p331 = scmp.eq.s32.totalorder %s36, 3
      %p332 = por %p330, %p331
      %p333 = scmp.ne.s32.totalorder %s322, %s323
      %p334 = scmp.eq.s32.totalorder %s36, 0
      %p335 = por %p333, %p334
      %p336 = scmp.ne.s32.totalorder %s322, %s323
      %p337 = scmp.eq.s32.totalorder %s37, 3
      %p338 = por %p336, %p337
      %p340 = scmp.ne.s32.totalorder %s323, %s339
      %p341 = scmp.eq.s32.totalorder %s37, 0
      %p342 = por %p340, %p341
      %s343 = ssub.s32 %s39, %s46
      %p344 = scmp.eq.s32.totalorder %s343, 0
      %s346 = sadd.s32 %s345, 1
      %s347 = scalar_select %p344, %s345, %s346
      %p350 = pneg %p344
      %p351 = scmp.eq.s32.totalorder %s31, 3
      %p352 = por %p350, %p351
      %p353 = scmp.ne.s32.totalorder %s345, %s348
      %p354 = scmp.eq.s32.totalorder %s31, 0
      %p355 = por %p353, %p354
      %p356 = scmp.ne.s32.totalorder %s345, %s348
      %p357 = scmp.eq.s32.totalorder %s36, 3
      %p358 = por %p356, %p357
      %p359 = scmp.ne.s32.totalorder %s348, %s349
      %p360 = scmp.eq.s32.totalorder %s36, 0
      %p361 = por %p359, %p360
      %p362 = scmp.ne.s32.totalorder %s348, %s349
      %p363 = scmp.eq.s32.totalorder %s37, 3
      %p364 = por %p362, %p363
      %p366 = scmp.ne.s32.totalorder %s349, %s365
      %p367 = scmp.eq.s32.totalorder %s37, 0
      %p368 = por %p366, %p367
      %s369 = ssub.s32 %s39, %s46
      %p370 = scmp.eq.s32.totalorder %s369, 0
      %s372 = sadd.s32 %s371, 1
      %s373 = scalar_select %p370, %s371, %s372
      %p376 = pneg %p370
      %p377 = scmp.eq.s32.totalorder %s31, 3
      %p378 = por %p376, %p377
      %p379 = scmp.ne.s32.totalorder %s371, %s374
      %p380 = scmp.eq.s32.totalorder %s31, 0
      %p381 = por %p379, %p380
      %p382 = scmp.ne.s32.totalorder %s371, %s374
      %p383 = scmp.eq.s32.totalorder %s36, 3
      %p384 = por %p382, %p383
      %p385 = scmp.ne.s32.totalorder %s374, %s375
      %p386 = scmp.eq.s32.totalorder %s36, 0
      %p387 = por %p385, %p386
      %p388 = scmp.ne.s32.totalorder %s374, %s375
      %p389 = scmp.eq.s32.totalorder %s37, 3
      %p390 = por %p388, %p389
      %p392 = scmp.ne.s32.totalorder %s375, %s391
      %p393 = scmp.eq.s32.totalorder %s37, 0
      %p394 = por %p392, %p393
      %s395 = ssub.s32 %s39, %s46
      %p396 = scmp.eq.s32.totalorder %s395, 0
      %s398 = sadd.s32 %s397, 1
      %s399 = scalar_select %p396, %s397, %s398
      %p402 = pneg %p396
      %p403 = scmp.eq.s32.totalorder %s31, 3
      %p404 = por %p402, %p403
      %p405 = scmp.ne.s32.totalorder %s397, %s400
      %p406 = scmp.eq.s32.totalorder %s31, 0
      %p407 = por %p405, %p406
      %p408 = scmp.ne.s32.totalorder %s397, %s400
      %p409 = scmp.eq.s32.totalorder %s36, 3
      %p410 = por %p408, %p409
      %p411 = scmp.ne.s32.totalorder %s400, %s401
      %p412 = scmp.eq.s32.totalorder %s36, 0
      %p413 = por %p411, %p412
      %p414 = scmp.ne.s32.totalorder %s400, %s401
      %p415 = scmp.eq.s32.totalorder %s37, 3
      %p416 = por %p414, %p415
      %p418 = scmp.ne.s32.totalorder %s401, %s417
      %p419 = scmp.eq.s32.totalorder %s37, 0
      %p420 = por %p418, %p419
      %s421 = ssub.s32 %s39, %s46
      %p422 = scmp.eq.s32.totalorder %s421, 0
      %s424 = sadd.s32 %s423, 1
      %s425 = scalar_select %p422, %s423, %s424
      %p428 = pneg %p422
      %p429 = scmp.eq.s32.totalorder %s31, 3
      %p430 = por %p428, %p429
      %p431 = scmp.ne.s32.totalorder %s423, %s426
      %p432 = scmp.eq.s32.totalorder %s31, 0
      %p433 = por %p431, %p432
      %p434 = scmp.ne.s32.totalorder %s423, %s426
      %p435 = scmp.eq.s32.totalorder %s36, 3
      %p436 = por %p434, %p435
      %p437 = scmp.ne.s32.totalorder %s426, %s427
      %p438 = scmp.eq.s32.totalorder %s36, 0
      %p439 = por %p437, %p438
      %p440 = scmp.ne.s32.totalorder %s426, %s427
      %p441 = scmp.eq.s32.totalorder %s37, 3
      %p442 = por %p440, %p441
      %p444 = scmp.ne.s32.totalorder %s427, %s443
      %p445 = scmp.eq.s32.totalorder %s37, 0
      %p446 = por %p444, %p445
      %s447 = ssub.s32 %s39, %s46
      %p448 = scmp.eq.s32.totalorder %s447, 0
      %s450 = sadd.s32 %s449, 1
      %s451 = scalar_select %p448, %s449, %s450
      %p454 = pneg %p448
      %p455 = scmp.eq.s32.totalorder %s31, 3
      %p456 = por %p454, %p455
      %p457 = scmp.ne.s32.totalorder %s449, %s452
      %p458 = scmp.eq.s32.totalorder %s31, 0
      %p459 = por %p457, %p458
      %p460 = scmp.ne.s32.totalorder %s449, %s452
      %p461 = scmp.eq.s32.totalorder %s36, 3
      %p462 = por %p460, %p461
      %p463 = scmp.ne.s32.totalorder %s452, %s453
      %p464 = scmp.eq.s32.totalorder %s36, 0
      %p465 = por %p463, %p464
      %p466 = scmp.ne.s32.totalorder %s452, %s453
      %p467 = scmp.eq.s32.totalorder %s37, 3
      %p468 = por %p466, %p467
      %p470 = scmp.ne.s32.totalorder %s453, %s469
      %p471 = scmp.eq.s32.totalorder %s37, 0
      %p472 = por %p470, %p471
      %s473 = ssub.s32 %s39, %s46
      %p474 = scmp.eq.s32.totalorder %s473, 0
      %s476 = sadd.s32 %s475, 1
      %s477 = scalar_select %p474, %s475, %s476
      %p480 = pneg %p474
      %p481 = scmp.eq.s32.totalorder %s31, 3
      %p482 = por %p480, %p481
      %p483 = scmp.ne.s32.totalorder %s475, %s478
      %p484 = scmp.eq.s32.totalorder %s31, 0
      %p485 = por %p483, %p484
      %p486 = scmp.ne.s32.totalorder %s475, %s478
      %p487 = scmp.eq.s32.totalorder %s36, 3
      %p488 = por %p486, %p487
      %p489 = scmp.ne.s32.totalorder %s478, %s479
      %p490 = scmp.eq.s32.totalorder %s36, 0
      %p491 = por %p489, %p490
      %p492 = scmp.ne.s32.totalorder %s478, %s479
      %p493 = scmp.eq.s32.totalorder %s37, 3
      %p494 = por %p492, %p493
      %p496 = scmp.ne.s32.totalorder %s479, %s495
      %p497 = scmp.eq.s32.totalorder %s37, 0
      %p498 = por %p496, %p497
      %s499 = ssub.s32 %s39, %s46
      %p500 = scmp.eq.s32.totalorder %s499, 0
      %s502 = sadd.s32 %s501, 1
      %s503 = scalar_select %p500, %s501, %s502
      %p506 = pneg %p500
      %p507 = scmp.eq.s32.totalorder %s31, 3
      %p508 = por %p506, %p507
      %p509 = scmp.ne.s32.totalorder %s501, %s504
      %p510 = scmp.eq.s32.totalorder %s31, 0
      %p511 = por %p509, %p510
      %p512 = scmp.ne.s32.totalorder %s501, %s504
      %p513 = scmp.eq.s32.totalorder %s36, 3
      %p514 = por %p512, %p513
      %p515 = scmp.ne.s32.totalorder %s504, %s505
      %p516 = scmp.eq.s32.totalorder %s36, 0
      %p517 = por %p515, %p516
      %p518 = scmp.ne.s32.totalorder %s504, %s505
      %p519 = scmp.eq.s32.totalorder %s37, 3
      %p520 = por %p518, %p519
      %p522 = scmp.ne.s32.totalorder %s505, %s521
      %p523 = scmp.eq.s32.totalorder %s37, 0
      %p524 = por %p522, %p523
      %s525 = ssub.s32 %s39, %s46
      %p526 = scmp.eq.s32.totalorder %s525, 0
      %s528 = sadd.s32 %s527, 1
      %s529 = scalar_select %p526, %s527, %s528
      %p532 = pneg %p526
      %p533 = scmp.eq.s32.totalorder %s31, 3
      %p534 = por %p532, %p533
      %p535 = scmp.ne.s32.totalorder %s527, %s530
      %p536 = scmp.eq.s32.totalorder %s31, 0
      %p537 = por %p535, %p536
      %p538 = scmp.ne.s32.totalorder %s527, %s530
      %p539 = scmp.eq.s32.totalorder %s36, 3
      %p540 = por %p538, %p539
      %p541 = scmp.ne.s32.totalorder %s530, %s531
      %p542 = scmp.eq.s32.totalorder %s36, 0
      %p543 = por %p541, %p542
      %p544 = scmp.ne.s32.totalorder %s530, %s531
      %p545 = scmp.eq.s32.totalorder %s37, 3
      %p546 = por %p544, %p545
      %p548 = scmp.ne.s32.totalorder %s531, %s547
      %p549 = scmp.eq.s32.totalorder %s37, 0
      %p550 = por %p548, %p549
      %s551 = ssub.s32 %s39, %s46
      %p552 = scmp.eq.s32.totalorder %s551, 0
      %s554 = sadd.s32 %s553, 1
      %s555 = scalar_select %p552, %s553, %s554
      %p558 = pneg %p552
      %p559 = scmp.eq.s32.totalorder %s31, 3
      %p560 = por %p558, %p559
      %p561 = scmp.ne.s32.totalorder %s553, %s556
      %p562 = scmp.eq.s32.totalorder %s31, 0
      %p563 = por %p561, %p562
      %p564 = scmp.ne.s32.totalorder %s553, %s556
      %p565 = scmp.eq.s32.totalorder %s36, 3
      %p566 = por %p564, %p565
      %p567 = scmp.ne.s32.totalorder %s556, %s557
      %p568 = scmp.eq.s32.totalorder %s36, 0
      %p569 = por %p567, %p568
      %p570 = scmp.ne.s32.totalorder %s556, %s557
      %p571 = scmp.eq.s32.totalorder %s37, 3
      %p572 = por %p570, %p571
      %p574 = scmp.ne.s32.totalorder %s557, %s573
      %p575 = scmp.eq.s32.totalorder %s37, 0
      %p576 = por %p574, %p575
      %s578 = sadd.s32 %s577, 1
      %p581 = scmp.eq.s32.totalorder %s31, 3
      %p582 = scmp.ne.s32.totalorder %s577, %s579
      %p583 = scmp.eq.s32.totalorder %s31, 0
      %p584 = por %p582, %p583
      %p585 = scmp.ne.s32.totalorder %s577, %s579
      %p586 = scmp.eq.s32.totalorder %s36, 3
      %p587 = por %p585, %p586
      %p588 = scmp.ne.s32.totalorder %s579, %s580
      %p589 = scmp.eq.s32.totalorder %s36, 0
      %p590 = por %p588, %p589
      %p591 = scmp.ne.s32.totalorder %s579, %s580
      %p592 = scmp.eq.s32.totalorder %s37, 3
      %p593 = por %p591, %p592
      %p595 = scmp.ne.s32.totalorder %s580, %s594
      %p596 = scmp.eq.s32.totalorder %s37, 0
      %p597 = por %p595, %p596
      %s599 = sadd.s32 %s598, 1
      %p602 = scmp.eq.s32.totalorder %s31, 3
      %p603 = scmp.ne.s32.totalorder %s598, %s600
      %p604 = scmp.eq.s32.totalorder %s31, 0
      %p605 = por %p603, %p604
      %p606 = scmp.ne.s32.totalorder %s598, %s600
      %p607 = scmp.eq.s32.totalorder %s36, 3
      %p608 = por %p606, %p607
      %p609 = scmp.ne.s32.totalorder %s600, %s601
      %p610 = scmp.eq.s32.totalorder %s36, 0
      %p611 = por %p609, %p610
      %p612 = scmp.ne.s32.totalorder %s600, %s601
      %p613 = scmp.eq.s32.totalorder %s37, 3
      %p614 = por %p612, %p613
      %p616 = scmp.ne.s32.totalorder %s601, %s615
      %p617 = scmp.eq.s32.totalorder %s37, 0
      %p618 = por %p616, %p617
      %s619 = ssub.s32 %s38, %s50
      %p620 = scmp.eq.s32.totalorder %s619, 0
      %s622 = sadd.s32 %s621, 1
      %s623 = scalar_select %p620, %s621, %s622
      %p626 = pneg %p620
      %p627 = scmp.eq.s32.totalorder %s31, 3
      %p628 = por %p626, %p627
      %p629 = scmp.ne.s32.totalorder %s621, %s624
      %p630 = scmp.eq.s32.totalorder %s31, 0
      %p631 = por %p629, %p630
      %p632 = scmp.ne.s32.totalorder %s621, %s624
      %p633 = scmp.eq.s32.totalorder %s36, 3
      %p634 = por %p632, %p633
      %p635 = scmp.ne.s32.totalorder %s624, %s625
      %p636 = scmp.eq.s32.totalorder %s36, 0
      %p637 = por %p635, %p636
      %p638 = scmp.ne.s32.totalorder %s624, %s625
      %p639 = scmp.eq.s32.totalorder %s37, 3
      %p640 = por %p638, %p639
      %p642 = scmp.ne.s32.totalorder %s625, %s641
      %p643 = scmp.eq.s32.totalorder %s37, 0
      %p644 = por %p642, %p643
      %p645 = scmp.le.s32.totalorder 1, %s31
      %p646 = scmp.lt.s32.totalorder %s31, 5
      %p647 = pnand %p645, %p646
      %p648 = pneg %p647
      // Predicated region
      $region9: #{cnn_transformer_net.1} parent=5 // pred_check
        _
      $region10: #{cnn_transformer_net.1} parent=5 // pred_check_branch
        %650 = sbr.rel (%p647) target = $region12
      $region11: #{cnn_transformer_net.1} parent=5 // pred_region
        %s651 = ssub.s32 %s31, 1
        // Predicated region
        $region13: #{cnn_transformer_net.1} parent=11 // pred_check
          %p652 = pneg %p90
        $region14: #{cnn_transformer_net.1} parent=11 // pred_check_branch
          %654 = sbr.rel (%p652) target = $region16
        $region15: #{cnn_transformer_net.1} parent=11 // pred_region
          %656 = vsyncadd [#allocation5], 0
          %s657 = sshll.u32 %s1, 4
          %s658 = int_to_ptr.vmem [resolvable:$true] %s657
          %663 = dma.vmem_to_smem %s658, 256, [#allocation4], [#allocation5], 128, 128, 8
        $region16: #{cnn_transformer_net.1} parent=11 // pred_fallthru
          _
        // Predicated region
        $region17: #{cnn_transformer_net.1} parent=11 // pred_check
          %p664 = pneg %p111
        $region18: #{cnn_transformer_net.1} parent=11 // pred_check_branch
          %666 = sbr.rel (%p664) target = $region20
        $region19: #{cnn_transformer_net.1} parent=11 // pred_region
          %668 = vsyncadd [#allocation7], 0
          %s670 = sshll.u32 %s2, 4
          %s671 = int_to_ptr.vmem [resolvable:$true] %s670
          %673 = dma.vmem_to_smem %s671, 16, [#allocation6], [#allocation7]
        $region20: #{cnn_transformer_net.1} parent=11 // pred_fallthru
          _
        // Predicated region
        $region21: #{cnn_transformer_net.1} parent=11 // pred_check
          %p674 = pneg %p132
        $region22: #{cnn_transformer_net.1} parent=11 // pred_check_branch
          %676 = sbr.rel (%p674) target = $region24
        $region23: #{cnn_transformer_net.1} parent=11 // pred_region
          _
        $region24: #{cnn_transformer_net.1} parent=11 // pred_fallthru
          _
        // Predicated region
        $region25: #{cnn_transformer_net.1} parent=11 // pred_check
          %p677 = pneg %p153
        $region26: #{cnn_transformer_net.1} parent=11 // pred_check_branch
          %679 = sbr.rel (%p677) target = $region28
        $region27: #{cnn_transformer_net.1} parent=11 // pred_region
          _
        $region28: #{cnn_transformer_net.1} parent=11 // pred_fallthru
          _
        // Predicated region
        $region29: #{cnn_transformer_net.1} parent=11 // pred_check
          %p680 = pneg %p590
        $region30: #{cnn_transformer_net.1} parent=11 // pred_check_branch
          %682 = sbr.rel (%p680) target = $region32
        $region31: #{cnn_transformer_net.1} parent=11 // pred_region
          _
        $region32: #{cnn_transformer_net.1} parent=11 // pred_fallthru
          _
        // Predicated region
        $region33: #{cnn_transformer_net.1} parent=11 // pred_check
          %p683 = pneg %p611
        $region34: #{cnn_transformer_net.1} parent=11 // pred_check_branch
          %685 = sbr.rel (%p683) target = $region36
        $region35: #{cnn_transformer_net.1} parent=11 // pred_region
          _
        $region36: #{cnn_transformer_net.1} parent=11 // pred_fallthru
          _
      $region12: #{cnn_transformer_net.1} parent=5 // pred_fallthru
        _
      %p686 = scmp.lt.s32.totalorder %s31, 4
      // Predicated region
      $region37: #{cnn_transformer_net.1} parent=5 // pred_check
        %p687 = pneg %p686
      $region38: #{cnn_transformer_net.1} parent=5 // pred_check_branch
        %689 = sbr.rel (%p687) target = $region40
      $region39: #{cnn_transformer_net.1} parent=5 // pred_region
        // Predicated region
        $region41: #{cnn_transformer_net.1} parent=39 // pred_check
          %p690 = pneg %p63
        $region42: #{cnn_transformer_net.1} parent=39 // pred_check_branch
          %692 = sbr.rel (%p690) target = $region44
        $region43: #{cnn_transformer_net.1} parent=39 // pred_region
          %s693 = sand.u32 %s53, 1
          %s694 = sand.u32 %s53, 1
          %s695 = smul.addr %s694, 144
          %s696 = scalar_lea.vmem [#allocation3], %s695
          %s697 = smul.addr %s38, 2
          %s698 = smul.addr %s697, 8
          %s699 = scalar_lea.vmem %s0, %s698
          // Predicated region
          $region45: #{cnn_transformer_net.1} parent=43 // pred_check
            _
          $region46: #{cnn_transformer_net.1} parent=43 // pred_check_branch
            %701 = sbr.rel (0) target = $region48
          $region47: #{cnn_transformer_net.1} parent=43 // pred_region
            // Predicated region
            $region49: #{cnn_transformer_net.1} parent=47 // pred_check
              _
            $region50: #{cnn_transformer_net.1} parent=47 // pred_check_branch
              %703 = sbr.rel (0) target = $region52
            $region51: #{cnn_transformer_net.1} parent=47 // pred_region
              loop: start=0, step=1, limit=1
              $region53: #{cnn_transformer_net.1} parent=51 // loop_pre_header
                _
              $region54: #{cnn_transformer_net.1} parent=51 // loop_header
                %s705 = sphi 0, %s709
                %p706 = scmp.ge.s32.totalorder %s705, 1
                %s710 = sphi %s699, %s699
                %s711 = sphi %s696, %s696
              $region55: #{cnn_transformer_net.1} parent=51 // loop_header_branch
                %708 = sbr.rel (%p706) target = $region59
              $region56: #{cnn_transformer_net.1} parent=51 // loop_body
                %v712 = vld [vmem:[%s710] sm:$0xff]
                %713 = vst [vmem:[%s711] sm:$0xff] %v712
                %v714 = vld [vmem:[%s710 + $0x8] sm:$0xff]
                %715 = vst [vmem:[%s711 + $0x8] sm:$0xff] %v714
                %v716 = vld [vmem:[%s710 + $0x20] sm:$0xff]
                %717 = vst [vmem:[%s711 + $0x10] sm:$0xff] %v716
                %v718 = vld [vmem:[%s710 + $0x28] sm:$0xff]
                %719 = vst [vmem:[%s711 + $0x18] sm:$0xff] %v718
                %v720 = vld [vmem:[%s710 + $0x40] sm:$0xff]
                %721 = vst [vmem:[%s711 + $0x20] sm:$0xff] %v720
                %v722 = vld [vmem:[%s710 + $0x48] sm:$0xff]
                %723 = vst [vmem:[%s711 + $0x28] sm:$0xff] %v722
                %v724 = vld [vmem:[%s710 + $0x60] sm:$0xff]
                %725 = vst [vmem:[%s711 + $0x30] sm:$0xff] %v724
                %v726 = vld [vmem:[%s710 + $0x68] sm:$0xff]
                %727 = vst [vmem:[%s711 + $0x38] sm:$0xff] %v726
                %v728 = vld [vmem:[%s710 + $0x80] sm:$0xff]
                %729 = vst [vmem:[%s711 + $0x40] sm:$0xff] %v728
                %v730 = vld [vmem:[%s710 + $0x88] sm:$0xff]
                %731 = vst [vmem:[%s711 + $0x48] sm:$0xff] %v730
                %v732 = vld [vmem:[%s710 + $0xa0] sm:$0xff]
                %733 = vst [vmem:[%s711 + $0x50] sm:$0xff] %v732
                %v734 = vld [vmem:[%s710 + $0xa8] sm:$0xff]
                %735 = vst [vmem:[%s711 + $0x58] sm:$0xff] %v734
                %v736 = vld [vmem:[%s710 + $0xc0] sm:$0xff]
                %737 = vst [vmem:[%s711 + $0x60] sm:$0xff] %v736
                %v738 = vld [vmem:[%s710 + $0xc8] sm:$0xff]
                %739 = vst [vmem:[%s711 + $0x68] sm:$0xff] %v738
                %v740 = vld [vmem:[%s710 + $0xe0] sm:$0xff]
                %741 = vst [vmem:[%s711 + $0x70] sm:$0xff] %v740
                %v742 = vld [vmem:[%s710 + $0xe8] sm:$0xff]
                %743 = vst [vmem:[%s711 + $0x78] sm:$0xff] %v742
                %v744 = vld [vmem:[%s710 + $0x100] sm:$0xff]
                %745 = vst [vmem:[%s711 + $0x80] sm:$0xff] %v744
                %v746 = vld [vmem:[%s710 + $0x108] sm:$0xff]
                %747 = vst [vmem:[%s711 + $0x88] sm:$0xff] %v746
              $region57: #{cnn_transformer_net.1} parent=51 // loop_footer
                %s709 = sadd.s32 1, %s705
              $region58: #{cnn_transformer_net.1} parent=51 // loop_footer_branch
                %704 = sbr.rel target = $region54
              $region59: #{cnn_transformer_net.1} parent=51 // loop_exit
                _
            $region52: #{cnn_transformer_net.1} parent=47 // pred_fallthru
              _
            // Predicated region
            $region60: #{cnn_transformer_net.1} parent=47 // pred_check
              _
            $region61: #{cnn_transformer_net.1} parent=47 // pred_check_branch
              %749 = sbr.rel target = $region63
            $region62: #{cnn_transformer_net.1} parent=47 // pred_region
              _
            $region63: #{cnn_transformer_net.1} parent=47 // pred_fallthru
              _
          $region48: #{cnn_transformer_net.1} parent=43 // pred_fallthru
            _
          %750 = vnop
        $region44: #{cnn_transformer_net.1} parent=39 // pred_fallthru
          _
        // Predicated region
        $region64: #{cnn_transformer_net.1} parent=39 // pred_check
          %p751 = pneg %p173
        $region65: #{cnn_transformer_net.1} parent=39 // pred_check_branch
          %753 = sbr.rel (%p751) target = $region67
        $region66: #{cnn_transformer_net.1} parent=39 // pred_region
          %p754 = scmp.lt.s32.totalorder %s39, 1
          %s755 = scalar_select %p754, %s39, 1
          %s756 = smul.addr %s755, 32
          %s757 = smul.addr %s756, 4
          %s758 = scalar_lea.vmem %s5, %s757
        $region67: #{cnn_transformer_net.1} parent=39 // pred_fallthru
          _
        // Predicated region
        $region68: #{cnn_transformer_net.1} parent=39 // pred_check
          %p759 = pneg %p199
        $region69: #{cnn_transformer_net.1} parent=39 // pred_check_branch
          %761 = sbr.rel (%p759) target = $region71
        $region70: #{cnn_transformer_net.1} parent=39 // pred_region
          %p762 = scmp.lt.s32.totalorder %s39, 1
          %s763 = scalar_select %p762, %s39, 1
          %s764 = smul.addr %s763, 2
          %s765 = scalar_lea.vmem %s6, %s764
        $region71: #{cnn_transformer_net.1} parent=39 // pred_fallthru
          _
        // Predicated region
        $region72: #{cnn_transformer_net.1} parent=39 // pred_check
          %p766 = pneg %p225
        $region73: #{cnn_transformer_net.1} parent=39 // pred_check_branch
          %768 = sbr.rel (%p766) target = $region75
        $region74: #{cnn_transformer_net.1} parent=39 // pred_region
          %p769 = scmp.lt.s32.totalorder %s39, 1
          %s770 = scalar_select %p769, %s39, 1
          %s771 = smul.addr %s770, 32
          %s772 = smul.addr %s771, 4
          %s773 = scalar_lea.vmem %s7, %s772
        $region75: #{cnn_transformer_net.1} parent=39 // pred_fallthru
          _
        // Predicated region
        $region76: #{cnn_transformer_net.1} parent=39 // pred_check
          %p774 = pneg %p251
        $region77: #{cnn_transformer_net.1} parent=39 // pred_check_branch
          %776 = sbr.rel (%p774) target = $region79
        $region78: #{cnn_transformer_net.1} parent=39 // pred_region
          %p777 = scmp.lt.s32.totalorder %s39, 1
          %s778 = scalar_select %p777, %s39, 1
          %s779 = smul.addr %s778, 2
          %s780 = scalar_lea.vmem %s8, %s779
        $region79: #{cnn_transformer_net.1} parent=39 // pred_fallthru
          _
        // Predicated region
        $region80: #{cnn_transformer_net.1} parent=39 // pred_check
          %p781 = pneg %p277
        $region81: #{cnn_transformer_net.1} parent=39 // pred_check_branch
          %783 = sbr.rel (%p781) target = $region83
        $region82: #{cnn_transformer_net.1} parent=39 // pred_region
          %p784 = scmp.lt.s32.totalorder %s39, 1
          %s785 = scalar_select %p784, %s39, 1
          %s786 = smul.addr %s785, 32
          %s787 = smul.addr %s786, 4
          %s788 = scalar_lea.vmem %s9, %s787
        $region83: #{cnn_transformer_net.1} parent=39 // pred_fallthru
          _
        // Predicated region
        $region84: #{cnn_transformer_net.1} parent=39 // pred_check
          %p789 = pneg %p303
        $region85: #{cnn_transformer_net.1} parent=39 // pred_check_branch
          %791 = sbr.rel (%p789) target = $region87
        $region86: #{cnn_transformer_net.1} parent=39 // pred_region
          %p792 = scmp.lt.s32.totalorder %s39, 1
          %s793 = scalar_select %p792, %s39, 1
          %s794 = smul.addr %s793, 2
          %s795 = scalar_lea.vmem %s10, %s794
        $region87: #{cnn_transformer_net.1} parent=39 // pred_fallthru
          _
        // Predicated region
        $region88: #{cnn_transformer_net.1} parent=39 // pred_check
          %p796 = pneg %p329
        $region89: #{cnn_transformer_net.1} parent=39 // pred_check_branch
          %798 = sbr.rel (%p796) target = $region91
        $region90: #{cnn_transformer_net.1} parent=39 // pred_region
          %p799 = scmp.lt.s32.totalorder %s39, 1
          %s800 = scalar_select %p799, %s39, 1
          %s801 = smul.addr %s800, 32
          %s802 = smul.addr %s801, 4
          %s803 = scalar_lea.vmem %s11, %s802
        $region91: #{cnn_transformer_net.1} parent=39 // pred_fallthru
          _
        // Predicated region
        $region92: #{cnn_transformer_net.1} parent=39 // pred_check
          %p804 = pneg %p355
        $region93: #{cnn_transformer_net.1} parent=39 // pred_check_branch
          %806 = sbr.rel (%p804) target = $region95
        $region94: #{cnn_transformer_net.1} parent=39 // pred_region
          %p807 = scmp.lt.s32.totalorder %s39, 1
          %s808 = scalar_select %p807, %s39, 1
          %s809 = scalar_lea.vmem %s12, %s808
        $region95: #{cnn_transformer_net.1} parent=39 // pred_fallthru
          _
        // Predicated region
        $region96: #{cnn_transformer_net.1} parent=39 // pred_check
          %p810 = pneg %p381
        $region97: #{cnn_transformer_net.1} parent=39 // pred_check_branch
          %812 = sbr.rel (%p810) target = $region99
        $region98: #{cnn_transformer_net.1} parent=39 // pred_region
          %p813 = scmp.lt.s32.totalorder %s39, 1
          %s814 = scalar_select %p813, %s39, 1
          %s815 = scalar_lea.vmem %s13, %s814
        $region99: #{cnn_transformer_net.1} parent=39 // pred_fallthru
          _
        // Predicated region
        $region100: #{cnn_transformer_net.1} parent=39 // pred_check
          %p816 = pneg %p407
        $region101: #{cnn_transformer_net.1} parent=39 // pred_check_branch
          %818 = sbr.rel (%p816) target = $region103
        $region102: #{cnn_transformer_net.1} parent=39 // pred_region
          %p819 = scmp.lt.s32.totalorder %s39, 1
          %s820 = scalar_select %p819, %s39, 1
          %s821 = scalar_lea.vmem %s14, %s820
        $region103: #{cnn_transformer_net.1} parent=39 // pred_fallthru
          _
        // Predicated region
        $region104: #{cnn_transformer_net.1} parent=39 // pred_check
          %p822 = pneg %p433
        $region105: #{cnn_transformer_net.1} parent=39 // pred_check_branch
          %824 = sbr.rel (%p822) target = $region107
        $region106: #{cnn_transformer_net.1} parent=39 // pred_region
          %p825 = scmp.lt.s32.totalorder %s39, 1
          %s826 = scalar_select %p825, %s39, 1
          %s827 = smul.addr %s826, 16
          %s828 = smul.addr %s827, 4
          %s829 = scalar_lea.vmem %s15, %s828
        $region107: #{cnn_transformer_net.1} parent=39 // pred_fallthru
          _
        // Predicated region
        $region108: #{cnn_transformer_net.1} parent=39 // pred_check
          %p830 = pneg %p459
        $region109: #{cnn_transformer_net.1} parent=39 // pred_check_branch
          %832 = sbr.rel (%p830) target = $region111
        $region110: #{cnn_transformer_net.1} parent=39 // pred_region
          %p833 = scmp.lt.s32.totalorder %s39, 1
          %s834 = scalar_select %p833, %s39, 1
          %s835 = scalar_lea.vmem %s16, %s834
        $region111: #{cnn_transformer_net.1} parent=39 // pred_fallthru
          _
        // Predicated region
        $region112: #{cnn_transformer_net.1} parent=39 // pred_check
          %p836 = pneg %p485
        $region113: #{cnn_transformer_net.1} parent=39 // pred_check_branch
          %838 = sbr.rel (%p836) target = $region115
        $region114: #{cnn_transformer_net.1} parent=39 // pred_region
          %p839 = scmp.lt.s32.totalorder %s39, 1
          %s840 = scalar_select %p839, %s39, 1
          %s841 = smul.addr %s840, 16
          %s842 = smul.addr %s841, 4
          %s843 = scalar_lea.vmem %s17, %s842
        $region115: #{cnn_transformer_net.1} parent=39 // pred_fallthru
          _
        // Predicated region
        $region116: #{cnn_transformer_net.1} parent=39 // pred_check
          %p844 = pneg %p511
        $region117: #{cnn_transformer_net.1} parent=39 // pred_check_branch
          %846 = sbr.rel (%p844) target = $region119
        $region118: #{cnn_transformer_net.1} parent=39 // pred_region
          %p847 = scmp.lt.s32.totalorder %s39, 1
          %s848 = scalar_select %p847, %s39, 1
          %s849 = scalar_lea.vmem %s18, %s848
        $region119: #{cnn_transformer_net.1} parent=39 // pred_fallthru
          _
        // Predicated region
        $region120: #{cnn_transformer_net.1} parent=39 // pred_check
          %p850 = pneg %p537
        $region121: #{cnn_transformer_net.1} parent=39 // pred_check_branch
          %852 = sbr.rel (%p850) target = $region123
        $region122: #{cnn_transformer_net.1} parent=39 // pred_region
          %p853 = scmp.lt.s32.totalorder %s39, 1
          %s854 = scalar_select %p853, %s39, 1
          %s855 = scalar_lea.vmem %s19, %s854
        $region123: #{cnn_transformer_net.1} parent=39 // pred_fallthru
          _
        // Predicated region
        $region124: #{cnn_transformer_net.1} parent=39 // pred_check
          %p856 = pneg %p563
        $region125: #{cnn_transformer_net.1} parent=39 // pred_check_branch
          %858 = sbr.rel (%p856) target = $region127
        $region126: #{cnn_transformer_net.1} parent=39 // pred_region
          %p859 = scmp.lt.s32.totalorder %s39, 1
          %s860 = scalar_select %p859, %s39, 1
          %s861 = scalar_lea.vmem %s20, %s860
        $region127: #{cnn_transformer_net.1} parent=39 // pred_fallthru
          _
      $region40: #{cnn_transformer_net.1} parent=5 // pred_fallthru
        _
      %p862 = scmp.le.s32.totalorder 1, %s31
      %p863 = scmp.lt.s32.totalorder %s31, 5
      %p864 = pnand %p862, %p863
      %p865 = pneg %p864
      // Predicated region
      $region128: #{cnn_transformer_net.1} parent=5 // pred_check
        _
      $region129: #{cnn_transformer_net.1} parent=5 // pred_check_branch
        %867 = sbr.rel (%p864) target = $region131
      $region130: #{cnn_transformer_net.1} parent=5 // pred_region
        %s868 = ssub.s32 %s31, 1
        %s869 = sand.u32 %s56, 1
        %s870 = sand.u32 %s56, 1
        %s871 = smul.addr %s870, 144
        %s872 = scalar_lea.vmem [#allocation3], %s871
        // Predicated region
        $region132: #{cnn_transformer_net.1} parent=130 // pred_check
          %p873 = pneg %p69
        $region133: #{cnn_transformer_net.1} parent=130 // pred_check_branch
          %875 = sbr.rel (%p873) target = $region135
        $region134: #{cnn_transformer_net.1} parent=130 // pred_region
          _
        $region135: #{cnn_transformer_net.1} parent=130 // pred_fallthru
          _
        // Predicated region
        $region136: #{cnn_transformer_net.1} parent=130 // pred_check
          %p876 = pneg %p90
        $region137: #{cnn_transformer_net.1} parent=130 // pred_check_branch
          %878 = sbr.rel (%p876) target = $region139
        $region138: #{cnn_transformer_net.1} parent=130 // pred_region
          %880 = dma.done [#allocation5], 256
        $region139: #{cnn_transformer_net.1} parent=130 // pred_fallthru
          _
        // Predicated region
        $region140: #{cnn_transformer_net.1} parent=130 // pred_check
          %p881 = pneg %p111
        $region141: #{cnn_transformer_net.1} parent=130 // pred_check_branch
          %883 = sbr.rel (%p881) target = $region143
        $region142: #{cnn_transformer_net.1} parent=130 // pred_region
          %885 = dma.done [#allocation7], 16
        $region143: #{cnn_transformer_net.1} parent=130 // pred_fallthru
          _
        %886 = sfence
        %s887 = sand.u32 %s56, 1
        %s888 = sand.u32 %s56, 1
        %s889 = smul.addr %s888, 144
        %s890 = scalar_lea.vmem [#allocation3], %s889
        %p891 = pneg %p69
        %p892 = pneg %p66
        %p893 = pneg %p90
        %p894 = pneg %p87
        %p895 = pneg %p111
        %p896 = pneg %p108
        %p897 = pneg %p132
        %p898 = pneg %p129
        %p899 = pneg %p153
        %p900 = pneg %p150
        %p901 = scmp.lt.s32.totalorder %s41, 1
        %s902 = scalar_select %p901, %s41, 1
        %s903 = smul.addr %s902, 32
        %s904 = smul.addr %s903, 4
        %s905 = scalar_lea.vmem %s5, %s904
        %p906 = pneg %p179
        %p907 = pneg %p176
        %p908 = scmp.lt.s32.totalorder %s41, 1
        %s909 = scalar_select %p908, %s41, 1
        %s910 = smul.addr %s909, 2
        %s911 = scalar_lea.vmem %s6, %s910
        %p912 = pneg %p205
        %p913 = pneg %p202
        %p914 = scmp.lt.s32.totalorder %s41, 1
        %s915 = scalar_select %p914, %s41, 1
        %s916 = smul.addr %s915, 32
        %s917 = smul.addr %s916, 4
        %s918 = scalar_lea.vmem %s7, %s917
        %p919 = pneg %p231
        %p920 = pneg %p228
        %p921 = scmp.lt.s32.totalorder %s41, 1
        %s922 = scalar_select %p921, %s41, 1
        %s923 = smul.addr %s922, 2
        %s924 = scalar_lea.vmem %s8, %s923
        %p925 = pneg %p257
        %p926 = pneg %p254
        %p927 = scmp.lt.s32.totalorder %s41, 1
        %s928 = scalar_select %p927, %s41, 1
        %s929 = smul.addr %s928, 32
        %s930 = smul.addr %s929, 4
        %s931 = scalar_lea.vmem %s9, %s930
        %p932 = pneg %p283
        %p933 = pneg %p280
        %p934 = scmp.lt.s32.totalorder %s41, 1
        %s935 = scalar_select %p934, %s41, 1
        %s936 = smul.addr %s935, 2
        %s937 = scalar_lea.vmem %s10, %s936
        %p938 = pneg %p309
        %p939 = pneg %p306
        %p940 = scmp.lt.s32.totalorder %s41, 1
        %s941 = scalar_select %p940, %s41, 1
        %s942 = smul.addr %s941, 32
        %s943 = smul.addr %s942, 4
        %s944 = scalar_lea.vmem %s11, %s943
        %p945 = pneg %p335
        %p946 = pneg %p332
        %p947 = scmp.lt.s32.totalorder %s41, 1
        %s948 = scalar_select %p947, %s41, 1
        %s949 = scalar_lea.vmem %s12, %s948
        %p950 = pneg %p361
        %p951 = pneg %p358
        %p952 = scmp.lt.s32.totalorder %s41, 1
        %s953 = scalar_select %p952, %s41, 1
        %s954 = scalar_lea.vmem %s13, %s953
        %p955 = pneg %p387
        %p956 = pneg %p384
        %p957 = scmp.lt.s32.totalorder %s41, 1
        %s958 = scalar_select %p957, %s41, 1
        %s959 = scalar_lea.vmem %s14, %s958
        %p960 = pneg %p413
        %p961 = pneg %p410
        %p962 = scmp.lt.s32.totalorder %s41, 1
        %s963 = scalar_select %p962, %s41, 1
        %s964 = smul.addr %s963, 16
        %s965 = smul.addr %s964, 4
        %s966 = scalar_lea.vmem %s15, %s965
        %p967 = pneg %p439
        %p968 = pneg %p436
        %p969 = scmp.lt.s32.totalorder %s41, 1
        %s970 = scalar_select %p969, %s41, 1
        %s971 = scalar_lea.vmem %s16, %s970
        %p972 = pneg %p465
        %p973 = pneg %p462
        %p974 = scmp.lt.s32.totalorder %s41, 1
        %s975 = scalar_select %p974, %s41, 1
        %s976 = smul.addr %s975, 16
        %s977 = smul.addr %s976, 4
        %s978 = scalar_lea.vmem %s17, %s977
        %p979 = pneg %p491
        %p980 = pneg %p488
        %p981 = scmp.lt.s32.totalorder %s41, 1
        %s982 = scalar_select %p981, %s41, 1
        %s983 = scalar_lea.vmem %s18, %s982
        %p984 = pneg %p517
        %p985 = pneg %p514
        %p986 = scmp.lt.s32.totalorder %s41, 1
        %s987 = scalar_select %p986, %s41, 1
        %s988 = scalar_lea.vmem %s19, %s987
        %p989 = pneg %p543
        %p990 = pneg %p540
        %p991 = scmp.lt.s32.totalorder %s41, 1
        %s992 = scalar_select %p991, %s41, 1
        %s993 = scalar_lea.vmem %s20, %s992
        %p994 = pneg %p569
        %p995 = pneg %p566
        %p996 = pneg %p590
        %p997 = pneg %p587
        %p998 = pneg %p611
        %p999 = pneg %p608
        %p1000 = pneg %p637
        %p1001 = pneg %p634
        %p1002 = scmp.lt.s32.totalorder %s40, 1
        %s1003 = scalar_select %p1002, %s40, 1
        %s1004 = smul.addr %s1003, 2
        %s1005 = smul.addr %s1004, 8
        %s1006 = scalar_lea.vmem %s23, %s1005
        %p1007 = scmp.lt.s32.totalorder %s41, 1
        %s1008 = scalar_select %p1007, %s41, 1
        %s1009 = smul.addr %s1008, 32
        %s1010 = smul.addr %s1009, 4
        %s1011 = scalar_lea.vmem %s5, %s1010
        %p1012 = scmp.lt.s32.totalorder %s41, 1
        %s1013 = scalar_select %p1012, %s41, 1
        %s1014 = smul.addr %s1013, 2
        %s1015 = scalar_lea.vmem %s6, %s1014
        %p1016 = scmp.lt.s32.totalorder %s41, 1
        %s1017 = scalar_select %p1016, %s41, 1
        %s1018 = smul.addr %s1017, 32
        %s1019 = smul.addr %s1018, 4
        %s1020 = scalar_lea.vmem %s7, %s1019
        %p1021 = scmp.lt.s32.totalorder %s41, 1
        %s1022 = scalar_select %p1021, %s41, 1
        %s1023 = smul.addr %s1022, 2
        %s1024 = scalar_lea.vmem %s8, %s1023
        %p1025 = scmp.lt.s32.totalorder %s41, 1
        %s1026 = scalar_select %p1025, %s41, 1
        %s1027 = smul.addr %s1026, 32
        %s1028 = smul.addr %s1027, 4
        %s1029 = scalar_lea.vmem %s9, %s1028
        %p1030 = scmp.lt.s32.totalorder %s41, 1
        %s1031 = scalar_select %p1030, %s41, 1
        %s1032 = smul.addr %s1031, 2
        %s1033 = scalar_lea.vmem %s10, %s1032
        %p1034 = scmp.lt.s32.totalorder %s41, 1
        %s1035 = scalar_select %p1034, %s41, 1
        %s1036 = smul.addr %s1035, 32
        %s1037 = smul.addr %s1036, 4
        %s1038 = scalar_lea.vmem %s11, %s1037
        %p1039 = scmp.lt.s32.totalorder %s41, 1
        %s1040 = scalar_select %p1039, %s41, 1
        %s1041 = scalar_lea.vmem %s12, %s1040
        %p1042 = scmp.lt.s32.totalorder %s41, 1
        %s1043 = scalar_select %p1042, %s41, 1
        %s1044 = scalar_lea.vmem %s13, %s1043
        %p1045 = scmp.lt.s32.totalorder %s41, 1
        %s1046 = scalar_select %p1045, %s41, 1
        %s1047 = scalar_lea.vmem %s14, %s1046
        %p1048 = scmp.lt.s32.totalorder %s41, 1
        %s1049 = scalar_select %p1048, %s41, 1
        %s1050 = smul.addr %s1049, 16
        %s1051 = smul.addr %s1050, 4
        %s1052 = scalar_lea.vmem %s15, %s1051
        %p1053 = scmp.lt.s32.totalorder %s41, 1
        %s1054 = scalar_select %p1053, %s41, 1
        %s1055 = scalar_lea.vmem %s16, %s1054
        %p1056 = scmp.lt.s32.totalorder %s41, 1
        %s1057 = scalar_select %p1056, %s41, 1
        %s1058 = smul.addr %s1057, 16
        %s1059 = smul.addr %s1058, 4
        %s1060 = scalar_lea.vmem %s17, %s1059
        %p1061 = scmp.lt.s32.totalorder %s41, 1
        %s1062 = scalar_select %p1061, %s41, 1
        %s1063 = scalar_lea.vmem %s18, %s1062
        %p1064 = scmp.lt.s32.totalorder %s41, 1
        %s1065 = scalar_select %p1064, %s41, 1
        %s1066 = scalar_lea.vmem %s19, %s1065
        %p1067 = scmp.lt.s32.totalorder %s41, 1
        %s1068 = scalar_select %p1067, %s41, 1
        %s1069 = scalar_lea.vmem %s20, %s1068
        %p1070 = scmp.lt.s32.totalorder %s40, 1
        %s1071 = scalar_select %p1070, %s40, 1
        %s1072 = smul.addr %s1071, 2
        %s1073 = smul.addr %s1072, 8
        %s1074 = scalar_lea.vmem %s23, %s1073
        %p1076 = scmp.eq.s32.totalorder %s41, 0
        // Predicated region
        $region144: #{cnn_transformer_net.1} parent=130 // pred_check
          %p1077 = pneg %p1076
        $region145: #{cnn_transformer_net.1} parent=130 // pred_check_branch
          %1079 = sbr.rel (%p1077) target = $region147
        $region146: #{cnn_transformer_net.1} parent=130 // pred_region
          %v1080 = vld [vmem:[%s872] sm:$0xff]
          %v1081 = vld [vmem:[%s872 + $0x8] sm:$0xff]
          %s1082 = sld [smem:[#allocation4]]
          %v1083 = vstv %s1082
          %v1084 = vmul.f32 %v1080, %v1083
          %v1085 = vmul.f32 %v1081, %v1083
          %s1086 = scalar_lea.vmem %s872, 16 [#allocation3]
          %v1087 = vld [vmem:[%s1086] sm:$0xff]
          %v1088 = vld [vmem:[%s1086 + $0x8] sm:$0xff]
          %s1089 = sld [smem:[#allocation4 + $0x80]]
          %v1090 = vstv %s1089
          %v1091 = vmul.f32 %v1087, %v1090
          %v1092 = vmul.f32 %v1088, %v1090
          %v1093 = vadd.f32 %v1084, %v1091
          %v1094 = vadd.f32 %v1085, %v1092
          %s1095 = scalar_lea.vmem %s872, 32 [#allocation3]
          %v1096 = vld [vmem:[%s1095] sm:$0xff]
          %v1097 = vld [vmem:[%s1095 + $0x8] sm:$0xff]
          %s1098 = sld [smem:[#allocation4 + $0x100]]
          %v1099 = vstv %s1098
          %v1100 = vmul.f32 %v1096, %v1099
          %v1101 = vmul.f32 %v1097, %v1099
          %v1102 = vadd.f32 %v1093, %v1100
          %v1103 = vadd.f32 %v1094, %v1101
          %s1104 = scalar_lea.vmem %s872, 48 [#allocation3]
          %v1105 = vld [vmem:[%s1104] sm:$0xff]
          %v1106 = vld [vmem:[%s1104 + $0x8] sm:$0xff]
          %s1107 = sld [smem:[#allocation4 + $0x180]]
          %v1108 = vstv %s1107
          %v1109 = vmul.f32 %v1105, %v1108
          %v1110 = vmul.f32 %v1106, %v1108
          %v1111 = vadd.f32 %v1102, %v1109
          %v1112 = vadd.f32 %v1103, %v1110
          %s1113 = scalar_lea.vmem %s872, 64 [#allocation3]
          %v1114 = vld [vmem:[%s1113] sm:$0xff]
          %v1115 = vld [vmem:[%s1113 + $0x8] sm:$0xff]
          %s1116 = sld [smem:[#allocation4 + $0x200]]
          %v1117 = vstv %s1116
          %v1118 = vmul.f32 %v1114, %v1117
          %v1119 = vmul.f32 %v1115, %v1117
          %v1120 = vadd.f32 %v1111, %v1118
          %v1121 = vadd.f32 %v1112, %v1119
          %s1122 = scalar_lea.vmem %s872, 80 [#allocation3]
          %v1123 = vld [vmem:[%s1122] sm:$0xff]
          %v1124 = vld [vmem:[%s1122 + $0x8] sm:$0xff]
          %s1125 = sld [smem:[#allocation4 + $0x280]]
          %v1126 = vstv %s1125
          %v1127 = vmul.f32 %v1123, %v1126
          %v1128 = vmul.f32 %v1124, %v1126
          %v1129 = vadd.f32 %v1120, %v1127
          %v1130 = vadd.f32 %v1121, %v1128
          %s1131 = scalar_lea.vmem %s872, 96 [#allocation3]
          %v1132 = vld [vmem:[%s1131] sm:$0xff]
          %v1133 = vld [vmem:[%s1131 + $0x8] sm:$0xff]
          %s1134 = sld [smem:[#allocation4 + $0x300]]
          %v1135 = vstv %s1134
          %v1136 = vmul.f32 %v1132, %v1135
          %v1137 = vmul.f32 %v1133, %v1135
          %v1138 = vadd.f32 %v1129, %v1136
          %v1139 = vadd.f32 %v1130, %v1137
          %s1140 = scalar_lea.vmem %s872, 112 [#allocation3]
          %v1141 = vld [vmem:[%s1140] sm:$0xff]
          %v1142 = vld [vmem:[%s1140 + $0x8] sm:$0xff]
          %s1143 = sld [smem:[#allocation4 + $0x380]]
          %v1144 = vstv %s1143
          %v1145 = vmul.f32 %v1141, %v1144
          %v1146 = vmul.f32 %v1142, %v1144
          %v1147 = vadd.f32 %v1138, %v1145
          %v1148 = vadd.f32 %v1139, %v1146
          %s1149 = scalar_lea.vmem %s872, 128 [#allocation3]
          %v1150 = vld [vmem:[%s1149] sm:$0xff]
          %v1151 = vld [vmem:[%s1149 + $0x8] sm:$0xff]
          %s1152 = sld [smem:[#allocation4 + $0x400]]
          %v1153 = vstv %s1152
          %v1154 = vmul.f32 %v1150, %v1153
          %v1155 = vmul.f32 %v1151, %v1153
          %v1156 = vadd.f32 %v1147, %v1154
          %v1157 = vadd.f32 %v1148, %v1155
          %s1158 = sld [smem:[#allocation6]]
          %v1159 = vstv %s1158
          %v1160 = vadd.f32 %v1156, %v1159
          %v1161 = vadd.f32 %v1157, %v1159
          %v1162 = vmax.f32 %v1160, 0.0
          %v1163 = vmax.f32 %v1161, 0.0
          %v1164 = vadd.f32 %v1162, %v1163
          %1165 = vadd.xlane.f32.xlu0 %v1164
          %v1166 = vpop.xlane.xlu0 %1165
          %v1167 = vmul.f32 %v1166, 0.00390625
          %v1168 = vld [vmem:[%s3] sm:$0x1]
          %v1169 = vperm.slane %v1168, 0
          %v1170 = vmul.f32 %v1167, %v1169
          %v1171 = vadd.f32 %v1170, 0.0
          %s1172 = sld [smem:[#allocation4 + $0x1]]
          %v1173 = vstv %s1172
          %v1174 = vmul.f32 %v1080, %v1173
          %v1175 = vmul.f32 %v1081, %v1173
          %s1176 = sld [smem:[#allocation4 + $0x81]]
          %v1177 = vstv %s1176
          %v1178 = vmul.f32 %v1087, %v1177
          %v1179 = vmul.f32 %v1088, %v1177
          %v1180 = vadd.f32 %v1174, %v1178
          %v1181 = vadd.f32 %v1175, %v1179
          %s1182 = sld [smem:[#allocation4 + $0x101]]
          %v1183 = vstv %s1182
          %v1184 = vmul.f32 %v1096, %v1183
          %v1185 = vmul.f32 %v1097, %v1183
          %v1186 = vadd.f32 %v1180, %v1184
          %v1187 = vadd.f32 %v1181, %v1185
          %s1188 = sld [smem:[#allocation4 + $0x181]]
          %v1189 = vstv %s1188
          %v1190 = vmul.f32 %v1105, %v1189
          %v1191 = vmul.f32 %v1106, %v1189
          %v1192 = vadd.f32 %v1186, %v1190
          %v1193 = vadd.f32 %v1187, %v1191
          %s1194 = sld [smem:[#allocation4 + $0x201]]
          %v1195 = vstv %s1194
          %v1196 = vmul.f32 %v1114, %v1195
          %v1197 = vmul.f32 %v1115, %v1195
          %v1198 = vadd.f32 %v1192, %v1196
          %v1199 = vadd.f32 %v1193, %v1197
          %s1200 = sld [smem:[#allocation4 + $0x281]]
          %v1201 = vstv %s1200
          %v1202 = vmul.f32 %v1123, %v1201
          %v1203 = vmul.f32 %v1124, %v1201
          %v1204 = vadd.f32 %v1198, %v1202
          %v1205 = vadd.f32 %v1199, %v1203
          %s1206 = sld [smem:[#allocation4 + $0x301]]
          %v1207 = vstv %s1206
          %v1208 = vmul.f32 %v1132, %v1207
          %v1209 = vmul.f32 %v1133, %v1207
          %v1210 = vadd.f32 %v1204, %v1208
          %v1211 = vadd.f32 %v1205, %v1209
          %s1212 = sld [smem:[#allocation4 + $0x381]]
          %v1213 = vstv %s1212
          %v1214 = vmul.f32 %v1141, %v1213
          %v1215 = vmul.f32 %v1142, %v1213
          %v1216 = vadd.f32 %v1210, %v1214
          %v1217 = vadd.f32 %v1211, %v1215
          %s1218 = sld [smem:[#allocation4 + $0x401]]
          %v1219 = vstv %s1218
          %v1220 = vmul.f32 %v1150, %v1219
          %v1221 = vmul.f32 %v1151, %v1219
          %v1222 = vadd.f32 %v1216, %v1220
          %v1223 = vadd.f32 %v1217, %v1221
          %s1224 = sld [smem:[#allocation6 + $0x1]]
          %v1225 = vstv %s1224
          %v1226 = vadd.f32 %v1222, %v1225
          %v1227 = vadd.f32 %v1223, %v1225
          %v1228 = vmax.f32 %v1226, 0.0
          %v1229 = vmax.f32 %v1227, 0.0
          %v1230 = vadd.f32 %v1228, %v1229
          %1231 = vadd.xlane.f32.xlu0 %v1230
          %v1232 = vpop.xlane.xlu0 %1231
          %v1233 = vmul.f32 %v1232, 0.00390625
          %v1234 = vld [vmem:[%s3 + $0x1] sm:$0x1]
          %v1235 = vperm.slane %v1234, 0
          %v1236 = vmul.f32 %v1233, %v1235
          %v1237 = vadd.f32 %v1171, %v1236
          %s1238 = sld [smem:[#allocation4 + $0x2]]
          %v1239 = vstv %s1238
          %v1240 = vmul.f32 %v1080, %v1239
          %v1241 = vmul.f32 %v1081, %v1239
          %s1242 = sld [smem:[#allocation4 + $0x82]]
          %v1243 = vstv %s1242
          %v1244 = vmul.f32 %v1087, %v1243
          %v1245 = vmul.f32 %v1088, %v1243
          %v1246 = vadd.f32 %v1240, %v1244
          %v1247 = vadd.f32 %v1241, %v1245
          %s1248 = sld [smem:[#allocation4 + $0x102]]
          %v1249 = vstv %s1248
          %v1250 = vmul.f32 %v1096, %v1249
          %v1251 = vmul.f32 %v1097, %v1249
          %v1252 = vadd.f32 %v1246, %v1250
          %v1253 = vadd.f32 %v1247, %v1251
          %s1254 = sld [smem:[#allocation4 + $0x182]]
          %v1255 = vstv %s1254
          %v1256 = vmul.f32 %v1105, %v1255
          %v1257 = vmul.f32 %v1106, %v1255
          %v1258 = vadd.f32 %v1252, %v1256
          %v1259 = vadd.f32 %v1253, %v1257
          %s1260 = sld [smem:[#allocation4 + $0x202]]
          %v1261 = vstv %s1260
          %v1262 = vmul.f32 %v1114, %v1261
          %v1263 = vmul.f32 %v1115, %v1261
          %v1264 = vadd.f32 %v1258, %v1262
          %v1265 = vadd.f32 %v1259, %v1263
          %s1266 = sld [smem:[#allocation4 + $0x282]]
          %v1267 = vstv %s1266
          %v1268 = vmul.f32 %v1123, %v1267
          %v1269 = vmul.f32 %v1124, %v1267
          %v1270 = vadd.f32 %v1264, %v1268
          %v1271 = vadd.f32 %v1265, %v1269
          %s1272 = sld [smem:[#allocation4 + $0x302]]
          %v1273 = vstv %s1272
          %v1274 = vmul.f32 %v1132, %v1273
          %v1275 = vmul.f32 %v1133, %v1273
          %v1276 = vadd.f32 %v1270, %v1274
          %v1277 = vadd.f32 %v1271, %v1275
          %s1278 = sld [smem:[#allocation4 + $0x382]]
          %v1279 = vstv %s1278
          %v1280 = vmul.f32 %v1141, %v1279
          %v1281 = vmul.f32 %v1142, %v1279
          %v1282 = vadd.f32 %v1276, %v1280
          %v1283 = vadd.f32 %v1277, %v1281
          %s1284 = sld [smem:[#allocation4 + $0x402]]
          %v1285 = vstv %s1284
          %v1286 = vmul.f32 %v1150, %v1285
          %v1287 = vmul.f32 %v1151, %v1285
          %v1288 = vadd.f32 %v1282, %v1286
          %v1289 = vadd.f32 %v1283, %v1287
          %s1290 = sld [smem:[#allocation6 + $0x2]]
          %v1291 = vstv %s1290
          %v1292 = vadd.f32 %v1288, %v1291
          %v1293 = vadd.f32 %v1289, %v1291
          %v1294 = vmax.f32 %v1292, 0.0
          %v1295 = vmax.f32 %v1293, 0.0
          %v1296 = vadd.f32 %v1294, %v1295
          %1297 = vadd.xlane.f32.xlu0 %v1296
          %v1298 = vpop.xlane.xlu0 %1297
          %v1299 = vmul.f32 %v1298, 0.00390625
          %v1300 = vld [vmem:[%s3 + $0x2] sm:$0x1]
          %v1301 = vperm.slane %v1300, 0
          %v1302 = vmul.f32 %v1299, %v1301
          %v1303 = vadd.f32 %v1237, %v1302
          %s1304 = sld [smem:[#allocation4 + $0x3]]
          %v1305 = vstv %s1304
          %v1306 = vmul.f32 %v1080, %v1305
          %v1307 = vmul.f32 %v1081, %v1305
          %s1308 = sld [smem:[#allocation4 + $0x83]]
          %v1309 = vstv %s1308
          %v1310 = vmul.f32 %v1087, %v1309
          %v1311 = vmul.f32 %v1088, %v1309
          %v1312 = vadd.f32 %v1306, %v1310
          %v1313 = vadd.f32 %v1307, %v1311
          %s1314 = sld [smem:[#allocation4 + $0x103]]
          %v1315 = vstv %s1314
          %v1316 = vmul.f32 %v1096, %v1315
          %v1317 = vmul.f32 %v1097, %v1315
          %v1318 = vadd.f32 %v1312, %v1316
          %v1319 = vadd.f32 %v1313, %v1317
          %s1320 = sld [smem:[#allocation4 + $0x183]]
          %v1321 = vstv %s1320
          %v1322 = vmul.f32 %v1105, %v1321
          %v1323 = vmul.f32 %v1106, %v1321
          %v1324 = vadd.f32 %v1318, %v1322
          %v1325 = vadd.f32 %v1319, %v1323
          %s1326 = sld [smem:[#allocation4 + $0x203]]
          %v1327 = vstv %s1326
          %v1328 = vmul.f32 %v1114, %v1327
          %v1329 = vmul.f32 %v1115, %v1327
          %v1330 = vadd.f32 %v1324, %v1328
          %v1331 = vadd.f32 %v1325, %v1329
          %s1332 = sld [smem:[#allocation4 + $0x283]]
          %v1333 = vstv %s1332
          %v1334 = vmul.f32 %v1123, %v1333
          %v1335 = vmul.f32 %v1124, %v1333
          %v1336 = vadd.f32 %v1330, %v1334
          %v1337 = vadd.f32 %v1331, %v1335
          %s1338 = sld [smem:[#allocation4 + $0x303]]
          %v1339 = vstv %s1338
          %v1340 = vmul.f32 %v1132, %v1339
          %v1341 = vmul.f32 %v1133, %v1339
          %v1342 = vadd.f32 %v1336, %v1340
          %v1343 = vadd.f32 %v1337, %v1341
          %s1344 = sld [smem:[#allocation4 + $0x383]]
          %v1345 = vstv %s1344
          %v1346 = vmul.f32 %v1141, %v1345
          %v1347 = vmul.f32 %v1142, %v1345
          %v1348 = vadd.f32 %v1342, %v1346
          %v1349 = vadd.f32 %v1343, %v1347
          %s1350 = sld [smem:[#allocation4 + $0x403]]
          %v1351 = vstv %s1350
          %v1352 = vmul.f32 %v1150, %v1351
          %v1353 = vmul.f32 %v1151, %v1351
          %v1354 = vadd.f32 %v1348, %v1352
          %v1355 = vadd.f32 %v1349, %v1353
          %s1356 = sld [smem:[#allocation6 + $0x3]]
          %v1357 = vstv %s1356
          %v1358 = vadd.f32 %v1354, %v1357
          %v1359 = vadd.f32 %v1355, %v1357
          %v1360 = vmax.f32 %v1358, 0.0
          %v1361 = vmax.f32 %v1359, 0.0
          %v1362 = vadd.f32 %v1360, %v1361
          %1363 = vadd.xlane.f32.xlu0 %v1362
          %v1364 = vpop.xlane.xlu0 %1363
          %v1365 = vmul.f32 %v1364, 0.00390625
          %v1366 = vld [vmem:[%s3 + $0x3] sm:$0x1]
          %v1367 = vperm.slane %v1366, 0
          %v1368 = vmul.f32 %v1365, %v1367
          %v1369 = vadd.f32 %v1303, %v1368
          %s1370 = sld [smem:[#allocation4 + $0x4]]
          %v1371 = vstv %s1370
          %v1372 = vmul.f32 %v1080, %v1371
          %v1373 = vmul.f32 %v1081, %v1371
          %s1374 = sld [smem:[#allocation4 + $0x84]]
          %v1375 = vstv %s1374
          %v1376 = vmul.f32 %v1087, %v1375
          %v1377 = vmul.f32 %v1088, %v1375
          %v1378 = vadd.f32 %v1372, %v1376
          %v1379 = vadd.f32 %v1373, %v1377
          %s1380 = sld [smem:[#allocation4 + $0x104]]
          %v1381 = vstv %s1380
          %v1382 = vmul.f32 %v1096, %v1381
          %v1383 = vmul.f32 %v1097, %v1381
          %v1384 = vadd.f32 %v1378, %v1382
          %v1385 = vadd.f32 %v1379, %v1383
          %s1386 = sld [smem:[#allocation4 + $0x184]]
          %v1387 = vstv %s1386
          %v1388 = vmul.f32 %v1105, %v1387
          %v1389 = vmul.f32 %v1106, %v1387
          %v1390 = vadd.f32 %v1384, %v1388
          %v1391 = vadd.f32 %v1385, %v1389
          %s1392 = sld [smem:[#allocation4 + $0x204]]
          %v1393 = vstv %s1392
          %v1394 = vmul.f32 %v1114, %v1393
          %v1395 = vmul.f32 %v1115, %v1393
          %v1396 = vadd.f32 %v1390, %v1394
          %v1397 = vadd.f32 %v1391, %v1395
          %s1398 = sld [smem:[#allocation4 + $0x284]]
          %v1399 = vstv %s1398
          %v1400 = vmul.f32 %v1123, %v1399
          %v1401 = vmul.f32 %v1124, %v1399
          %v1402 = vadd.f32 %v1396, %v1400
          %v1403 = vadd.f32 %v1397, %v1401
          %s1404 = sld [smem:[#allocation4 + $0x304]]
          %v1405 = vstv %s1404
          %v1406 = vmul.f32 %v1132, %v1405
          %v1407 = vmul.f32 %v1133, %v1405
          %v1408 = vadd.f32 %v1402, %v1406
          %v1409 = vadd.f32 %v1403, %v1407
          %s1410 = sld [smem:[#allocation4 + $0x384]]
          %v1411 = vstv %s1410
          %v1412 = vmul.f32 %v1141, %v1411
          %v1413 = vmul.f32 %v1142, %v1411
          %v1414 = vadd.f32 %v1408, %v1412
          %v1415 = vadd.f32 %v1409, %v1413
          %s1416 = sld [smem:[#allocation4 + $0x404]]
          %v1417 = vstv %s1416
          %v1418 = vmul.f32 %v1150, %v1417
          %v1419 = vmul.f32 %v1151, %v1417
          %v1420 = vadd.f32 %v1414, %v1418
          %v1421 = vadd.f32 %v1415, %v1419
          %s1422 = sld [smem:[#allocation6 + $0x4]]
          %v1423 = vstv %s1422
          %v1424 = vadd.f32 %v1420, %v1423
          %v1425 = vadd.f32 %v1421, %v1423
          %v1426 = vmax.f32 %v1424, 0.0
          %v1427 = vmax.f32 %v1425, 0.0
          %v1428 = vadd.f32 %v1426, %v1427
          %1429 = vadd.xlane.f32.xlu0 %v1428
          %v1430 = vpop.xlane.xlu0 %1429
          %v1431 = vmul.f32 %v1430, 0.00390625
          %v1432 = vld [vmem:[%s3 + $0x4] sm:$0x1]
          %v1433 = vperm.slane %v1432, 0
          %v1434 = vmul.f32 %v1431, %v1433
          %v1435 = vadd.f32 %v1369, %v1434
          %s1436 = sld [smem:[#allocation4 + $0x5]]
          %v1437 = vstv %s1436
          %v1438 = vmul.f32 %v1080, %v1437
          %v1439 = vmul.f32 %v1081, %v1437
          %s1440 = sld [smem:[#allocation4 + $0x85]]
          %v1441 = vstv %s1440
          %v1442 = vmul.f32 %v1087, %v1441
          %v1443 = vmul.f32 %v1088, %v1441
          %v1444 = vadd.f32 %v1438, %v1442
          %v1445 = vadd.f32 %v1439, %v1443
          %s1446 = sld [smem:[#allocation4 + $0x105]]
          %v1447 = vstv %s1446
          %v1448 = vmul.f32 %v1096, %v1447
          %v1449 = vmul.f32 %v1097, %v1447
          %v1450 = vadd.f32 %v1444, %v1448
          %v1451 = vadd.f32 %v1445, %v1449
          %s1452 = sld [smem:[#allocation4 + $0x185]]
          %v1453 = vstv %s1452
          %v1454 = vmul.f32 %v1105, %v1453
          %v1455 = vmul.f32 %v1106, %v1453
          %v1456 = vadd.f32 %v1450, %v1454
          %v1457 = vadd.f32 %v1451, %v1455
          %s1458 = sld [smem:[#allocation4 + $0x205]]
          %v1459 = vstv %s1458
          %v1460 = vmul.f32 %v1114, %v1459
          %v1461 = vmul.f32 %v1115, %v1459
          %v1462 = vadd.f32 %v1456, %v1460
          %v1463 = vadd.f32 %v1457, %v1461
          %s1464 = sld [smem:[#allocation4 + $0x285]]
          %v1465 = vstv %s1464
          %v1466 = vmul.f32 %v1123, %v1465
          %v1467 = vmul.f32 %v1124, %v1465
          %v1468 = vadd.f32 %v1462, %v1466
          %v1469 = vadd.f32 %v1463, %v1467
          %s1470 = sld [smem:[#allocation4 + $0x305]]
          %v1471 = vstv %s1470
          %v1472 = vmul.f32 %v1132, %v1471
          %v1473 = vmul.f32 %v1133, %v1471
          %v1474 = vadd.f32 %v1468, %v1472
          %v1475 = vadd.f32 %v1469, %v1473
          %s1476 = sld [smem:[#allocation4 + $0x385]]
          %v1477 = vstv %s1476
          %v1478 = vmul.f32 %v1141, %v1477
          %v1479 = vmul.f32 %v1142, %v1477
          %v1480 = vadd.f32 %v1474, %v1478
          %v1481 = vadd.f32 %v1475, %v1479
          %s1482 = sld [smem:[#allocation4 + $0x405]]
          %v1483 = vstv %s1482
          %v1484 = vmul.f32 %v1150, %v1483
          %v1485 = vmul.f32 %v1151, %v1483
          %v1486 = vadd.f32 %v1480, %v1484
          %v1487 = vadd.f32 %v1481, %v1485
          %s1488 = sld [smem:[#allocation6 + $0x5]]
          %v1489 = vstv %s1488
          %v1490 = vadd.f32 %v1486, %v1489
          %v1491 = vadd.f32 %v1487, %v1489
          %v1492 = vmax.f32 %v1490, 0.0
          %v1493 = vmax.f32 %v1491, 0.0
          %v1494 = vadd.f32 %v1492, %v1493
          %1495 = vadd.xlane.f32.xlu0 %v1494
          %v1496 = vpop.xlane.xlu0 %1495
          %v1497 = vmul.f32 %v1496, 0.00390625
          %v1498 = vld [vmem:[%s3 + $0x5] sm:$0x1]
          %v1499 = vperm.slane %v1498, 0
          %v1500 = vmul.f32 %v1497, %v1499
          %v1501 = vadd.f32 %v1435, %v1500
          %s1502 = sld [smem:[#allocation4 + $0x6]]
          %v1503 = vstv %s1502
          %v1504 = vmul.f32 %v1080, %v1503
          %v1505 = vmul.f32 %v1081, %v1503
          %s1506 = sld [smem:[#allocation4 + $0x86]]
          %v1507 = vstv %s1506
          %v1508 = vmul.f32 %v1087, %v1507
          %v1509 = vmul.f32 %v1088, %v1507
          %v1510 = vadd.f32 %v1504, %v1508
          %v1511 = vadd.f32 %v1505, %v1509
          %s1512 = sld [smem:[#allocation4 + $0x106]]
          %v1513 = vstv %s1512
          %v1514 = vmul.f32 %v1096, %v1513
          %v1515 = vmul.f32 %v1097, %v1513
          %v1516 = vadd.f32 %v1510, %v1514
          %v1517 = vadd.f32 %v1511, %v1515
          %s1518 = sld [smem:[#allocation4 + $0x186]]
          %v1519 = vstv %s1518
          %v1520 = vmul.f32 %v1105, %v1519
          %v1521 = vmul.f32 %v1106, %v1519
          %v1522 = vadd.f32 %v1516, %v1520
          %v1523 = vadd.f32 %v1517, %v1521
          %s1524 = sld [smem:[#allocation4 + $0x206]]
          %v1525 = vstv %s1524
          %v1526 = vmul.f32 %v1114, %v1525
          %v1527 = vmul.f32 %v1115, %v1525
          %v1528 = vadd.f32 %v1522, %v1526
          %v1529 = vadd.f32 %v1523, %v1527
          %s1530 = sld [smem:[#allocation4 + $0x286]]
          %v1531 = vstv %s1530
          %v1532 = vmul.f32 %v1123, %v1531
          %v1533 = vmul.f32 %v1124, %v1531
          %v1534 = vadd.f32 %v1528, %v1532
          %v1535 = vadd.f32 %v1529, %v1533
          %s1536 = sld [smem:[#allocation4 + $0x306]]
          %v1537 = vstv %s1536
          %v1538 = vmul.f32 %v1132, %v1537
          %v1539 = vmul.f32 %v1133, %v1537
          %v1540 = vadd.f32 %v1534, %v1538
          %v1541 = vadd.f32 %v1535, %v1539
          %s1542 = sld [smem:[#allocation4 + $0x386]]
          %v1543 = vstv %s1542
          %v1544 = vmul.f32 %v1141, %v1543
          %v1545 = vmul.f32 %v1142, %v1543
          %v1546 = vadd.f32 %v1540, %v1544
          %v1547 = vadd.f32 %v1541, %v1545
          %s1548 = sld [smem:[#allocation4 + $0x406]]
          %v1549 = vstv %s1548
          %v1550 = vmul.f32 %v1150, %v1549
          %v1551 = vmul.f32 %v1151, %v1549
          %v1552 = vadd.f32 %v1546, %v1550
          %v1553 = vadd.f32 %v1547, %v1551
          %s1554 = sld [smem:[#allocation6 + $0x6]]
          %v1555 = vstv %s1554
          %v1556 = vadd.f32 %v1552, %v1555
          %v1557 = vadd.f32 %v1553, %v1555
          %v1558 = vmax.f32 %v1556, 0.0
          %v1559 = vmax.f32 %v1557, 0.0
          %v1560 = vadd.f32 %v1558, %v1559
          %1561 = vadd.xlane.f32.xlu0 %v1560
          %v1562 = vpop.xlane.xlu0 %1561
          %v1563 = vmul.f32 %v1562, 0.00390625
          %v1564 = vld [vmem:[%s3 + $0x6] sm:$0x1]
          %v1565 = vperm.slane %v1564, 0
          %v1566 = vmul.f32 %v1563, %v1565
          %v1567 = vadd.f32 %v1501, %v1566
          %s1568 = sld [smem:[#allocation4 + $0x7]]
          %v1569 = vstv %s1568
          %v1570 = vmul.f32 %v1080, %v1569
          %v1571 = vmul.f32 %v1081, %v1569
          %s1572 = sld [smem:[#allocation4 + $0x87]]
          %v1573 = vstv %s1572
          %v1574 = vmul.f32 %v1087, %v1573
          %v1575 = vmul.f32 %v1088, %v1573
          %v1576 = vadd.f32 %v1570, %v1574
          %v1577 = vadd.f32 %v1571, %v1575
          %s1578 = sld [smem:[#allocation4 + $0x107]]
          %v1579 = vstv %s1578
          %v1580 = vmul.f32 %v1096, %v1579
          %v1581 = vmul.f32 %v1097, %v1579
          %v1582 = vadd.f32 %v1576, %v1580
          %v1583 = vadd.f32 %v1577, %v1581
          %s1584 = sld [smem:[#allocation4 + $0x187]]
          %v1585 = vstv %s1584
          %v1586 = vmul.f32 %v1105, %v1585
          %v1587 = vmul.f32 %v1106, %v1585
          %v1588 = vadd.f32 %v1582, %v1586
          %v1589 = vadd.f32 %v1583, %v1587
          %s1590 = sld [smem:[#allocation4 + $0x207]]
          %v1591 = vstv %s1590
          %v1592 = vmul.f32 %v1114, %v1591
          %v1593 = vmul.f32 %v1115, %v1591
          %v1594 = vadd.f32 %v1588, %v1592
          %v1595 = vadd.f32 %v1589, %v1593
          %s1596 = sld [smem:[#allocation4 + $0x287]]
          %v1597 = vstv %s1596
          %v1598 = vmul.f32 %v1123, %v1597
          %v1599 = vmul.f32 %v1124, %v1597
          %v1600 = vadd.f32 %v1594, %v1598
          %v1601 = vadd.f32 %v1595, %v1599
          %s1602 = sld [smem:[#allocation4 + $0x307]]
          %v1603 = vstv %s1602
          %v1604 = vmul.f32 %v1132, %v1603
          %v1605 = vmul.f32 %v1133, %v1603
          %v1606 = vadd.f32 %v1600, %v1604
          %v1607 = vadd.f32 %v1601, %v1605
          %s1608 = sld [smem:[#allocation4 + $0x387]]
          %v1609 = vstv %s1608
          %v1610 = vmul.f32 %v1141, %v1609
          %v1611 = vmul.f32 %v1142, %v1609
          %v1612 = vadd.f32 %v1606, %v1610
          %v1613 = vadd.f32 %v1607, %v1611
          %s1614 = sld [smem:[#allocation4 + $0x407]]
          %v1615 = vstv %s1614
          %v1616 = vmul.f32 %v1150, %v1615
          %v1617 = vmul.f32 %v1151, %v1615
          %v1618 = vadd.f32 %v1612, %v1616
          %v1619 = vadd.f32 %v1613, %v1617
          %s1620 = sld [smem:[#allocation6 + $0x7]]
          %v1621 = vstv %s1620
          %v1622 = vadd.f32 %v1618, %v1621
          %v1623 = vadd.f32 %v1619, %v1621
          %v1624 = vmax.f32 %v1622, 0.0
          %v1625 = vmax.f32 %v1623, 0.0
          %v1626 = vadd.f32 %v1624, %v1625
          %1627 = vadd.xlane.f32.xlu0 %v1626
          %v1628 = vpop.xlane.xlu0 %1627
          %v1629 = vmul.f32 %v1628, 0.00390625
          %v1630 = vld [vmem:[%s3 + $0x7] sm:$0x1]
          %v1631 = vperm.slane %v1630, 0
          %v1632 = vmul.f32 %v1629, %v1631
          %v1633 = vadd.f32 %v1567, %v1632
          %v1634 = vld [vmem:[%s4] sm:$0x1]
          %v1636 = vperm.slane %v1634, 0
          %v1638 = vadd.f32 %v1633, %v1636
          %1639 = vst [vmem:[#allocation2] sm:$0xff] %v1638
        $region147: #{cnn_transformer_net.1} parent=130 // pred_fallthru
          _
        %v1640 = vlaneseq
        %v1641 = vshrl.u32 %v1640, 7
        %v1642 = vlaneseq
        %v1643 = vand.u32 %v1642, 127
        %vm1644 = vcmp.gt.s32.totalorder %v1643, %v1641
        %v1645 = vld [vmem:[#allocation2] sm:$0xff]
        %v1646 = vpack.c.bf16 %v1645, %v1645
        %v1647 = vld [vmem:[%s1011] sm:$0xf]
        %v1648 = vld [vmem:[%s1011 + $0x4] sm:$0xf]
        %v1649 = vld [vmem:[%s1011 + $0x8] sm:$0xf]
        %v1650 = vld [vmem:[%s1011 + $0xc] sm:$0xf]
        %v1651 = vld [vmem:[%s1011 + $0x10] sm:$0xf]
        %v1652 = vld [vmem:[%s1011 + $0x14] sm:$0xf]
        %v1653 = vld [vmem:[%s1011 + $0x18] sm:$0xf]
        %v1654 = vld [vmem:[%s1011 + $0x1c] sm:$0xf]
        %v1655 = vld [vmem:[%s1011 + $0x20] sm:$0xf]
        %v1656 = vld [vmem:[%s1011 + $0x24] sm:$0xf]
        %v1657 = vld [vmem:[%s1011 + $0x28] sm:$0xf]
        %v1658 = vld [vmem:[%s1011 + $0x2c] sm:$0xf]
        %v1659 = vld [vmem:[%s1011 + $0x30] sm:$0xf]
        %v1660 = vld [vmem:[%s1011 + $0x34] sm:$0xf]
        %v1661 = vld [vmem:[%s1011 + $0x38] sm:$0xf]
        %v1662 = vld [vmem:[%s1011 + $0x3c] sm:$0xf]
        %v1663 = vld [vmem:[%s1011 + $0x40] sm:$0xf]
        %v1664 = vld [vmem:[%s1011 + $0x44] sm:$0xf]
        %v1665 = vld [vmem:[%s1011 + $0x48] sm:$0xf]
        %v1666 = vld [vmem:[%s1011 + $0x4c] sm:$0xf]
        %v1667 = vld [vmem:[%s1011 + $0x50] sm:$0xf]
        %v1668 = vld [vmem:[%s1011 + $0x54] sm:$0xf]
        %v1669 = vld [vmem:[%s1011 + $0x58] sm:$0xf]
        %v1670 = vld [vmem:[%s1011 + $0x5c] sm:$0xf]
        %v1671 = vld [vmem:[%s1011 + $0x60] sm:$0xf]
        %v1672 = vld [vmem:[%s1011 + $0x64] sm:$0xf]
        %v1673 = vld [vmem:[%s1011 + $0x68] sm:$0xf]
        %v1674 = vld [vmem:[%s1011 + $0x6c] sm:$0xf]
        %v1675 = vld [vmem:[%s1011 + $0x70] sm:$0xf]
        %v1676 = vld [vmem:[%s1011 + $0x74] sm:$0xf]
        %v1677 = vld [vmem:[%s1011 + $0x78] sm:$0xf]
        %v1678 = vld [vmem:[%s1011 + $0x7c] sm:$0xf]
        %v1679 = vld [vmem:[%s1015] sm:$0x1]
        %v1680 = vld [vmem:[%s1015 + $0x1] sm:$0x1]
        %v1683 = vperm.slane %v1679, 0
        %v1684 = vperm.slane %v1680, 0
        %v1703 = vunpack.c.l.b16 %v1647
        %v1704 = vunpack.c.l.b16 %v1648
        %v1705 = vunpack.c.l.b16 %v1649
        %v1706 = vunpack.c.l.b16 %v1650
        %v1707 = vunpack.c.l.b16 %v1651
        %v1708 = vunpack.c.l.b16 %v1652
        %v1709 = vunpack.c.l.b16 %v1653
        %v1710 = vunpack.c.l.b16 %v1654
        %v1711 = vunpack.c.l.b16 %v1655
        %v1712 = vunpack.c.l.b16 %v1656
        %v1713 = vunpack.c.l.b16 %v1657
        %v1714 = vunpack.c.l.b16 %v1658
        %v1715 = vunpack.c.l.b16 %v1659
        %v1716 = vunpack.c.l.b16 %v1660
        %v1717 = vunpack.c.l.b16 %v1661
        %v1718 = vunpack.c.l.b16 %v1662
        %v1719 = vpack.c.b16 %v1704, %v1703
        %v1720 = vpack.c.b16 %v1706, %v1705
        %v1721 = vpack.c.b16 %v1708, %v1707
        %v1722 = vpack.c.b16 %v1710, %v1709
        %v1723 = vpack.c.b16 %v1712, %v1711
        %v1724 = vpack.c.b16 %v1714, %v1713
        %v1725 = vpack.c.b16 %v1716, %v1715
        %v1726 = vpack.c.b16 %v1718, %v1717
        %1735 = vmatpush.bf16.msra.mxu0 %v1726
        %1736 = vmatpush.bf16.msra.mxu0 %v1725
        %1737 = vmatpush.bf16.msra.mxu0 %v1724
        %1738 = vmatpush.bf16.msra.mxu0 %v1723
        %1739 = vmatpush.bf16.msra.mxu0 %v1722
        %1740 = vmatpush.bf16.msra.mxu0 %v1721
        %1741 = vmatpush.bf16.msra.mxu0 %v1720
        %1742 = vmatpush.bf16.msra.mxu0 %v1719
        %1743 = vmatmul.bf16.gmra.mxu0 %v1646
        %v1744 = vpop.f32.mrf.mxu0
        %v1745 = vadd.f32 %v1683, %v1744
        %v1746 = vpop.f32.mrf.mxu0
        %1747 = vdwg.mxu0
        %v1764 = vunpack.c.l.b16 %v1663
        %v1765 = vunpack.c.l.b16 %v1664
        %v1766 = vunpack.c.l.b16 %v1665
        %v1767 = vunpack.c.l.b16 %v1666
        %v1768 = vunpack.c.l.b16 %v1667
        %v1769 = vunpack.c.l.b16 %v1668
        %v1770 = vunpack.c.l.b16 %v1669
        %v1771 = vunpack.c.l.b16 %v1670
        %v1772 = vunpack.c.l.b16 %v1671
        %v1773 = vunpack.c.l.b16 %v1672
        %v1774 = vunpack.c.l.b16 %v1673
        %v1775 = vunpack.c.l.b16 %v1674
        %v1776 = vunpack.c.l.b16 %v1675
        %v1777 = vunpack.c.l.b16 %v1676
        %v1778 = vunpack.c.l.b16 %v1677
        %v1779 = vunpack.c.l.b16 %v1678
        %v1780 = vpack.c.b16 %v1765, %v1764
        %v1781 = vpack.c.b16 %v1767, %v1766
        %v1782 = vpack.c.b16 %v1769, %v1768
        %v1783 = vpack.c.b16 %v1771, %v1770
        %v1784 = vpack.c.b16 %v1773, %v1772
        %v1785 = vpack.c.b16 %v1775, %v1774
        %v1786 = vpack.c.b16 %v1777, %v1776
        %v1787 = vpack.c.b16 %v1779, %v1778
        %1796 = vmatpush.bf16.msra.mxu0 %v1787
        %1797 = vmatpush.bf16.msra.mxu0 %v1786
        %1798 = vmatpush.bf16.msra.mxu0 %v1785
        %1799 = vmatpush.bf16.msra.mxu0 %v1784
        %1800 = vmatpush.bf16.msra.mxu0 %v1783
        %1801 = vmatpush.bf16.msra.mxu0 %v1782
        %1802 = vmatpush.bf16.msra.mxu0 %v1781
        %1803 = vmatpush.bf16.msra.mxu0 %v1780
        %1804 = vmatmul.bf16.gmra.mxu0 %v1646
        %v1805 = vpop.f32.mrf.mxu0
        %v1806 = vadd.f32 %v1684, %v1805
        %v1807 = vpop.f32.mrf.mxu0
        %1808 = vdwg.mxu0
        %v1809 = vld [vmem:[%s1020] sm:$0xf]
        %v1810 = vld [vmem:[%s1020 + $0x4] sm:$0xf]
        %v1811 = vld [vmem:[%s1020 + $0x8] sm:$0xf]
        %v1812 = vld [vmem:[%s1020 + $0xc] sm:$0xf]
        %v1813 = vld [vmem:[%s1020 + $0x10] sm:$0xf]
        %v1814 = vld [vmem:[%s1020 + $0x14] sm:$0xf]
        %v1815 = vld [vmem:[%s1020 + $0x18] sm:$0xf]
        %v1816 = vld [vmem:[%s1020 + $0x1c] sm:$0xf]
        %v1817 = vld [vmem:[%s1020 + $0x20] sm:$0xf]
        %v1818 = vld [vmem:[%s1020 + $0x24] sm:$0xf]
        %v1819 = vld [vmem:[%s1020 + $0x28] sm:$0xf]
        %v1820 = vld [vmem:[%s1020 + $0x2c] sm:$0xf]
        %v1821 = vld [vmem:[%s1020 + $0x30] sm:$0xf]
        %v1822 = vld [vmem:[%s1020 + $0x34] sm:$0xf]
        %v1823 = vld [vmem:[%s1020 + $0x38] sm:$0xf]
        %v1824 = vld [vmem:[%s1020 + $0x3c] sm:$0xf]
        %v1825 = vld [vmem:[%s1020 + $0x40] sm:$0xf]
        %v1826 = vld [vmem:[%s1020 + $0x44] sm:$0xf]
        %v1827 = vld [vmem:[%s1020 + $0x48] sm:$0xf]
        %v1828 = vld [vmem:[%s1020 + $0x4c] sm:$0xf]
        %v1829 = vld [vmem:[%s1020 + $0x50] sm:$0xf]
        %v1830 = vld [vmem:[%s1020 + $0x54] sm:$0xf]
        %v1831 = vld [vmem:[%s1020 + $0x58] sm:$0xf]
        %v1832 = vld [vmem:[%s1020 + $0x5c] sm:$0xf]
        %v1833 = vld [vmem:[%s1020 + $0x60] sm:$0xf]
        %v1834 = vld [vmem:[%s1020 + $0x64] sm:$0xf]
        %v1835 = vld [vmem:[%s1020 + $0x68] sm:$0xf]
        %v1836 = vld [vmem:[%s1020 + $0x6c] sm:$0xf]
        %v1837 = vld [vmem:[%s1020 + $0x70] sm:$0xf]
        %v1838 = vld [vmem:[%s1020 + $0x74] sm:$0xf]
        %v1839 = vld [vmem:[%s1020 + $0x78] sm:$0xf]
        %v1840 = vld [vmem:[%s1020 + $0x7c] sm:$0xf]
        %v1841 = vld [vmem:[%s1024] sm:$0x1]
        %v1842 = vld [vmem:[%s1024 + $0x1] sm:$0x1]
        %v1845 = vperm.slane %v1841, 0
        %v1846 = vperm.slane %v1842, 0
        %v1865 = vunpack.c.l.b16 %v1809
        %v1866 = vunpack.c.l.b16 %v1810
        %v1867 = vunpack.c.l.b16 %v1811
        %v1868 = vunpack.c.l.b16 %v1812
        %v1869 = vunpack.c.l.b16 %v1813
        %v1870 = vunpack.c.l.b16 %v1814
        %v1871 = vunpack.c.l.b16 %v1815
        %v1872 = vunpack.c.l.b16 %v1816
        %v1873 = vunpack.c.l.b16 %v1817
        %v1874 = vunpack.c.l.b16 %v1818
        %v1875 = vunpack.c.l.b16 %v1819
        %v1876 = vunpack.c.l.b16 %v1820
        %v1877 = vunpack.c.l.b16 %v1821
        %v1878 = vunpack.c.l.b16 %v1822
        %v1879 = vunpack.c.l.b16 %v1823
        %v1880 = vunpack.c.l.b16 %v1824
        %v1881 = vpack.c.b16 %v1866, %v1865
        %v1882 = vpack.c.b16 %v1868, %v1867
        %v1883 = vpack.c.b16 %v1870, %v1869
        %v1884 = vpack.c.b16 %v1872, %v1871
        %v1885 = vpack.c.b16 %v1874, %v1873
        %v1886 = vpack.c.b16 %v1876, %v1875
        %v1887 = vpack.c.b16 %v1878, %v1877
        %v1888 = vpack.c.b16 %v1880, %v1879
        %1897 = vmatpush.bf16.msra.mxu0 %v1888
        %1898 = vmatpush.bf16.msra.mxu0 %v1887
        %1899 = vmatpush.bf16.msra.mxu0 %v1886
        %1900 = vmatpush.bf16.msra.mxu0 %v1885
        %1901 = vmatpush.bf16.msra.mxu0 %v1884
        %1902 = vmatpush.bf16.msra.mxu0 %v1883
        %1903 = vmatpush.bf16.msra.mxu0 %v1882
        %1904 = vmatpush.bf16.msra.mxu0 %v1881
        %1905 = vmatmul.bf16.gmra.mxu0 %v1646
        %v1906 = vpop.f32.mrf.mxu0
        %v1907 = vadd.f32 %v1845, %v1906
        %v1908 = vpop.f32.mrf.mxu0
        %1909 = vdwg.mxu0
        %v1926 = vunpack.c.l.b16 %v1825
        %v1927 = vunpack.c.l.b16 %v1826
        %v1928 = vunpack.c.l.b16 %v1827
        %v1929 = vunpack.c.l.b16 %v1828
        %v1930 = vunpack.c.l.b16 %v1829
        %v1931 = vunpack.c.l.b16 %v1830
        %v1932 = vunpack.c.l.b16 %v1831
        %v1933 = vunpack.c.l.b16 %v1832
        %v1934 = vunpack.c.l.b16 %v1833
        %v1935 = vunpack.c.l.b16 %v1834
        %v1936 = vunpack.c.l.b16 %v1835
        %v1937 = vunpack.c.l.b16 %v1836
        %v1938 = vunpack.c.l.b16 %v1837
        %v1939 = vunpack.c.l.b16 %v1838
        %v1940 = vunpack.c.l.b16 %v1839
        %v1941 = vunpack.c.l.b16 %v1840
        %v1942 = vpack.c.b16 %v1927, %v1926
        %v1943 = vpack.c.b16 %v1929, %v1928
        %v1944 = vpack.c.b16 %v1931, %v1930
        %v1945 = vpack.c.b16 %v1933, %v1932
        %v1946 = vpack.c.b16 %v1935, %v1934
        %v1947 = vpack.c.b16 %v1937, %v1936
        %v1948 = vpack.c.b16 %v1939, %v1938
        %v1949 = vpack.c.b16 %v1941, %v1940
        %1958 = vmatpush.bf16.msra.mxu0 %v1949
        %1959 = vmatpush.bf16.msra.mxu0 %v1948
        %1960 = vmatpush.bf16.msra.mxu0 %v1947
        %1961 = vmatpush.bf16.msra.mxu0 %v1946
        %1962 = vmatpush.bf16.msra.mxu0 %v1945
        %1963 = vmatpush.bf16.msra.mxu0 %v1944
        %1964 = vmatpush.bf16.msra.mxu0 %v1943
        %1965 = vmatpush.bf16.msra.mxu0 %v1942
        %1966 = vmatmul.bf16.gmra.mxu0 %v1646
        %v1967 = vpop.f32.mrf.mxu0
        %v1968 = vadd.f32 %v1846, %v1967
        %v1969 = vpop.f32.mrf.mxu0
        %1970 = vdwg.mxu0
        %v1971 = vld [vmem:[%s1029] sm:$0xf]
        %v1972 = vld [vmem:[%s1029 + $0x4] sm:$0xf]
        %v1973 = vld [vmem:[%s1029 + $0x8] sm:$0xf]
        %v1974 = vld [vmem:[%s1029 + $0xc] sm:$0xf]
        %v1975 = vld [vmem:[%s1029 + $0x10] sm:$0xf]
        %v1976 = vld [vmem:[%s1029 + $0x14] sm:$0xf]
        %v1977 = vld [vmem:[%s1029 + $0x18] sm:$0xf]
        %v1978 = vld [vmem:[%s1029 + $0x1c] sm:$0xf]
        %v1979 = vld [vmem:[%s1029 + $0x20] sm:$0xf]
        %v1980 = vld [vmem:[%s1029 + $0x24] sm:$0xf]
        %v1981 = vld [vmem:[%s1029 + $0x28] sm:$0xf]
        %v1982 = vld [vmem:[%s1029 + $0x2c] sm:$0xf]
        %v1983 = vld [vmem:[%s1029 + $0x30] sm:$0xf]
        %v1984 = vld [vmem:[%s1029 + $0x34] sm:$0xf]
        %v1985 = vld [vmem:[%s1029 + $0x38] sm:$0xf]
        %v1986 = vld [vmem:[%s1029 + $0x3c] sm:$0xf]
        %v1987 = vld [vmem:[%s1029 + $0x40] sm:$0xf]
        %v1988 = vld [vmem:[%s1029 + $0x44] sm:$0xf]
        %v1989 = vld [vmem:[%s1029 + $0x48] sm:$0xf]
        %v1990 = vld [vmem:[%s1029 + $0x4c] sm:$0xf]
        %v1991 = vld [vmem:[%s1029 + $0x50] sm:$0xf]
        %v1992 = vld [vmem:[%s1029 + $0x54] sm:$0xf]
        %v1993 = vld [vmem:[%s1029 + $0x58] sm:$0xf]
        %v1994 = vld [vmem:[%s1029 + $0x5c] sm:$0xf]
        %v1995 = vld [vmem:[%s1029 + $0x60] sm:$0xf]
        %v1996 = vld [vmem:[%s1029 + $0x64] sm:$0xf]
        %v1997 = vld [vmem:[%s1029 + $0x68] sm:$0xf]
        %v1998 = vld [vmem:[%s1029 + $0x6c] sm:$0xf]
        %v1999 = vld [vmem:[%s1029 + $0x70] sm:$0xf]
        %v2000 = vld [vmem:[%s1029 + $0x74] sm:$0xf]
        %v2001 = vld [vmem:[%s1029 + $0x78] sm:$0xf]
        %v2002 = vld [vmem:[%s1029 + $0x7c] sm:$0xf]
        %v2003 = vld [vmem:[%s1033] sm:$0x1]
        %v2004 = vld [vmem:[%s1033 + $0x1] sm:$0x1]
        %v2007 = vperm.slane %v2003, 0
        %v2008 = vperm.slane %v2004, 0
        %v2027 = vunpack.c.l.b16 %v1971
        %v2028 = vunpack.c.l.b16 %v1972
        %v2029 = vunpack.c.l.b16 %v1973
        %v2030 = vunpack.c.l.b16 %v1974
        %v2031 = vunpack.c.l.b16 %v1975
        %v2032 = vunpack.c.l.b16 %v1976
        %v2033 = vunpack.c.l.b16 %v1977
        %v2034 = vunpack.c.l.b16 %v1978
        %v2035 = vunpack.c.l.b16 %v1979
        %v2036 = vunpack.c.l.b16 %v1980
        %v2037 = vunpack.c.l.b16 %v1981
        %v2038 = vunpack.c.l.b16 %v1982
        %v2039 = vunpack.c.l.b16 %v1983
        %v2040 = vunpack.c.l.b16 %v1984
        %v2041 = vunpack.c.l.b16 %v1985
        %v2042 = vunpack.c.l.b16 %v1986
        %v2043 = vpack.c.b16 %v2028, %v2027
        %v2044 = vpack.c.b16 %v2030, %v2029
        %v2045 = vpack.c.b16 %v2032, %v2031
        %v2046 = vpack.c.b16 %v2034, %v2033
        %v2047 = vpack.c.b16 %v2036, %v2035
        %v2048 = vpack.c.b16 %v2038, %v2037
        %v2049 = vpack.c.b16 %v2040, %v2039
        %v2050 = vpack.c.b16 %v2042, %v2041
        %2059 = vmatpush.bf16.msra.mxu0 %v2050
        %2060 = vmatpush.bf16.msra.mxu0 %v2049
        %2061 = vmatpush.bf16.msra.mxu0 %v2048
        %2062 = vmatpush.bf16.msra.mxu0 %v2047
        %2063 = vmatpush.bf16.msra.mxu0 %v2046
        %2064 = vmatpush.bf16.msra.mxu0 %v2045
        %2065 = vmatpush.bf16.msra.mxu0 %v2044
        %2066 = vmatpush.bf16.msra.mxu0 %v2043
        %2067 = vmatmul.bf16.gmra.mxu0 %v1646
        %v2068 = vpop.f32.mrf.mxu0
        %v2069 = vadd.f32 %v2007, %v2068
        %v2070 = vpop.f32.mrf.mxu0
        %2071 = vdwg.mxu0
        %v2088 = vunpack.c.l.b16 %v1987
        %v2089 = vunpack.c.l.b16 %v1988
        %v2090 = vunpack.c.l.b16 %v1989
        %v2091 = vunpack.c.l.b16 %v1990
        %v2092 = vunpack.c.l.b16 %v1991
        %v2093 = vunpack.c.l.b16 %v1992
        %v2094 = vunpack.c.l.b16 %v1993
        %v2095 = vunpack.c.l.b16 %v1994
        %v2096 = vunpack.c.l.b16 %v1995
        %v2097 = vunpack.c.l.b16 %v1996
        %v2098 = vunpack.c.l.b16 %v1997
        %v2099 = vunpack.c.l.b16 %v1998
        %v2100 = vunpack.c.l.b16 %v1999
        %v2101 = vunpack.c.l.b16 %v2000
        %v2102 = vunpack.c.l.b16 %v2001
        %v2103 = vunpack.c.l.b16 %v2002
        %v2104 = vpack.c.b16 %v2089, %v2088
        %v2105 = vpack.c.b16 %v2091, %v2090
        %v2106 = vpack.c.b16 %v2093, %v2092
        %v2107 = vpack.c.b16 %v2095, %v2094
        %v2108 = vpack.c.b16 %v2097, %v2096
        %v2109 = vpack.c.b16 %v2099, %v2098
        %v2110 = vpack.c.b16 %v2101, %v2100
        %v2111 = vpack.c.b16 %v2103, %v2102
        %2120 = vmatpush.bf16.msra.mxu0 %v2111
        %2121 = vmatpush.bf16.msra.mxu0 %v2110
        %2122 = vmatpush.bf16.msra.mxu0 %v2109
        %2123 = vmatpush.bf16.msra.mxu0 %v2108
        %2124 = vmatpush.bf16.msra.mxu0 %v2107
        %2125 = vmatpush.bf16.msra.mxu0 %v2106
        %2126 = vmatpush.bf16.msra.mxu0 %v2105
        %2127 = vmatpush.bf16.msra.mxu0 %v2104
        %2128 = vmatmul.bf16.gmra.mxu0 %v1646
        %v2129 = vpop.f32.mrf.mxu0
        %v2130 = vadd.f32 %v2008, %v2129
        %v2131 = vpop.f32.mrf.mxu0
        %2132 = vdwg.mxu0
        %v2133 = vpack.c.bf16 %v1745, %v1745
        %v2134 = vpack.c.bf16 %v1806, %v1806
        %v2135 = vpack.c.bf16 %v1907, %v1907
        %v2136 = vpack.c.bf16 %v1968, %v1968
        %2137 = vmatpush.bf16.xpose.msra.mxu0 0
        %2138 = vmatpush.bf16.xpose.msra.mxu0 0
        %2139 = vmatpush.bf16.xpose.msra.mxu0 0
        %2140 = vmatpush.bf16.xpose.msra.mxu0 0
        %2141 = vmatpush.bf16.xpose.msra.mxu0 0
        %2142 = vmatpush.bf16.xpose.msra.mxu0 0
        %2143 = vmatpush.bf16.xpose.msra.mxu0 0
        %2144 = vmatpush.bf16.xpose.msra.mxu0 %v2135
        %2145 = vmatmul.bf16.gmra.mxu0 %v2133
        %v2146 = vpop.f32.mrf.mxu0
        %v2147 = vadd.f32 0.0, %v2146
        %v2148 = vpop.f32.mrf.mxu0
        %2149 = vdwg.mxu0
        %2150 = vmatpush.bf16.xpose.msra.mxu0 0
        %2151 = vmatpush.bf16.xpose.msra.mxu0 0
        %2152 = vmatpush.bf16.xpose.msra.mxu0 0
        %2153 = vmatpush.bf16.xpose.msra.mxu0 0
        %2154 = vmatpush.bf16.xpose.msra.mxu0 0
        %2155 = vmatpush.bf16.xpose.msra.mxu0 0
        %2156 = vmatpush.bf16.xpose.msra.mxu0 0
        %2157 = vmatpush.bf16.xpose.msra.mxu0 %v2136
        %2158 = vmatmul.bf16.gmra.mxu0 %v2134
        %v2159 = vpop.f32.mrf.mxu0
        %v2160 = vadd.f32 0.0, %v2159
        %v2161 = vpop.f32.mrf.mxu0
        %2162 = vdwg.mxu0
        %v2163 = vmul.f32 %v2147, 0.25
        %v2164 = vmul.f32 %v2160, 0.25
        %v2165 = vsel %vm1644, 1, 0
        %vm2166 = vcmp.eq.s32.totalorder %v2165, 1
        %v2167 = vsel %vm2166, -1e+30, %v2163
        %v2168 = vsel %vm2166, -1e+30, %v2164
        %vm2169 = vcmask 64512
        %v2170 = vsel %vm2169, %v2167, -inf
        %2171 = vmax.xlane.f32.xlu0 %v2170
        %v2172 = vpop.xlane.xlu0 %2171
        %v2173 = vsel %vm2169, %v2168, -inf
        %2174 = vmax.xlane.f32.xlu0 %v2173
        %v2175 = vpop.xlane.xlu0 %2174
        %v2176 = vsub.f32 %v2167, %v2172
        %v2177 = vsub.f32 %v2168, %v2175
        %v2178 = vmul.f32 %v2176, 1.442695
        %v2179 = vpow.pop %v2178
        %v2180 = vmul.f32 %v2177, 1.442695
        %v2181 = vpow.pop %v2180
        %v2182 = vsel %vm2169, %v2179, 0.0
        %2183 = vadd.xlane.f32.xlu0 %v2182
        %v2184 = vpop.xlane.xlu0 %2183
        %v2185 = vsel %vm2169, %v2181, 0.0
        %2186 = vadd.xlane.f32.xlu0 %v2185
        %v2187 = vpop.xlane.xlu0 %2186
        %v2188 = vrcp.pop %v2184
        %v2189 = vrcp.pop %v2187
        %v2190 = vmul.f32 %v2179, %v2188
        %v2191 = vmul.f32 %v2181, %v2189
        %v2192 = vpack.c.bf16 %v2190, %v2190
        %v2193 = vpack.c.bf16 %v2191, %v2191
        %v2194 = vpack.c.bf16 %v2069, %v2069
        %v2195 = vpack.c.bf16 %v2130, %v2130
        %v2197 = vsel %vm2169, %v2192, 0
        %vm2199 = vcmask 1043456
        %v2201 = vsel %vm2199, %v2194, 0
        %2203 = vmatpush.bf16.msra.mxu0 0
        %2204 = vmatpush.bf16.msra.mxu0 0
        %2205 = vmatpush.bf16.msra.mxu0 0
        %2206 = vmatpush.bf16.msra.mxu0 0
        %2207 = vmatpush.bf16.msra.mxu0 0
        %2208 = vmatpush.bf16.msra.mxu0 0
        %2209 = vmatpush.bf16.msra.mxu0 0
        %2210 = vmatpush.bf16.msra.mxu0 %v2201
        %2211 = vmatmul.bf16.gmra.mxu0 %v2197
        %v2212 = vpop.f32.mrf.mxu0
        %v2213 = vadd.f32 0.0, %v2212
        %v2214 = vpop.f32.mrf.mxu0
        %2215 = vdwg.mxu0
        %v2217 = vsel %vm2169, %v2193, 0
        %v2220 = vsel %vm2199, %v2195, 0
        %2222 = vmatpush.bf16.msra.mxu0 0
        %2223 = vmatpush.bf16.msra.mxu0 0
        %2224 = vmatpush.bf16.msra.mxu0 0
        %2225 = vmatpush.bf16.msra.mxu0 0
        %2226 = vmatpush.bf16.msra.mxu0 0
        %2227 = vmatpush.bf16.msra.mxu0 0
        %2228 = vmatpush.bf16.msra.mxu0 0
        %2229 = vmatpush.bf16.msra.mxu0 %v2220
        %2230 = vmatmul.bf16.gmra.mxu0 %v2217
        %v2231 = vpop.f32.mrf.mxu0
        %v2232 = vadd.f32 0.0, %v2231
        %v2233 = vpop.f32.mrf.mxu0
        %2234 = vdwg.mxu0
        %v2235 = vpack.c.bf16 %v2213, %v2213
        %v2236 = vpack.c.bf16 %v2232, %v2232
        %v2237 = vld [vmem:[%s1038] sm:$0xf]
        %v2238 = vld [vmem:[%s1038 + $0x4] sm:$0xf]
        %v2239 = vld [vmem:[%s1038 + $0x8] sm:$0xf]
        %v2240 = vld [vmem:[%s1038 + $0xc] sm:$0xf]
        %v2241 = vld [vmem:[%s1038 + $0x10] sm:$0xf]
        %v2242 = vld [vmem:[%s1038 + $0x14] sm:$0xf]
        %v2243 = vld [vmem:[%s1038 + $0x18] sm:$0xf]
        %v2244 = vld [vmem:[%s1038 + $0x1c] sm:$0xf]
        %v2245 = vld [vmem:[%s1038 + $0x20] sm:$0xf]
        %v2246 = vld [vmem:[%s1038 + $0x24] sm:$0xf]
        %v2247 = vld [vmem:[%s1038 + $0x28] sm:$0xf]
        %v2248 = vld [vmem:[%s1038 + $0x2c] sm:$0xf]
        %v2249 = vld [vmem:[%s1038 + $0x30] sm:$0xf]
        %v2250 = vld [vmem:[%s1038 + $0x34] sm:$0xf]
        %v2251 = vld [vmem:[%s1038 + $0x38] sm:$0xf]
        %v2252 = vld [vmem:[%s1038 + $0x3c] sm:$0xf]
        %v2253 = vld [vmem:[%s1038 + $0x40] sm:$0xf]
        %v2254 = vld [vmem:[%s1038 + $0x44] sm:$0xf]
        %v2255 = vld [vmem:[%s1038 + $0x48] sm:$0xf]
        %v2256 = vld [vmem:[%s1038 + $0x4c] sm:$0xf]
        %v2257 = vld [vmem:[%s1038 + $0x50] sm:$0xf]
        %v2258 = vld [vmem:[%s1038 + $0x54] sm:$0xf]
        %v2259 = vld [vmem:[%s1038 + $0x58] sm:$0xf]
        %v2260 = vld [vmem:[%s1038 + $0x5c] sm:$0xf]
        %v2261 = vld [vmem:[%s1038 + $0x60] sm:$0xf]
        %v2262 = vld [vmem:[%s1038 + $0x64] sm:$0xf]
        %v2263 = vld [vmem:[%s1038 + $0x68] sm:$0xf]
        %v2264 = vld [vmem:[%s1038 + $0x6c] sm:$0xf]
        %v2265 = vld [vmem:[%s1038 + $0x70] sm:$0xf]
        %v2266 = vld [vmem:[%s1038 + $0x74] sm:$0xf]
        %v2267 = vld [vmem:[%s1038 + $0x78] sm:$0xf]
        %v2268 = vld [vmem:[%s1038 + $0x7c] sm:$0xf]
        %v2285 = vunpack.c.l.b16 %v2237
        %v2286 = vunpack.c.l.b16 %v2238
        %v2287 = vunpack.c.l.b16 %v2239
        %v2288 = vunpack.c.l.b16 %v2240
        %v2289 = vunpack.c.l.b16 %v2241
        %v2290 = vunpack.c.l.b16 %v2242
        %v2291 = vunpack.c.l.b16 %v2243
        %v2292 = vunpack.c.l.b16 %v2244
        %v2293 = vunpack.c.l.b16 %v2245
        %v2294 = vunpack.c.l.b16 %v2246
        %v2295 = vunpack.c.l.b16 %v2247
        %v2296 = vunpack.c.l.b16 %v2248
        %v2297 = vunpack.c.l.b16 %v2249
        %v2298 = vunpack.c.l.b16 %v2250
        %v2299 = vunpack.c.l.b16 %v2251
        %v2300 = vunpack.c.l.b16 %v2252
        %v2301 = vpack.c.b16 %v2286, %v2285
        %v2302 = vpack.c.b16 %v2288, %v2287
        %v2303 = vpack.c.b16 %v2290, %v2289
        %v2304 = vpack.c.b16 %v2292, %v2291
        %v2305 = vpack.c.b16 %v2294, %v2293
        %v2306 = vpack.c.b16 %v2296, %v2295
        %v2307 = vpack.c.b16 %v2298, %v2297
        %v2308 = vpack.c.b16 %v2300, %v2299
        %2317 = vmatpush.bf16.msra.mxu0 %v2308
        %2318 = vmatpush.bf16.msra.mxu0 %v2307
        %2319 = vmatpush.bf16.msra.mxu0 %v2306
        %2320 = vmatpush.bf16.msra.mxu0 %v2305
        %2321 = vmatpush.bf16.msra.mxu0 %v2304
        %2322 = vmatpush.bf16.msra.mxu0 %v2303
        %2323 = vmatpush.bf16.msra.mxu0 %v2302
        %2324 = vmatpush.bf16.msra.mxu0 %v2301
        %2325 = vmatmul.bf16.gmra.mxu0 %v2235
        %v2326 = vpop.f32.mrf.mxu0
        %v2327 = vadd.f32 0.0, %v2326
        %v2328 = vpop.f32.mrf.mxu0
        %2329 = vdwg.mxu0
        %v2346 = vunpack.c.l.b16 %v2253
        %v2347 = vunpack.c.l.b16 %v2254
        %v2348 = vunpack.c.l.b16 %v2255
        %v2349 = vunpack.c.l.b16 %v2256
        %v2350 = vunpack.c.l.b16 %v2257
        %v2351 = vunpack.c.l.b16 %v2258
        %v2352 = vunpack.c.l.b16 %v2259
        %v2353 = vunpack.c.l.b16 %v2260
        %v2354 = vunpack.c.l.b16 %v2261
        %v2355 = vunpack.c.l.b16 %v2262
        %v2356 = vunpack.c.l.b16 %v2263
        %v2357 = vunpack.c.l.b16 %v2264
        %v2358 = vunpack.c.l.b16 %v2265
        %v2359 = vunpack.c.l.b16 %v2266
        %v2360 = vunpack.c.l.b16 %v2267
        %v2361 = vunpack.c.l.b16 %v2268
        %v2362 = vpack.c.b16 %v2347, %v2346
        %v2363 = vpack.c.b16 %v2349, %v2348
        %v2364 = vpack.c.b16 %v2351, %v2350
        %v2365 = vpack.c.b16 %v2353, %v2352
        %v2366 = vpack.c.b16 %v2355, %v2354
        %v2367 = vpack.c.b16 %v2357, %v2356
        %v2368 = vpack.c.b16 %v2359, %v2358
        %v2369 = vpack.c.b16 %v2361, %v2360
        %2378 = vmatpush.bf16.msra.mxu0 %v2369
        %2379 = vmatpush.bf16.msra.mxu0 %v2368
        %2380 = vmatpush.bf16.msra.mxu0 %v2367
        %2381 = vmatpush.bf16.msra.mxu0 %v2366
        %2382 = vmatpush.bf16.msra.mxu0 %v2365
        %2383 = vmatpush.bf16.msra.mxu0 %v2364
        %2384 = vmatpush.bf16.msra.mxu0 %v2363
        %2385 = vmatpush.bf16.msra.mxu0 %v2362
        %2386 = vmatmul.bf16.gmra.mxu0 %v2236
        %v2387 = vpop.f32.mrf.mxu0
        %v2388 = vadd.f32 0.0, %v2387
        %v2389 = vpop.f32.mrf.mxu0
        %2390 = vdwg.mxu0
        %v2391 = vadd.f32 %v2327, %v2388
        %v2392 = vld [vmem:[%s1041] sm:$0x1]
        %v2394 = vperm.slane %v2392, 0
        %v2396 = vadd.f32 %v2391, %v2394
        %v2397 = vadd.f32 %v1645, %v2396
        %v2398 = vld [vmem:[%s1044] sm:$0x1]
        %v2399 = vld [vmem:[%s1047] sm:$0x1]
        %2400 = vadd.xlane.f32.xlu0 %v2397
        %v2401 = vpop.xlane.xlu0 %2400
        %v2402 = vmul.f32 %v2401, 0.03125
        %v2403 = vmul.f32 %v2397, %v2397
        %2404 = vadd.xlane.f32.xlu0 %v2403
        %v2405 = vpop.xlane.xlu0 %2404
        %v2406 = vmul.f32 %v2405, 0.03125
        %v2407 = vmul.f32 %v2402, %v2402
        %v2408 = vsub.f32 %v2406, %v2407
        %v2409 = vsub.f32 %v2397, %v2402
        %v2410 = vadd.f32 %v2408, 1e-05
        %v2411 = vrsqrt.pop %v2410
        %v2412 = vmul.f32 %v2411, %v2410
        %v2413 = vmul.f32 %v2412, %v2411
        %v2414 = vmul.f32 0.5, %v2413
        %v2415 = vsub.f32 1.5, %v2414
        %v2416 = vmul.f32 %v2411, %v2415
        %vm2417 = vweird.f32 %v2410
        %vm2418 = vweird.f32 %v2411
        %vm2419 = vmor %vm2417, %vm2418
        %v2420 = vsel %vm2419, %v2411, %v2416
        %v2421 = vmul.f32 %v2409, %v2420
        %v2423 = vperm.slane %v2398, 0
        %v2425 = vmul.f32 %v2421, %v2423
        %v2427 = vperm.slane %v2399, 0
        %v2429 = vadd.f32 %v2425, %v2427
        %v2430 = vpack.c.bf16 %v2429, %v2429
        %v2431 = vld [vmem:[%s1052] sm:$0xf]
        %v2432 = vld [vmem:[%s1052 + $0x4] sm:$0xf]
        %v2433 = vld [vmem:[%s1052 + $0x8] sm:$0xf]
        %v2434 = vld [vmem:[%s1052 + $0xc] sm:$0xf]
        %v2435 = vld [vmem:[%s1052 + $0x10] sm:$0xf]
        %v2436 = vld [vmem:[%s1052 + $0x14] sm:$0xf]
        %v2437 = vld [vmem:[%s1052 + $0x18] sm:$0xf]
        %v2438 = vld [vmem:[%s1052 + $0x1c] sm:$0xf]
        %v2439 = vld [vmem:[%s1052 + $0x20] sm:$0xf]
        %v2440 = vld [vmem:[%s1052 + $0x24] sm:$0xf]
        %v2441 = vld [vmem:[%s1052 + $0x28] sm:$0xf]
        %v2442 = vld [vmem:[%s1052 + $0x2c] sm:$0xf]
        %v2443 = vld [vmem:[%s1052 + $0x30] sm:$0xf]
        %v2444 = vld [vmem:[%s1052 + $0x34] sm:$0xf]
        %v2445 = vld [vmem:[%s1052 + $0x38] sm:$0xf]
        %v2446 = vld [vmem:[%s1052 + $0x3c] sm:$0xf]
        %v2447 = vld [vmem:[%s1055] sm:$0x1]
        %v2449 = vperm.slane %v2447, 0
        %v2467 = vunpack.c.l.b16 %v2431
        %v2468 = vunpack.c.l.b16 %v2432
        %v2469 = vunpack.c.l.b16 %v2433
        %v2470 = vunpack.c.l.b16 %v2434
        %v2471 = vunpack.c.l.b16 %v2435
        %v2472 = vunpack.c.l.b16 %v2436
        %v2473 = vunpack.c.l.b16 %v2437
        %v2474 = vunpack.c.l.b16 %v2438
        %v2475 = vunpack.c.l.b16 %v2439
        %v2476 = vunpack.c.l.b16 %v2440
        %v2477 = vunpack.c.l.b16 %v2441
        %v2478 = vunpack.c.l.b16 %v2442
        %v2479 = vunpack.c.l.b16 %v2443
        %v2480 = vunpack.c.l.b16 %v2444
        %v2481 = vunpack.c.l.b16 %v2445
        %v2482 = vunpack.c.l.b16 %v2446
        %v2483 = vpack.c.b16 %v2468, %v2467
        %v2484 = vpack.c.b16 %v2470, %v2469
        %v2485 = vpack.c.b16 %v2472, %v2471
        %v2486 = vpack.c.b16 %v2474, %v2473
        %v2487 = vpack.c.b16 %v2476, %v2475
        %v2488 = vpack.c.b16 %v2478, %v2477
        %v2489 = vpack.c.b16 %v2480, %v2479
        %v2490 = vpack.c.b16 %v2482, %v2481
        %2499 = vmatpush.bf16.msra.mxu0 %v2490
        %2500 = vmatpush.bf16.msra.mxu0 %v2489
        %2501 = vmatpush.bf16.msra.mxu0 %v2488
        %2502 = vmatpush.bf16.msra.mxu0 %v2487
        %2503 = vmatpush.bf16.msra.mxu0 %v2486
        %2504 = vmatpush.bf16.msra.mxu0 %v2485
        %2505 = vmatpush.bf16.msra.mxu0 %v2484
        %2506 = vmatpush.bf16.msra.mxu0 %v2483
        %2507 = vmatmul.bf16.gmra.mxu0 %v2430
        %v2508 = vpop.f32.mrf.mxu0
        %v2509 = vadd.f32 %v2449, %v2508
        %v2510 = vpop.f32.mrf.mxu0
        %2511 = vdwg.mxu0
        %v2512 = vmax.f32 %v2509, 0.0
        %v2513 = vpack.c.bf16 %v2512, %v2512
        %v2514 = vld [vmem:[%s1060] sm:$0xf]
        %v2515 = vld [vmem:[%s1060 + $0x4] sm:$0xf]
        %v2516 = vld [vmem:[%s1060 + $0x8] sm:$0xf]
        %v2517 = vld [vmem:[%s1060 + $0xc] sm:$0xf]
        %v2518 = vld [vmem:[%s1060 + $0x10] sm:$0xf]
        %v2519 = vld [vmem:[%s1060 + $0x14] sm:$0xf]
        %v2520 = vld [vmem:[%s1060 + $0x18] sm:$0xf]
        %v2521 = vld [vmem:[%s1060 + $0x1c] sm:$0xf]
        %v2522 = vld [vmem:[%s1060 + $0x20] sm:$0xf]
        %v2523 = vld [vmem:[%s1060 + $0x24] sm:$0xf]
        %v2524 = vld [vmem:[%s1060 + $0x28] sm:$0xf]
        %v2525 = vld [vmem:[%s1060 + $0x2c] sm:$0xf]
        %v2526 = vld [vmem:[%s1060 + $0x30] sm:$0xf]
        %v2527 = vld [vmem:[%s1060 + $0x34] sm:$0xf]
        %v2528 = vld [vmem:[%s1060 + $0x38] sm:$0xf]
        %v2529 = vld [vmem:[%s1060 + $0x3c] sm:$0xf]
        %v2530 = vld [vmem:[%s1063] sm:$0x1]
        %v2532 = vperm.slane %v2530, 0
        %v2550 = vunpack.c.l.b16 %v2514
        %v2551 = vunpack.c.l.b16 %v2515
        %v2552 = vunpack.c.l.b16 %v2516
        %v2553 = vunpack.c.l.b16 %v2517
        %v2554 = vunpack.c.l.b16 %v2518
        %v2555 = vunpack.c.l.b16 %v2519
        %v2556 = vunpack.c.l.b16 %v2520
        %v2557 = vunpack.c.l.b16 %v2521
        %v2558 = vunpack.c.l.b16 %v2522
        %v2559 = vunpack.c.l.b16 %v2523
        %v2560 = vunpack.c.l.b16 %v2524
        %v2561 = vunpack.c.l.b16 %v2525
        %v2562 = vunpack.c.l.b16 %v2526
        %v2563 = vunpack.c.l.b16 %v2527
        %v2564 = vunpack.c.l.b16 %v2528
        %v2565 = vunpack.c.l.b16 %v2529
        %v2566 = vpack.c.b16 %v2551, %v2550
        %v2567 = vpack.c.b16 %v2553, %v2552
        %v2568 = vpack.c.b16 %v2555, %v2554
        %v2569 = vpack.c.b16 %v2557, %v2556
        %v2570 = vpack.c.b16 %v2559, %v2558
        %v2571 = vpack.c.b16 %v2561, %v2560
        %v2572 = vpack.c.b16 %v2563, %v2562
        %v2573 = vpack.c.b16 %v2565, %v2564
        %2582 = vmatpush.bf16.msra.mxu0 %v2573
        %2583 = vmatpush.bf16.msra.mxu0 %v2572
        %2584 = vmatpush.bf16.msra.mxu0 %v2571
        %2585 = vmatpush.bf16.msra.mxu0 %v2570
        %2586 = vmatpush.bf16.msra.mxu0 %v2569
        %2587 = vmatpush.bf16.msra.mxu0 %v2568
        %2588 = vmatpush.bf16.msra.mxu0 %v2567
        %2589 = vmatpush.bf16.msra.mxu0 %v2566
        %2590 = vmatmul.bf16.gmra.mxu0 %v2513
        %v2591 = vpop.f32.mrf.mxu0
        %v2592 = vadd.f32 %v2532, %v2591
        %v2593 = vpop.f32.mrf.mxu0
        %2594 = vdwg.mxu0
        %v2595 = vadd.f32 %v2429, %v2592
        %v2596 = vld [vmem:[%s1066] sm:$0x1]
        %v2597 = vld [vmem:[%s1069] sm:$0x1]
        %2598 = vadd.xlane.f32.xlu0 %v2595
        %v2599 = vpop.xlane.xlu0 %2598
        %v2600 = vmul.f32 %v2599, 0.03125
        %v2601 = vmul.f32 %v2595, %v2595
        %2602 = vadd.xlane.f32.xlu0 %v2601
        %v2603 = vpop.xlane.xlu0 %2602
        %v2604 = vmul.f32 %v2603, 0.03125
        %v2605 = vmul.f32 %v2600, %v2600
        %v2606 = vsub.f32 %v2604, %v2605
        %v2607 = vsub.f32 %v2595, %v2600
        %v2608 = vadd.f32 %v2606, 1e-05
        %v2609 = vrsqrt.pop %v2608
        %v2610 = vmul.f32 %v2609, %v2608
        %v2611 = vmul.f32 %v2610, %v2609
        %v2612 = vmul.f32 0.5, %v2611
        %v2613 = vsub.f32 1.5, %v2612
        %v2614 = vmul.f32 %v2609, %v2613
        %vm2615 = vweird.f32 %v2608
        %vm2616 = vweird.f32 %v2609
        %vm2617 = vmor %vm2615, %vm2616
        %v2618 = vsel %vm2617, %v2609, %v2614
        %v2619 = vmul.f32 %v2607, %v2618
        %v2621 = vperm.slane %v2596, 0
        %v2623 = vmul.f32 %v2619, %v2621
        %v2625 = vperm.slane %v2597, 0
        %v2627 = vadd.f32 %v2623, %v2625
        %2628 = vst [vmem:[#allocation2] sm:$0xff] %v2627
        %p2629 = scmp.eq.s32.totalorder %s41, 1
        // Predicated region
        $region148: #{cnn_transformer_net.1} parent=130 // pred_check
          %p2630 = pneg %p2629
        $region149: #{cnn_transformer_net.1} parent=130 // pred_check_branch
          %2632 = sbr.rel (%p2630) target = $region151
        $region150: #{cnn_transformer_net.1} parent=130 // pred_region
          %v2633 = vpack.c.bf16 %v2627, %v2627
          %v2634 = vld [vmem:[%s21] sm:$0xff]
          %v2635 = vld [vmem:[%s21 + $0x8] sm:$0xff]
          %v2636 = vld [vmem:[%s21 + $0x10] sm:$0xff]
          %v2637 = vld [vmem:[%s21 + $0x18] sm:$0xff]
          %v2638 = vld [vmem:[%s21 + $0x20] sm:$0xff]
          %v2639 = vld [vmem:[%s21 + $0x28] sm:$0xff]
          %v2640 = vld [vmem:[%s21 + $0x30] sm:$0xff]
          %v2641 = vld [vmem:[%s21 + $0x38] sm:$0xff]
          %v2642 = vld [vmem:[%s21 + $0x40] sm:$0xff]
          %v2643 = vld [vmem:[%s21 + $0x48] sm:$0xff]
          %v2644 = vld [vmem:[%s21 + $0x50] sm:$0xff]
          %v2645 = vld [vmem:[%s21 + $0x58] sm:$0xff]
          %v2646 = vld [vmem:[%s21 + $0x60] sm:$0xff]
          %v2647 = vld [vmem:[%s21 + $0x68] sm:$0xff]
          %v2648 = vld [vmem:[%s21 + $0x70] sm:$0xff]
          %v2649 = vld [vmem:[%s21 + $0x78] sm:$0xff]
          %v2650 = vld [vmem:[%s22] sm:$0x3]
          %v2652 = vperm.slane %v2650, 0
          %v2653 = vperm.slane %v2650, 1
          %v2672 = vunpack.c.l.b16 %v2634
          %v2673 = vunpack.c.h.b16 %v2634
          %v2674 = vunpack.c.l.b16 %v2635
          %v2675 = vunpack.c.h.b16 %v2635
          %v2676 = vunpack.c.l.b16 %v2636
          %v2677 = vunpack.c.h.b16 %v2636
          %v2678 = vunpack.c.l.b16 %v2637
          %v2679 = vunpack.c.h.b16 %v2637
          %v2680 = vunpack.c.l.b16 %v2638
          %v2681 = vunpack.c.h.b16 %v2638
          %v2682 = vunpack.c.l.b16 %v2639
          %v2683 = vunpack.c.h.b16 %v2639
          %v2684 = vunpack.c.l.b16 %v2640
          %v2685 = vunpack.c.h.b16 %v2640
          %v2686 = vunpack.c.l.b16 %v2641
          %v2687 = vunpack.c.h.b16 %v2641
          %v2688 = vunpack.c.l.b16 %v2642
          %v2689 = vunpack.c.h.b16 %v2642
          %v2690 = vunpack.c.l.b16 %v2643
          %v2691 = vunpack.c.h.b16 %v2643
          %v2692 = vunpack.c.l.b16 %v2644
          %v2693 = vunpack.c.h.b16 %v2644
          %v2694 = vunpack.c.l.b16 %v2645
          %v2695 = vunpack.c.h.b16 %v2645
          %v2696 = vunpack.c.l.b16 %v2646
          %v2697 = vunpack.c.h.b16 %v2646
          %v2698 = vunpack.c.l.b16 %v2647
          %v2699 = vunpack.c.h.b16 %v2647
          %v2700 = vunpack.c.l.b16 %v2648
          %v2701 = vunpack.c.h.b16 %v2648
          %v2702 = vunpack.c.l.b16 %v2649
          %v2703 = vunpack.c.h.b16 %v2649
          %v2704 = vpack.c.b16 %v2674, %v2672
          %v2705 = vpack.c.b16 %v2675, %v2673
          %v2706 = vpack.c.b16 %v2678, %v2676
          %v2707 = vpack.c.b16 %v2679, %v2677
          %v2708 = vpack.c.b16 %v2682, %v2680
          %v2709 = vpack.c.b16 %v2683, %v2681
          %v2710 = vpack.c.b16 %v2686, %v2684
          %v2711 = vpack.c.b16 %v2687, %v2685
          %v2712 = vpack.c.b16 %v2690, %v2688
          %v2713 = vpack.c.b16 %v2691, %v2689
          %v2714 = vpack.c.b16 %v2694, %v2692
          %v2715 = vpack.c.b16 %v2695, %v2693
          %v2716 = vpack.c.b16 %v2698, %v2696
          %v2717 = vpack.c.b16 %v2699, %v2697
          %v2718 = vpack.c.b16 %v2702, %v2700
          %v2719 = vpack.c.b16 %v2703, %v2701
          %2736 = vmatpush.bf16.msra.mxu0 %v2718
          %2737 = vmatpush.bf16.msra.mxu0 %v2716
          %2738 = vmatpush.bf16.msra.mxu0 %v2714
          %2739 = vmatpush.bf16.msra.mxu0 %v2712
          %2740 = vmatpush.bf16.msra.mxu0 %v2710
          %2741 = vmatpush.bf16.msra.mxu0 %v2708
          %2742 = vmatpush.bf16.msra.mxu0 %v2706
          %2743 = vmatpush.bf16.msra.mxu0 %v2704
          %2744 = vmatmul.bf16.gmra.mxu0 %v2633
          %v2745 = vpop.f32.mrf.mxu0
          %v2746 = vadd.f32 %v2652, %v2745
          %v2747 = vpop.f32.mrf.mxu0
          %2748 = vdwg.mxu0
          %2749 = vmatpush.bf16.msra.mxu0 %v2719
          %2750 = vmatpush.bf16.msra.mxu0 %v2717
          %2751 = vmatpush.bf16.msra.mxu0 %v2715
          %2752 = vmatpush.bf16.msra.mxu0 %v2713
          %2753 = vmatpush.bf16.msra.mxu0 %v2711
          %2754 = vmatpush.bf16.msra.mxu0 %v2709
          %2755 = vmatpush.bf16.msra.mxu0 %v2707
          %2756 = vmatpush.bf16.msra.mxu0 %v2705
          %2757 = vmatmul.bf16.gmra.mxu0 %v2633
          %v2758 = vpop.f32.mrf.mxu0
          %v2759 = vadd.f32 %v2653, %v2758
          %v2760 = vpop.f32.mrf.mxu0
          %2761 = vdwg.mxu0
          %2762 = vst [vmem:[%s1074] sm:$0xff] %v2746
          %2763 = vst [vmem:[%s1074 + $0x8] sm:$0xff] %v2759
        $region151: #{cnn_transformer_net.1} parent=130 // pred_fallthru
          _
        %p2764 = scmp.lt.s32.totalorder %s40, 1
        %s2765 = scalar_select %p2764, %s40, 1
        %s2766 = smul.addr %s2765, 2
        %s2767 = smul.addr %s2766, 8
        %s2768 = scalar_lea.vmem %s23, %s2767
        // Predicated region
        $region152: #{cnn_transformer_net.1} parent=130 // pred_check
          %p2769 = pneg %p634
        $region153: #{cnn_transformer_net.1} parent=130 // pred_check_branch
          %2771 = sbr.rel (%p2769) target = $region155
        $region154: #{cnn_transformer_net.1} parent=130 // pred_region
          _
        $region155: #{cnn_transformer_net.1} parent=130 // pred_fallthru
          _
      $region131: #{cnn_transformer_net.1} parent=5 // pred_fallthru
        _
      %p2772 = scmp.le.s32.totalorder 2, %s31
      // Predicated region
      $region156: #{cnn_transformer_net.1} parent=5 // pred_check
        %p2773 = pneg %p2772
      $region157: #{cnn_transformer_net.1} parent=5 // pred_check_branch
        %2775 = sbr.rel (%p2773) target = $region159
      $region158: #{cnn_transformer_net.1} parent=5 // pred_region
        %s2776 = ssub.s32 %s31, 2
        // Predicated region
        $region160: #{cnn_transformer_net.1} parent=158 // pred_check
          %p2777 = pneg %p640
        $region161: #{cnn_transformer_net.1} parent=158 // pred_check_branch
          %2779 = sbr.rel (%p2777) target = $region163
        $region162: #{cnn_transformer_net.1} parent=158 // pred_region
          %p2780 = scmp.lt.s32.totalorder %s42, 1
          %s2781 = scalar_select %p2780, %s42, 1
          %s2782 = smul.addr %s2781, 2
          %s2783 = smul.addr %s2782, 8
          %s2784 = scalar_lea.vmem %s23, %s2783
        $region163: #{cnn_transformer_net.1} parent=158 // pred_fallthru
          _
      $region159: #{cnn_transformer_net.1} parent=5 // pred_fallthru
        _
    $region6: #{cnn_transformer_net.1} parent=1 // loop_footer
      %s35 = sadd.s32 1, %s31
    $region7: #{cnn_transformer_net.1} parent=1 // loop_footer_branch
      %30 = sbr.rel target = $region3
    $region8: #{cnn_transformer_net.1} parent=1 // loop_exit
      _
    %2785 = vsyncpa [#allocation5], 1
    %s2786 = scalar_lea.sflag [#allocation5], 1
    %2787 = vsyncpa %s2786, 1
    %2788 = vsyncpa [#allocation7], 1

</llo_original>
